<compile_context>
chip_gen: v7x
topology: tpu7x:2x2x1
jax: 0.10.0
libtpu: 0.0.40
codegen_flags: <defaults>
</compile_context>

<pallas_src>
import functools

import jax
import jax.numpy as jnp
from jax import lax
from jax.experimental import pallas as pl
from jax.experimental.pallas import tpu as pltpu


def _round_up(x, m):
    return (x + m - 1) // m * m


def _pick_tile(total, preferred, step, min_good=256):
    """Largest multiple of `step` <= min(preferred, total) that divides `total`."""
    t = min(preferred, total)
    t -= t % step
    t = max(t, step)
    while total % t:
        t -= step
    if t < min_good and total <= 2 * preferred:
        t = total                       # small axis: take it in one lane-dense tile
    return t


def _vmem_limit(est_bytes):
    """Explicit scoped-VMEM request: 2x estimated footprint, 32 MiB..64 MiB."""
    return int(min(max(2 * est_bytes, 32 * 1024 * 1024), 64 * 1024 * 1024))


_SINGLE_BUFFER_OK = None


def _single_buffer_ok():
    """Probe whether pipeline_mode=pl.Buffered(1) is accepted (constant-index blocks)."""
    global _SINGLE_BUFFER_OK
    if _SINGLE_BUFFER_OK is None:
        try:
            def _copy(x_ref, o_ref):
                o_ref[...] = x_ref[...]
            x = jnp.zeros((8, 128), jnp.float32)
            out = pl.pallas_call(
                _copy,
                out_shape=jax.ShapeDtypeStruct((8, 128), jnp.float32),
                grid=(2,),
                in_specs=[pl.BlockSpec((8, 128), lambda i: (0, 0),
                                       pipeline_mode=pl.Buffered(1))],
                out_specs=pl.BlockSpec((8, 128), lambda i: (0, 0)),
            )(x)
            jax.block_until_ready(out)
            _SINGLE_BUFFER_OK = True
        except Exception:
            _SINGLE_BUFFER_OK = False
    return _SINGLE_BUFFER_OK


def _spec(shape, index_map, *, single_buffer=False):
    if single_buffer and _single_buffer_ok():
        return pl.BlockSpec(shape, index_map, pipeline_mode=pl.Buffered(1))
    return pl.BlockSpec(shape, index_map)


# -----------------------------------------------------------------------------
# Kernel 1: GRU recurrence over one time chunk (time loop inside the kernel).
# -----------------------------------------------------------------------------
def gru_chunk_kernel(emb_ref, h0_ref, wih_ref, whh_ref, bih_ref, bhn_ref,
                     hs_ref, h_scr):
    # emb_ref: (T_C, B_pad, E_pad)  compute dtype  time-major embedded chunk
    # h0_ref : (B_pad, H_pad)       f32            initial hidden (concat(zs, cs))
    # wih_ref: (E_pad, 3*H_pad)     compute dtype  packed input->gate weights (r,z,n)
    # whh_ref: (H_pad, 3*H_pad)     compute dtype  packed hidden->gate weights
    # bih_ref: (1, 3*H_pad)         f32            b_ih+b_hh for r,z ; b_in for n
    # bhn_ref: (1, H_pad)           f32            b_hn (inside r*(...))
    # hs_ref : (B_pad, T_C, H_pad)  f32            per-step hidden states, batch-major
    # h_scr  : (B_pad, H_pad)       f32            hidden state carried across chunks
    t_c, b_pad, e_pad = emb_ref.shape
    h_pad = h_scr.shape[1]
    h3 = 3 * h_pad
    mxu_dtype = wih_ref.dtype

    @pl.when(pl.program_id(0) == 0)
    def _init():
        h_scr[...] = h0_ref[...]

    # All input-gate contributions of the chunk in ONE MXU matmul (low-precision
    # operands, f32 accumulation), biases folded in once.
    x_all = emb_ref[...].reshape(t_c * b_pad, e_pad)
    gi_all = (jnp.dot(x_all, wih_ref[...], preferred_element_type=jnp.float32)
              + bih_ref[...])                                    # (T_C*B_pad, 3H) f32

    whh = whh_ref[...]
    bhn = jnp.broadcast_to(bhn_ref[...], (b_pad, h_pad))         # hoisted out of loop

    h = h_scr[...]                                               # f32 carry
    # Static unroll: T_C is capped at 32, so h stays in vregs with no per-step
    # grid overhead.  TODO(synk): switch to lax.fori_loop + pl.ds if T_C grows.
    for t in range(t_c):
        gi = gi_all[t * b_pad:(t + 1) * b_pad, :]                # 8-aligned static slice
        gh = jnp.dot(h.astype(mxu_dtype), whh,
                     preferred_element_type=jnp.float32)         # (B_pad, 3H) f32
        r = jax.nn.sigmoid(gi[:, 0:h_pad] + gh[:, 0:h_pad])
        z = jax.nn.sigmoid(gi[:, h_pad:2 * h_pad] + gh[:, h_pad:2 * h_pad])
        n = jnp.tanh(gi[:, 2 * h_pad:h3] + r * (gh[:, 2 * h_pad:h3] + bhn))
        h = (1.0 - z) * n + z * h                                # f32 elementwise
        hs_ref[:, t, :] = h                                      # batch-major store
    h_scr[...] = h


# -----------------------------------------------------------------------------
# Kernel 2: vocab projection, tiled over M (rows) and V (lane-dense 128-mult).
# -----------------------------------------------------------------------------
def vocab_proj_kernel(hs_ref, wout_ref, bout_ref, out_ref):
    hs = hs_ref[...].astype(wout_ref.dtype)      # bf16 MXU operand, f32 accumulation
    out_ref[...] = (jnp.dot(hs, wout_ref[...], preferred_element_type=jnp.float32)
                    + bout_ref[...]).astype(out_ref.dtype)


# -----------------------------------------------------------------------------
# Wrapper: glue (concat/gather/padding/packing) + the two pallas_calls.
# -----------------------------------------------------------------------------
def training_decoder_forward(zs, cs, resps, params, *,
                             compute_dtype=jnp.bfloat16,
                             target_mxu_rows=256, v_tile=512, m_tile=512):
    """zs: (B, Z), cs: (B, C), resps: (B, T) int32 token ids -> (B, T, V) logits."""
    emb_table = params["emb_table"]                   # (V, E)
    W_ih, W_hh = params["W_ih"], params["W_hh"]       # (3, E, H), (3, H, H)
    b_ih, b_hh = params["b_ih"], params["b_hh"]       # (3, 1, H)
    W_out, b_out = params["W_out"], params["b_out"]   # (H, V), (1, V)

    B, T = resps.shape
    E = emb_table.shape[1]
    H = W_hh.shape[1]
    V = W_out.shape[1]

    f32 = jnp.float32
    cdt = compute_dtype
    it_c = jnp.dtype(cdt).itemsize

    B_pad = _round_up(max(B, 8), 8)                   # sublane alignment
    E_pad = _round_up(E, 128)                         # lane alignment
    H_pad = _round_up(H, 128)
    V_pad = _round_up(V, 128)

    # Time chunk: T_C*B_pad rows feed the bulk input-gate matmul; target >=256
    # rows (v6e/v7x MXU) but cap the static unroll at 32 steps.
    tc_target = max(8, -(-target_mxu_rows // B_pad))
    T_C = min(_round_up(T, 8), _round_up(tc_target, 8), 32)
    T_pad = _round_up(T, T_C)
    n_chunks = T_pad // T_C

    single_buf = _single_buffer_ok()
    wb = 1 if single_buf else 2

    # ---- glue (XLA): h0, embedding gather (time-major), padding, weight packing.
    zcs = jnp.concatenate([zs, cs], axis=1).astype(f32)              # (B, H)
    h0 = jnp.zeros((B_pad, H_pad), f32).at[:B, :H].set(zcs)

    # Gather directly in (T, B, E) order: only the tiny (B, T) index matrix is
    # transposed, never the embedded activations.
    emb_tm = jnp.take(emb_table, resps.T, axis=0).astype(cdt)        # (T, B, E)
    # dropout(p=0.5, training=False) == identity (eval mode).
    # TODO(synk): training-mode dropout via pltpu.prng_seed/prng_random_bits.
    emb_p = jnp.zeros((T_pad, B_pad, E_pad), cdt).at[:T, :B, :E].set(emb_tm)

    # Pack gate weights (r, z, n); each gate gets its own 128-aligned lane segment.
    wih_p = jnp.zeros((E_pad, 3 * H_pad), cdt)
    whh_p = jnp.zeros((H_pad, 3 * H_pad), cdt)
    bih_p = jnp.zeros((1, 3 * H_pad), f32)
    for g in range(3):
        wih_p = wih_p.at[:E, g * H_pad:g * H_pad + H].set(W_ih[g].astype(cdt))
        whh_p = whh_p.at[:H, g * H_pad:g * H_pad + H].set(W_hh[g].astype(cdt))
        bg = b_ih[g] + (b_hh[g] if g < 2 else 0.0)       # pre-sum r/z biases
        bih_p = bih_p.at[:, g * H_pad:g * H_pad + H].set(bg.astype(f32))
    bhn_p = jnp.zeros((1, H_pad), f32).at[:, :H].set(b_hh[2].astype(f32))

    wout_p = jnp.zeros((H_pad, V_pad), cdt).at[:H, :V].set(W_out.astype(cdt))
    bout_p = jnp.zeros((1, V_pad), f32).at[:, :V].set(b_out.astype(f32))

    # ---- kernel 1: GRU recurrence (time inside the kernel, chunked grid) ----
    est1 = (2 * T_C * B_pad * E_pad * it_c                       # emb chunk (2 bufs)
            + wb * (E_pad + H_pad) * 3 * H_pad * it_c            # packed weights
            + wb * (B_pad * H_pad + 4 * H_pad) * 4               # h0 + biases (f32)
            + 2 * B_pad * T_C * H_pad * 4                        # hs out block (f32)
            + B_pad * H_pad * 4                                  # h_scr
            + T_C * B_pad * 3 * H_pad * 4)                       # gi_all temp (f32)
    hs = pl.pallas_call(
        gru_chunk_kernel,
        out_shape=jax.ShapeDtypeStruct((B_pad, T_pad, H_pad), f32),
        grid=(n_chunks,),
        in_specs=[
            pl.BlockSpec((T_C, B_pad, E_pad), lambda c: (c, 0, 0)),            # emb
            _spec((B_pad, H_pad), lambda c: (0, 0), single_buffer=True),       # h0
            _spec((E_pad, 3 * H_pad), lambda c: (0, 0), single_buffer=True),   # W_ih
            _spec((H_pad, 3 * H_pad), lambda c: (0, 0), single_buffer=True),   # W_hh
            _spec((1, 3 * H_pad), lambda c: (0, 0), single_buffer=True),       # b r/z/n
            _spec((1, H_pad), lambda c: (0, 0), single_buffer=True),           # b_hn
        ],
        out_specs=pl.BlockSpec((B_pad, T_C, H_pad), lambda c: (0, c, 0)),
        scratch_shapes=[pltpu.VMEM((B_pad, H_pad), jnp.float32)],
        compiler_params=pltpu.CompilerParams(
            dimension_semantics=("arbitrary",),       # sequential recurrence over time
            vmem_limit_bytes=_vmem_limit(est1)),
    )(emb_p, h0, wih_p, whh_p, bih_p, bhn_p)
    # TODO(synk): v7x — add a leading "parallel" batch-block axis (8-aligned halves
    # of B_pad) so both TensorCores run the recurrence.

    # ---- kernel 2: vocab projection, M x V tiled (both "parallel") ----
    M = B_pad * T_pad
    hs_flat = hs.reshape(M, H_pad)                    # free: merges leading dims only

    V_TILE = _pick_tile(V_pad, v_tile, 128)
    M_TILE = _pick_tile(M, m_tile, 8)

    est2 = (2 * M_TILE * H_pad * 4                    # hs tile (f32)
            + 2 * H_pad * V_TILE * it_c               # W_out tile
            + 2 * V_TILE * 4                          # bias tile
            + 2 * M_TILE * V_TILE * 4)                # logits out tile
    logits = pl.pallas_call(
        vocab_proj_kernel,
        out_shape=jax.ShapeDtypeStruct((M, V_pad), f32),
        grid=(M // M_TILE, V_pad // V_TILE),
        in_specs=[
            pl.BlockSpec((M_TILE, H_pad), lambda m, v: (m, 0)),
            pl.BlockSpec((H_pad, V_TILE), lambda m, v: (0, v)),
            pl.BlockSpec((1, V_TILE), lambda m, v: (0, v)),
        ],
        out_specs=pl.BlockSpec((M_TILE, V_TILE), lambda m, v: (m, v)),
        compiler_params=pltpu.CompilerParams(
            dimension_semantics=("parallel", "parallel"),
            vmem_limit_bytes=_vmem_limit(est2)),
    )(hs_flat, wout_p, bout_p)

    return logits.reshape(B_pad, T_pad, V_pad)[:B, :T, :V]


# -----------------------------------------------------------------------------
# Pure-JAX reference (mirrors torch GRU(batch_first=True) + Linear, eval mode).
# -----------------------------------------------------------------------------
def reference_forward(zs, cs, resps, params):
    emb_table = params["emb_table"]
    W_ih, W_hh = params["W_ih"], params["W_hh"]
    b_ih, b_hh = params["b_ih"], params["b_hh"]
    W_out, b_out = params["W_out"], params["b_out"]

    h0 = jnp.concatenate([zs, cs], axis=1).astype(jnp.float32)
    emb = jnp.take(emb_table, resps, axis=0).astype(jnp.float32)      # (B, T, E)
    emb_tbe = jnp.transpose(emb, (1, 0, 2))

    def step(h, x):
        gi = [x @ W_ih[g] + b_ih[g] for g in range(3)]
        gh = [h @ W_hh[g] + b_hh[g] for g in range(3)]
        r = jax.nn.sigmoid(gi[0] + gh[0])
        z = jax.nn.sigmoid(gi[1] + gh[1])
        n = jnp.tanh(gi[2] + r * gh[2])
        h_new = (1.0 - z) * n + z * h
        return h_new, h_new

    _, hs = lax.scan(step, h0, emb_tbe)                               # (T, B, H)
    logits = hs @ W_out + b_out                                       # (T, B, V)
    return jnp.transpose(logits, (1, 0, 2))


def make_params(key, vocab_size, emb_size, hid_size):
    ks = jax.random.split(key, 7)
    s = 1.0 / jnp.sqrt(hid_size)
    return {
        "emb_table": jax.random.normal(ks[0], (vocab_size, emb_size), jnp.float32) * 0.1,
        "W_ih": jax.random.uniform(ks[1], (3, emb_size, hid_size), jnp.float32, -s, s),
        "W_hh": jax.random.uniform(ks[2], (3, hid_size, hid_size), jnp.float32, -s, s),
        "b_ih": jax.random.uniform(ks[3], (3, 1, hid_size), jnp.float32, -s, s),
        "b_hh": jax.random.uniform(ks[4], (3, 1, hid_size), jnp.float32, -s, s),
        "W_out": jax.random.uniform(ks[5], (hid_size, vocab_size), jnp.float32, -s, s),
        "b_out": jax.random.uniform(ks[6], (1, vocab_size), jnp.float32, -s, s),
    }


if __name__ == "__main__":
    B, T = 2, 8                 # batch, max_utt_len
    Z, C = 16, 16               # latent / context dims; hid_size = Z + C
    H = Z + C
    E = 32                      # embedding size
    V = 64                      # vocab size

    key = jax.random.PRNGKey(0)
    k_z, k_c, k_r, k_p = jax.random.split(key, 4)

    zs = jax.random.normal(k_z, (B, Z), jnp.float32)
    cs = jax.random.normal(k_c, (B, C), jnp.float32)
    resps = jax.random.randint(k_r, (B, T), 0, V, dtype=jnp.int32)
    params = make_params(k_p, V, E, H)

    _single_buffer_ok()          # probe Buffered(1) support outside any jit trace

    ref = jax.block_until_ready(reference_forward(zs, cs, resps, params))

    # f32 MXU operands: tight validation of the GRU / projection semantics.
    fwd_f32 = jax.jit(functools.partial(training_decoder_forward,
                                        compute_dtype=jnp.float32))
    out_f32 = jax.block_until_ready(fwd_f32(zs, cs, resps, params))
    assert out_f32.shape == (B, T, V)
    assert jnp.allclose(out_f32, ref, atol=2e-3, rtol=2e-3), "f32 mismatch vs reference"

    # bf16 MXU operands (default, production path): looser tolerance for bf16 rounding.
    fwd = jax.jit(training_decoder_forward)
    out = jax.block_until_ready(fwd(zs, cs, resps, params))
    assert out.shape == (B, T, V)
    assert jnp.allclose(out, ref, atol=5e-2, rtol=5e-2), "bf16 mismatch vs reference"

    print("KERNEL_OK")
</pallas_src>

<mosaic_0001>
module attributes {stable_mosaic.version = 11 : i64} {
  func.func @_copy(%arg0: i32, %arg1: memref<8x128xf32, #tpu.memory_space<vmem>>, %arg2: memref<8x128xf32, #tpu.memory_space<vmem>>) attributes {dimension_semantics = [#tpu.dimension_semantics<arbitrary>], iteration_bounds = array<i64: 2>, scalar_prefetch = 0 : i64, scratch_operands = 0 : i64, tpu.core_type = #tpu.core_type<tc>, window_params = [{pipeline_mode = #tpu.pipeline_mode<synchronous>, transform_indices = @transform_0, window_bounds = array<i64: 8, 128>}, {pipeline_mode = #tpu.pipeline_mode<synchronous>, transform_indices = @transform_1, window_bounds = array<i64: 8, 128>}]} {
    %c0 = arith.constant 0 : index
    %c0_0 = arith.constant 0 : index
    %0 = vector.load %arg1[%c0, %c0_0] : memref<8x128xf32, #tpu.memory_space<vmem>>, vector<8x128xf32>
    %c0_1 = arith.constant 0 : index
    %c0_2 = arith.constant 0 : index
    %1 = vector.load %arg2[%c0_1, %c0_2] : memref<8x128xf32, #tpu.memory_space<vmem>>, vector<8x128xf32>
    tpu.vector_store %arg2[%c0_1, %c0_2], %0 {strides = array<i32>} : memref<8x128xf32, #tpu.memory_space<vmem>>, vector<8x128xf32>,
    return
  }
  func.func @transform_0(%arg0: i32) -> (i32, i32) {
    %c0_i32 = arith.constant 0 : i32
    %c0_i32_0 = arith.constant 0 : i32
    %c0_i32_1 = arith.constant 0 : i32
    return %c0_i32, %c0_i32_0 : i32, i32
  }
  func.func @transform_1(%arg0: i32) -> (i32, i32) {
    %c0_i32 = arith.constant 0 : i32
    %c0_i32_0 = arith.constant 0 : i32
    %c0_i32_1 = arith.constant 0 : i32
    return %c0_i32, %c0_i32_0 : i32, i32
  }
}

module attributes {stable_mosaic.version = 11 : i64} {
  func.func @gru_chunk_kernel(%arg0: i32, %arg1: memref<8x8x128xf32, #tpu.memory_space<vmem>>, %arg2: memref<8x128xf32, #tpu.memory_space<vmem>>, %arg3: memref<128x384xf32, #tpu.memory_space<vmem>>, %arg4: memref<128x384xf32, #tpu.memory_space<vmem>>, %arg5: memref<1x384xf32, #tpu.memory_space<vmem>>, %arg6: memref<1x128xf32, #tpu.memory_space<vmem>>, %arg7: memref<8x8x128xf32, #tpu.memory_space<vmem>>, %arg8: memref<8x128xf32, #tpu.memory_space<vmem>>) attributes {dimension_semantics = [#tpu.dimension_semantics<arbitrary>], iteration_bounds = array<i64: 1>, scalar_prefetch = 0 : i64, scratch_operands = 1 : i64, tpu.core_type = #tpu.core_type<tc>, window_params = [{transform_indices = @transform_0, window_bounds = array<i64: 8, 8, 128>}, {pipeline_mode = #tpu.pipeline_mode<synchronous>, transform_indices = @transform_1, window_bounds = array<i64: 8, 128>}, {pipeline_mode = #tpu.pipeline_mode<synchronous>, transform_indices = @transform_2, window_bounds = array<i64: 128, 384>}, {pipeline_mode = #tpu.pipeline_mode<synchronous>, transform_indices = @transform_3, window_bounds = array<i64: 128, 384>}, {pipeline_mode = #tpu.pipeline_mode<synchronous>, transform_indices = @transform_4, window_bounds = array<i64: 1, 384>}, {pipeline_mode = #tpu.pipeline_mode<synchronous>, transform_indices = @transform_5, window_bounds = array<i64: 1, 128>}, {transform_indices = @transform_6, window_bounds = array<i64: 8, 8, 128>}]} {
    %c0_i32 = arith.constant 0 : i32
    %0 = arith.cmpi eq, %arg0, %c0_i32 : i32
    %1 = arith.extui %0 : i1 to i32
    %c0_i32_0 = arith.constant 0 : i32
    %2 = arith.cmpi ne, %1, %c0_i32_0 : i32
    scf.if %2 {
      %c0_64 = arith.constant 0 : index
      %c0_65 = arith.constant 0 : index
      %272 = vector.load %arg2[%c0_64, %c0_65] : memref<8x128xf32, #tpu.memory_space<vmem>>, vector<8x128xf32>
      %c0_66 = arith.constant 0 : index
      %c0_67 = arith.constant 0 : index
      %273 = vector.load %arg8[%c0_66, %c0_67] : memref<8x128xf32, #tpu.memory_space<vmem>>, vector<8x128xf32>
      tpu.vector_store %arg8[%c0_66, %c0_67], %272 {strides = array<i32>} : memref<8x128xf32, #tpu.memory_space<vmem>>, vector<8x128xf32>,
    } else {
    }
    %c0 = arith.constant 0 : index
    %c0_1 = arith.constant 0 : index
    %c0_2 = arith.constant 0 : index
    %3 = vector.load %arg1[%c0, %c0_1, %c0_2] : memref<8x8x128xf32, #tpu.memory_space<vmem>>, vector<8x8x128xf32>
    %4 = vector.shape_cast %3 : vector<8x8x128xf32> to vector<64x128xf32>
    %c0_3 = arith.constant 0 : index
    %c0_4 = arith.constant 0 : index
    %5 = vector.load %arg3[%c0_3, %c0_4] : memref<128x384xf32, #tpu.memory_space<vmem>>, vector<128x384xf32>
    %cst = arith.constant dense<0.000000e+00> : vector<64x384xf32>
    %6 = tpu.matmul %4, %5, %cst {dimension_numbers = #tpu.dot_dimension_numbers<[1], [0], [0], [1], [0, 0, 1, 1], [], []>} : vector<64x128xf32>, vector<128x384xf32>, vector<64x384xf32> -> vector<64x384xf32>
    %c0_5 = arith.constant 0 : index
    %c0_6 = arith.constant 0 : index
    %7 = vector.load %arg5[%c0_5, %c0_6] : memref<1x384xf32, #tpu.memory_space<vmem>>, vector<1x384xf32>
    %8 = vector.broadcast %7 : vector<1x384xf32> to vector<64x384xf32>
    %9 = arith.addf %6, %8 : vector<64x384xf32>
    %c0_7 = arith.constant 0 : index
    %c0_8 = arith.constant 0 : index
    %10 = vector.load %arg4[%c0_7, %c0_8] : memref<128x384xf32, #tpu.memory_space<vmem>>, vector<128x384xf32>
    %c0_9 = arith.constant 0 : index
    %c0_10 = arith.constant 0 : index
    %11 = vector.load %arg6[%c0_9, %c0_10] : memref<1x128xf32, #tpu.memory_space<vmem>>, vector<1x128xf32>
    %12 = vector.shape_cast %11 : vector<1x128xf32> to vector<1x128xf32>
    %13 = vector.broadcast %12 : vector<1x128xf32> to vector<8x128xf32>
    %c0_11 = arith.constant 0 : index
    %c0_12 = arith.constant 0 : index
    %14 = vector.load %arg8[%c0_11, %c0_12] : memref<8x128xf32, #tpu.memory_space<vmem>>, vector<8x128xf32>
    %15 = vector.extract_strided_slice %9 {offsets = [0, 0], sizes = [8, 384], strides = [1, 1]} : vector<64x384xf32> to vector<8x384xf32>
    %cst_13 = arith.constant dense<0.000000e+00> : vector<8x384xf32>
    %16 = tpu.matmul %14, %10, %cst_13 {dimension_numbers = #tpu.dot_dimension_numbers<[1], [0], [0], [1], [0, 0, 1, 1], [], []>} : vector<8x128xf32>, vector<128x384xf32>, vector<8x384xf32> -> vector<8x384xf32>
    %17 = vector.extract_strided_slice %15 {offsets = [0, 0], sizes = [8, 128], strides = [1, 1]} : vector<8x384xf32> to vector<8x128xf32>
    %18 = vector.extract_strided_slice %16 {offsets = [0, 0], sizes = [8, 128], strides = [1, 1]} : vector<8x384xf32> to vector<8x128xf32>
    %19 = arith.addf %17, %18 : vector<8x128xf32>
    %20 = arith.negf %19 : vector<8x128xf32>
    %21 = math.exp %20 : vector<8x128xf32>
    %cst_14 = arith.constant 1.000000e+00 : f32
    %22 = vector.broadcast %cst_14 : f32 to vector<8x128xf32>
    %23 = arith.addf %22, %21 : vector<8x128xf32>
    %24 = arith.divf %22, %23 : vector<8x128xf32>
    %25 = vector.extract_strided_slice %15 {offsets = [0, 128], sizes = [8, 128], strides = [1, 1]} : vector<8x384xf32> to vector<8x128xf32>
    %26 = vector.extract_strided_slice %16 {offsets = [0, 128], sizes = [8, 128], strides = [1, 1]} : vector<8x384xf32> to vector<8x128xf32>
    %27 = arith.addf %25, %26 : vector<8x128xf32>
    %28 = arith.negf %27 : vector<8x128xf32>
    %29 = math.exp %28 : vector<8x128xf32>
    %cst_15 = arith.constant 1.000000e+00 : f32
    %30 = vector.broadcast %cst_15 : f32 to vector<8x128xf32>
    %31 = arith.addf %30, %29 : vector<8x128xf32>
    %32 = arith.divf %30, %31 : vector<8x128xf32>
    %33 = vector.extract_strided_slice %15 {offsets = [0, 256], sizes = [8, 128], strides = [1, 1]} : vector<8x384xf32> to vector<8x128xf32>
    %34 = vector.extract_strided_slice %16 {offsets = [0, 256], sizes = [8, 128], strides = [1, 1]} : vector<8x384xf32> to vector<8x128xf32>
    %35 = arith.addf %34, %13 : vector<8x128xf32>
    %36 = arith.mulf %24, %35 : vector<8x128xf32>
    %37 = arith.addf %33, %36 : vector<8x128xf32>
    %38 = math.tanh %37 : vector<8x128xf32>
    %cst_16 = arith.constant 1.000000e+00 : f32
    %39 = vector.broadcast %cst_16 : f32 to vector<8x128xf32>
    %40 = arith.subf %39, %32 : vector<8x128xf32>
    %41 = arith.mulf %40, %38 : vector<8x128xf32>
    %42 = arith.mulf %32, %14 : vector<8x128xf32>
    %43 = arith.addf %41, %42 : vector<8x128xf32>
    %c0_17 = arith.constant 0 : index
    %c0_18 = arith.constant 0 : index
    %c0_19 = arith.constant 0 : index
    %44 = vector.load %arg7[%c0_17, %c0_18, %c0_19] : memref<8x8x128xf32, #tpu.memory_space<vmem>>, vector<8x1x128xf32>
    %45 = vector.shape_cast %44 : vector<8x1x128xf32> to vector<8x128xf32>
    %46 = vector.shape_cast %43 : vector<8x128xf32> to vector<8x1x128xf32>
    tpu.vector_store %arg7[%c0_17, %c0_18, %c0_19], %46 {strides = array<i32>} : memref<8x8x128xf32, #tpu.memory_space<vmem>>, vector<8x1x128xf32>,
    %47 = vector.extract_strided_slice %9 {offsets = [8, 0], sizes = [8, 384], strides = [1, 1]} : vector<64x384xf32> to vector<8x384xf32>
    %cst_20 = arith.constant dense<0.000000e+00> : vector<8x384xf32>
    %48 = tpu.matmul %43, %10, %cst_20 {dimension_numbers = #tpu.dot_dimension_numbers<[1], [0], [0], [1], [0, 0, 1, 1], [], []>} : vector<8x128xf32>, vector<128x384xf32>, vector<8x384xf32> -> vector<8x384xf32>
    %49 = vector.extract_strided_slice %47 {offsets = [0, 0], sizes = [8, 128], strides = [1, 1]} : vector<8x384xf32> to vector<8x128xf32>
    %50 = vector.extract_strided_slice %48 {offsets = [0, 0], sizes = [8, 128], strides = [1, 1]} : vector<8x384xf32> to vector<8x128xf32>
    %51 = arith.addf %49, %50 : vector<8x128xf32>
    %52 = arith.negf %51 : vector<8x128xf32>
    %53 = math.exp %52 : vector<8x128xf32>
    %cst_21 = arith.constant 1.000000e+00 : f32
    %54 = vector.broadcast %cst_21 : f32 to vector<8x128xf32>
    %55 = arith.addf %54, %53 : vector<8x128xf32>
    %56 = arith.divf %54, %55 : vector<8x128xf32>
    %57 = vector.extract_strided_slice %47 {offsets = [0, 128], sizes = [8, 128], strides = [1, 1]} : vector<8x384xf32> to vector<8x128xf32>
    %58 = vector.extract_strided_slice %48 {offsets = [0, 128], sizes = [8, 128], strides = [1, 1]} : vector<8x384xf32> to vector<8x128xf32>
    %59 = arith.addf %57, %58 : vector<8x128xf32>
    %60 = arith.negf %59 : vector<8x128xf32>
    %61 = math.exp %60 : vector<8x128xf32>
    %cst_22 = arith.constant 1.000000e+00 : f32
    %62 = vector.broadcast %cst_22 : f32 to vector<8x128xf32>
    %63 = arith.addf %62, %61 : vector<8x128xf32>
    %64 = arith.divf %62, %63 : vector<8x128xf32>
    %65 = vector.extract_strided_slice %47 {offsets = [0, 256], sizes = [8, 128], strides = [1, 1]} : vector<8x384xf32> to vector<8x128xf32>
    %66 = vector.extract_strided_slice %48 {offsets = [0, 256], sizes = [8, 128], strides = [1, 1]} : vector<8x384xf32> to vector<8x128xf32>
    %67 = arith.addf %66, %13 : vector<8x128xf32>
    %68 = arith.mulf %56, %67 : vector<8x128xf32>
    %69 = arith.addf %65, %68 : vector<8x128xf32>
    %70 = math.tanh %69 : vector<8x128xf32>
    %cst_23 = arith.constant 1.000000e+00 : f32
    %71 = vector.broadcast %cst_23 : f32 to vector<8x128xf32>
    %72 = arith.subf %71, %64 : vector<8x128xf32>
    %73 = arith.mulf %72, %70 : vector<8x128xf32>
    %74 = arith.mulf %64, %43 : vector<8x128xf32>
    %75 = arith.addf %73, %74 : vector<8x128xf32>
    %c0_24 = arith.constant 0 : index
    %c1 = arith.constant 1 : index
    %c0_25 = arith.constant 0 : index
    %76 = vector.load %arg7[%c0_24, %c1, %c0_25] : memref<8x8x128xf32, #tpu.memory_space<vmem>>, vector<8x1x128xf32>
    %77 = vector.shape_cast %76 : vector<8x1x128xf32> to vector<8x128xf32>
    %78 = vector.shape_cast %75 : vector<8x128xf32> to vector<8x1x128xf32>
    tpu.vector_store %arg7[%c0_24, %c1, %c0_25], %78 {strides = array<i32>} : memref<8x8x128xf32, #tpu.memory_space<vmem>>, vector<8x1x128xf32>,
    %79 = vector.extract_strided_slice %9 {offsets = [16, 0], sizes = [8, 384], strides = [1, 1]} : vector<64x384xf32> to vector<8x384xf32>
    %cst_26 = arith.constant dense<0.000000e+00> : vector<8x384xf32>
    %80 = tpu.matmul %75, %10, %cst_26 {dimension_numbers = #tpu.dot_dimension_numbers<[1], [0], [0], [1], [0, 0, 1, 1], [], []>} : vector<8x128xf32>, vector<128x384xf32>, vector<8x384xf32> -> vector<8x384xf32>
    %81 = vector.extract_strided_slice %79 {offsets = [0, 0], sizes = [8, 128], strides = [1, 1]} : vector<8x384xf32> to vector<8x128xf32>
    %82 = vector.extract_strided_slice %80 {offsets = [0, 0], sizes = [8, 128], strides = [1, 1]} : vector<8x384xf32> to vector<8x128xf32>
    %83 = arith.addf %81, %82 : vector<8x128xf32>
    %84 = arith.negf %83 : vector<8x128xf32>
    %85 = math.exp %84 : vector<8x128xf32>
    %cst_27 = arith.constant 1.000000e+00 : f32
    %86 = vector.broadcast %cst_27 : f32 to vector<8x128xf32>
    %87 = arith.addf %86, %85 : vector<8x128xf32>
    %88 = arith.divf %86, %87 : vector<8x128xf32>
    %89 = vector.extract_strided_slice %79 {offsets = [0, 128], sizes = [8, 128], strides = [1, 1]} : vector<8x384xf32> to vector<8x128xf32>
    %90 = vector.extract_strided_slice %80 {offsets = [0, 128], sizes = [8, 128], strides = [1, 1]} : vector<8x384xf32> to vector<8x128xf32>
    %91 = arith.addf %89, %90 : vector<8x128xf32>
    %92 = arith.negf %91 : vector<8x128xf32>
    %93 = math.exp %92 : vector<8x128xf32>
    %cst_28 = arith.constant 1.000000e+00 : f32
    %94 = vector.broadcast %cst_28 : f32 to vector<8x128xf32>
    %95 = arith.addf %94, %93 : vector<8x128xf32>
    %96 = arith.divf %94, %95 : vector<8x128xf32>
    %97 = vector.extract_strided_slice %79 {offsets = [0, 256], sizes = [8, 128], strides = [1, 1]} : vector<8x384xf32> to vector<8x128xf32>
    %98 = vector.extract_strided_slice %80 {offsets = [0, 256], sizes = [8, 128], strides = [1, 1]} : vector<8x384xf32> to vector<8x128xf32>
    %99 = arith.addf %98, %13 : vector<8x128xf32>
    %100 = arith.mulf %88, %99 : vector<8x128xf32>
    %101 = arith.addf %97, %100 : vector<8x128xf32>
    %102 = math.tanh %101 : vector<8x128xf32>
    %cst_29 = arith.constant 1.000000e+00 : f32
    %103 = vector.broadcast %cst_29 : f32 to vector<8x128xf32>
    %104 = arith.subf %103, %96 : vector<8x128xf32>
    %105 = arith.mulf %104, %102 : vector<8x128xf32>
    %106 = arith.mulf %96, %75 : vector<8x128xf32>
    %107 = arith.addf %105, %106 : vector<8x128xf32>
    %c0_30 = arith.constant 0 : index
    %c2 = arith.constant 2 : index
    %c0_31 = arith.constant 0 : index
    %108 = vector.load %arg7[%c0_30, %c2, %c0_31] : memref<8x8x128xf32, #tpu.memory_space<vmem>>, vector<8x1x128xf32>
    %109 = vector.shape_cast %108 : vector<8x1x128xf32> to vector<8x128xf32>
    %110 = vector.shape_cast %107 : vector<8x128xf32> to vector<8x1x128xf32>
    tpu.vector_store %arg7[%c0_30, %c2, %c0_31], %110 {strides = array<i32>} : memref<8x8x128xf32, #tpu.memory_space<vmem>>, vector<8x1x128xf32>,
    %111 = vector.extract_strided_slice %9 {offsets = [24, 0], sizes = [8, 384], strides = [1, 1]} : vector<64x384xf32> to vector<8x384xf32>
    %cst_32 = arith.constant dense<0.000000e+00> : vector<8x384xf32>
    %112 = tpu.matmul %107, %10, %cst_32 {dimension_numbers = #tpu.dot_dimension_numbers<[1], [0], [0], [1], [0, 0, 1, 1], [], []>} : vector<8x128xf32>, vector<128x384xf32>, vector<8x384xf32> -> vector<8x384xf32>
    %113 = vector.extract_strided_slice %111 {offsets = [0, 0], sizes = [8, 128], strides = [1, 1]} : vector<8x384xf32> to vector<8x128xf32>
    %114 = vector.extract_strided_slice %112 {offsets = [0, 0], sizes = [8, 128], strides = [1, 1]} : vector<8x384xf32> to vector<8x128xf32>
    %115 = arith.addf %113, %114 : vector<8x128xf32>
    %116 = arith.negf %115 : vector<8x128xf32>
    %117 = math.exp %116 : vector<8x128xf32>
    %cst_33 = arith.constant 1.000000e+00 : f32
    %118 = vector.broadcast %cst_33 : f32 to vector<8x128xf32>
    %119 = arith.addf %118, %117 : vector<8x128xf32>
    %120 = arith.divf %118, %119 : vector<8x128xf32>
    %121 = vector.extract_strided_slice %111 {offsets = [0, 128], sizes = [8, 128], strides = [1, 1]} : vector<8x384xf32> to vector<8x128xf32>
    %122 = vector.extract_strided_slice %112 {offsets = [0, 128], sizes = [8, 128], strides = [1, 1]} : vector<8x384xf32> to vector<8x128xf32>
    %123 = arith.addf %121, %122 : vector<8x128xf32>
    %124 = arith.negf %123 : vector<8x128xf32>
    %125 = math.exp %124 : vector<8x128xf32>
    %cst_34 = arith.constant 1.000000e+00 : f32
    %126 = vector.broadcast %cst_34 : f32 to vector<8x128xf32>
    %127 = arith.addf %126, %125 : vector<8x128xf32>
    %128 = arith.divf %126, %127 : vector<8x128xf32>
    %129 = vector.extract_strided_slice %111 {offsets = [0, 256], sizes = [8, 128], strides = [1, 1]} : vector<8x384xf32> to vector<8x128xf32>
    %130 = vector.extract_strided_slice %112 {offsets = [0, 256], sizes = [8, 128], strides = [1, 1]} : vector<8x384xf32> to vector<8x128xf32>
    %131 = arith.addf %130, %13 : vector<8x128xf32>
    %132 = arith.mulf %120, %131 : vector<8x128xf32>
    %133 = arith.addf %129, %132 : vector<8x128xf32>
    %134 = math.tanh %133 : vector<8x128xf32>
    %cst_35 = arith.constant 1.000000e+00 : f32
    %135 = vector.broadcast %cst_35 : f32 to vector<8x128xf32>
    %136 = arith.subf %135, %128 : vector<8x128xf32>
    %137 = arith.mulf %136, %134 : vector<8x128xf32>
    %138 = arith.mulf %128, %107 : vector<8x128xf32>
    %139 = arith.addf %137, %138 : vector<8x128xf32>
    %c0_36 = arith.constant 0 : index
    %c3 = arith.constant 3 : index
    %c0_37 = arith.constant 0 : index
    %140 = vector.load %arg7[%c0_36, %c3, %c0_37] : memref<8x8x128xf32, #tpu.memory_space<vmem>>, vector<8x1x128xf32>
    %141 = vector.shape_cast %140 : vector<8x1x128xf32> to vector<8x128xf32>
    %142 = vector.shape_cast %139 : vector<8x128xf32> to vector<8x1x128xf32>
    tpu.vector_store %arg7[%c0_36, %c3, %c0_37], %142 {strides = array<i32>} : memref<8x8x128xf32, #tpu.memory_space<vmem>>, vector<8x1x128xf32>,
    %143 = vector.extract_strided_slice %9 {offsets = [32, 0], sizes = [8, 384], strides = [1, 1]} : vector<64x384xf32> to vector<8x384xf32>
    %cst_38 = arith.constant dense<0.000000e+00> : vector<8x384xf32>
    %144 = tpu.matmul %139, %10, %cst_38 {dimension_numbers = #tpu.dot_dimension_numbers<[1], [0], [0], [1], [0, 0, 1, 1], [], []>} : vector<8x128xf32>, vector<128x384xf32>, vector<8x384xf32> -> vector<8x384xf32>
    %145 = vector.extract_strided_slice %143 {offsets = [0, 0], sizes = [8, 128], strides = [1, 1]} : vector<8x384xf32> to vector<8x128xf32>
    %146 = vector.extract_strided_slice %144 {offsets = [0, 0], sizes = [8, 128], strides = [1, 1]} : vector<8x384xf32> to vector<8x128xf32>
    %147 = arith.addf %145, %146 : vector<8x128xf32>
    %148 = arith.negf %147 : vector<8x128xf32>
    %149 = math.exp %148 : vector<8x128xf32>
    %cst_39 = arith.constant 1.000000e+00 : f32
    %150 = vector.broadcast %cst_39 : f32 to vector<8x128xf32>
    %151 = arith.addf %150, %149 : vector<8x128xf32>
    %152 = arith.divf %150, %151 : vector<8x128xf32>
    %153 = vector.extract_strided_slice %143 {offsets = [0, 128], sizes = [8, 128], strides = [1, 1]} : vector<8x384xf32> to vector<8x128xf32>
    %154 = vector.extract_strided_slice %144 {offsets = [0, 128], sizes = [8, 128], strides = [1, 1]} : vector<8x384xf32> to vector<8x128xf32>
    %155 = arith.addf %153, %154 : vector<8x128xf32>
    %156 = arith.negf %155 : vector<8x128xf32>
    %157 = math.exp %156 : vector<8x128xf32>
    %cst_40 = arith.constant 1.000000e+00 : f32
    %158 = vector.broadcast %cst_40 : f32 to vector<8x128xf32>
    %159 = arith.addf %158, %157 : vector<8x128xf32>
    %160 = arith.divf %158, %159 : vector<8x128xf32>
    %161 = vector.extract_strided_slice %143 {offsets = [0, 256], sizes = [8, 128], strides = [1, 1]} : vector<8x384xf32> to vector<8x128xf32>
    %162 = vector.extract_strided_slice %144 {offsets = [0, 256], sizes = [8, 128], strides = [1, 1]} : vector<8x384xf32> to vector<8x128xf32>
    %163 = arith.addf %162, %13 : vector<8x128xf32>
    %164 = arith.mulf %152, %163 : vector<8x128xf32>
    %165 = arith.addf %161, %164 : vector<8x128xf32>
    %166 = math.tanh %165 : vector<8x128xf32>
    %cst_41 = arith.constant 1.000000e+00 : f32
    %167 = vector.broadcast %cst_41 : f32 to vector<8x128xf32>
    %168 = arith.subf %167, %160 : vector<8x128xf32>
    %169 = arith.mulf %168, %166 : vector<8x128xf32>
    %170 = arith.mulf %160, %139 : vector<8x128xf32>
    %171 = arith.addf %169, %170 : vector<8x128xf32>
    %c0_42 = arith.constant 0 : index
    %c4 = arith.constant 4 : index
    %c0_43 = arith.constant 0 : index
    %172 = vector.load %arg7[%c0_42, %c4, %c0_43] : memref<8x8x128xf32, #tpu.memory_space<vmem>>, vector<8x1x128xf32>
    %173 = vector.shape_cast %172 : vector<8x1x128xf32> to vector<8x128xf32>
    %174 = vector.shape_cast %171 : vector<8x128xf32> to vector<8x1x128xf32>
    tpu.vector_store %arg7[%c0_42, %c4, %c0_43], %174 {strides = array<i32>} : memref<8x8x128xf32, #tpu.memory_space<vmem>>, vector<8x1x128xf32>,
    %175 = vector.extract_strided_slice %9 {offsets = [40, 0], sizes = [8, 384], strides = [1, 1]} : vector<64x384xf32> to vector<8x384xf32>
    %cst_44 = arith.constant dense<0.000000e+00> : vector<8x384xf32>
    %176 = tpu.matmul %171, %10, %cst_44 {dimension_numbers = #tpu.dot_dimension_numbers<[1], [0], [0], [1], [0, 0, 1, 1], [], []>} : vector<8x128xf32>, vector<128x384xf32>, vector<8x384xf32> -> vector<8x384xf32>
    %177 = vector.extract_strided_slice %175 {offsets = [0, 0], sizes = [8, 128], strides = [1, 1]} : vector<8x384xf32> to vector<8x128xf32>
    %178 = vector.extract_strided_slice %176 {offsets = [0, 0], sizes = [8, 128], strides = [1, 1]} : vector<8x384xf32> to vector<8x128xf32>
    %179 = arith.addf %177, %178 : vector<8x128xf32>
    %180 = arith.negf %179 : vector<8x128xf32>
    %181 = math.exp %180 : vector<8x128xf32>
    %cst_45 = arith.constant 1.000000e+00 : f32
    %182 = vector.broadcast %cst_45 : f32 to vector<8x128xf32>
    %183 = arith.addf %182, %181 : vector<8x128xf32>
    %184 = arith.divf %182, %183 : vector<8x128xf32>
    %185 = vector.extract_strided_slice %175 {offsets = [0, 128], sizes = [8, 128], strides = [1, 1]} : vector<8x384xf32> to vector<8x128xf32>
    %186 = vector.extract_strided_slice %176 {offsets = [0, 128], sizes = [8, 128], strides = [1, 1]} : vector<8x384xf32> to vector<8x128xf32>
    %187 = arith.addf %185, %186 : vector<8x128xf32>
    %188 = arith.negf %187 : vector<8x128xf32>
    %189 = math.exp %188 : vector<8x128xf32>
    %cst_46 = arith.constant 1.000000e+00 : f32
    %190 = vector.broadcast %cst_46 : f32 to vector<8x128xf32>
    %191 = arith.addf %190, %189 : vector<8x128xf32>
    %192 = arith.divf %190, %191 : vector<8x128xf32>
    %193 = vector.extract_strided_slice %175 {offsets = [0, 256], sizes = [8, 128], strides = [1, 1]} : vector<8x384xf32> to vector<8x128xf32>
    %194 = vector.extract_strided_slice %176 {offsets = [0, 256], sizes = [8, 128], strides = [1, 1]} : vector<8x384xf32> to vector<8x128xf32>
    %195 = arith.addf %194, %13 : vector<8x128xf32>
    %196 = arith.mulf %184, %195 : vector<8x128xf32>
    %197 = arith.addf %193, %196 : vector<8x128xf32>
    %198 = math.tanh %197 : vector<8x128xf32>
    %cst_47 = arith.constant 1.000000e+00 : f32
    %199 = vector.broadcast %cst_47 : f32 to vector<8x128xf32>
    %200 = arith.subf %199, %192 : vector<8x128xf32>
    %201 = arith.mulf %200, %198 : vector<8x128xf32>
    %202 = arith.mulf %192, %171 : vector<8x128xf32>
    %203 = arith.addf %201, %202 : vector<8x128xf32>
    %c0_48 = arith.constant 0 : index
    %c5 = arith.constant 5 : index
    %c0_49 = arith.constant 0 : index
    %204 = vector.load %arg7[%c0_48, %c5, %c0_49] : memref<8x8x128xf32, #tpu.memory_space<vmem>>, vector<8x1x128xf32>
    %205 = vector.shape_cast %204 : vector<8x1x128xf32> to vector<8x128xf32>
    %206 = vector.shape_cast %203 : vector<8x128xf32> to vector<8x1x128xf32>
    tpu.vector_store %arg7[%c0_48, %c5, %c0_49], %206 {strides = array<i32>} : memref<8x8x128xf32, #tpu.memory_space<vmem>>, vector<8x1x128xf32>,
    %207 = vector.extract_strided_slice %9 {offsets = [48, 0], sizes = [8, 384], strides = [1, 1]} : vector<64x384xf32> to vector<8x384xf32>
    %cst_50 = arith.constant dense<0.000000e+00> : vector<8x384xf32>
    %208 = tpu.matmul %203, %10, %cst_50 {dimension_numbers = #tpu.dot_dimension_numbers<[1], [0], [0], [1], [0, 0, 1, 1], [], []>} : vector<8x128xf32>, vector<128x384xf32>, vector<8x384xf32> -> vector<8x384xf32>
    %209 = vector.extract_strided_slice %207 {offsets = [0, 0], sizes = [8, 128], strides = [1, 1]} : vector<8x384xf32> to vector<8x128xf32>
    %210 = vector.extract_strided_slice %208 {offsets = [0, 0], sizes = [8, 128], strides = [1, 1]} : vector<8x384xf32> to vector<8x128xf32>
    %211 = arith.addf %209, %210 : vector<8x128xf32>
    %212 = arith.negf %211 : vector<8x128xf32>
    %213 = math.exp %212 : vector<8x128xf32>
    %cst_51 = arith.constant 1.000000e+00 : f32
    %214 = vector.broadcast %cst_51 : f32 to vector<8x128xf32>
    %215 = arith.addf %214, %213 : vector<8x128xf32>
    %216 = arith.divf %214, %215 : vector<8x128xf32>
    %217 = vector.extract_strided_slice %207 {offsets = [0, 128], sizes = [8, 128], strides = [1, 1]} : vector<8x384xf32> to vector<8x128xf32>
    %218 = vector.extract_strided_slice %208 {offsets = [0, 128], sizes = [8, 128], strides = [1, 1]} : vector<8x384xf32> to vector<8x128xf32>
    %219 = arith.addf %217, %218 : vector<8x128xf32>
    %220 = arith.negf %219 : vector<8x128xf32>
    %221 = math.exp %220 : vector<8x128xf32>
    %cst_52 = arith.constant 1.000000e+00 : f32
    %222 = vector.broadcast %cst_52 : f32 to vector<8x128xf32>
    %223 = arith.addf %222, %221 : vector<8x128xf32>
    %224 = arith.divf %222, %223 : vector<8x128xf32>
    %225 = vector.extract_strided_slice %207 {offsets = [0, 256], sizes = [8, 128], strides = [1, 1]} : vector<8x384xf32> to vector<8x128xf32>
    %226 = vector.extract_strided_slice %208 {offsets = [0, 256], sizes = [8, 128], strides = [1, 1]} : vector<8x384xf32> to vector<8x128xf32>
    %227 = arith.addf %226, %13 : vector<8x128xf32>
    %228 = arith.mulf %216, %227 : vector<8x128xf32>
    %229 = arith.addf %225, %228 : vector<8x128xf32>
    %230 = math.tanh %229 : vector<8x128xf32>
    %cst_53 = arith.constant 1.000000e+00 : f32
    %231 = vector.broadcast %cst_53 : f32 to vector<8x128xf32>
    %232 = arith.subf %231, %224 : vector<8x128xf32>
    %233 = arith.mulf %232, %230 : vector<8x128xf32>
    %234 = arith.mulf %224, %203 : vector<8x128xf32>
    %235 = arith.addf %233, %234 : vector<8x128xf32>
    %c0_54 = arith.constant 0 : index
    %c6 = arith.constant 6 : index
    %c0_55 = arith.constant 0 : index
    %236 = vector.load %arg7[%c0_54, %c6, %c0_55] : memref<8x8x128xf32, #tpu.memory_space<vmem>>, vector<8x1x128xf32>
    %237 = vector.shape_cast %236 : vector<8x1x128xf32> to vector<8x128xf32>
    %238 = vector.shape_cast %235 : vector<8x128xf32> to vector<8x1x128xf32>
    tpu.vector_store %arg7[%c0_54, %c6, %c0_55], %238 {strides = array<i32>} : memref<8x8x128xf32, #tpu.memory_space<vmem>>, vector<8x1x128xf32>,
    %239 = vector.extract_strided_slice %9 {offsets = [56, 0], sizes = [8, 384], strides = [1, 1]} : vector<64x384xf32> to vector<8x384xf32>
    %cst_56 = arith.constant dense<0.000000e+00> : vector<8x384xf32>
    %240 = tpu.matmul %235, %10, %cst_56 {dimension_numbers = #tpu.dot_dimension_numbers<[1], [0], [0], [1], [0, 0, 1, 1], [], []>} : vector<8x128xf32>, vector<128x384xf32>, vector<8x384xf32> -> vector<8x384xf32>
    %241 = vector.extract_strided_slice %239 {offsets = [0, 0], sizes = [8, 128], strides = [1, 1]} : vector<8x384xf32> to vector<8x128xf32>
    %242 = vector.extract_strided_slice %240 {offsets = [0, 0], sizes = [8, 128], strides = [1, 1]} : vector<8x384xf32> to vector<8x128xf32>
    %243 = arith.addf %241, %242 : vector<8x128xf32>
    %244 = arith.negf %243 : vector<8x128xf32>
    %245 = math.exp %244 : vector<8x128xf32>
    %cst_57 = arith.constant 1.000000e+00 : f32
    %246 = vector.broadcast %cst_57 : f32 to vector<8x128xf32>
    %247 = arith.addf %246, %245 : vector<8x128xf32>
    %248 = arith.divf %246, %247 : vector<8x128xf32>
    %249 = vector.extract_strided_slice %239 {offsets = [0, 128], sizes = [8, 128], strides = [1, 1]} : vector<8x384xf32> to vector<8x128xf32>
    %250 = vector.extract_strided_slice %240 {offsets = [0, 128], sizes = [8, 128], strides = [1, 1]} : vector<8x384xf32> to vector<8x128xf32>
    %251 = arith.addf %249, %250 : vector<8x128xf32>
    %252 = arith.negf %251 : vector<8x128xf32>
    %253 = math.exp %252 : vector<8x128xf32>
    %cst_58 = arith.constant 1.000000e+00 : f32
    %254 = vector.broadcast %cst_58 : f32 to vector<8x128xf32>
    %255 = arith.addf %254, %253 : vector<8x128xf32>
    %256 = arith.divf %254, %255 : vector<8x128xf32>
    %257 = vector.extract_strided_slice %239 {offsets = [0, 256], sizes = [8, 128], strides = [1, 1]} : vector<8x384xf32> to vector<8x128xf32>
    %258 = vector.extract_strided_slice %240 {offsets = [0, 256], sizes = [8, 128], strides = [1, 1]} : vector<8x384xf32> to vector<8x128xf32>
    %259 = arith.addf %258, %13 : vector<8x128xf32>
    %260 = arith.mulf %248, %259 : vector<8x128xf32>
    %261 = arith.addf %257, %260 : vector<8x128xf32>
    %262 = math.tanh %261 : vector<8x128xf32>
    %cst_59 = arith.constant 1.000000e+00 : f32
    %263 = vector.broadcast %cst_59 : f32 to vector<8x128xf32>
    %264 = arith.subf %263, %256 : vector<8x128xf32>
    %265 = arith.mulf %264, %262 : vector<8x128xf32>
    %266 = arith.mulf %256, %235 : vector<8x128xf32>
    %267 = arith.addf %265, %266 : vector<8x128xf32>
    %c0_60 = arith.constant 0 : index
    %c7 = arith.constant 7 : index
    %c0_61 = arith.constant 0 : index
    %268 = vector.load %arg7[%c0_60, %c7, %c0_61] : memref<8x8x128xf32, #tpu.memory_space<vmem>>, vector<8x1x128xf32>
    %269 = vector.shape_cast %268 : vector<8x1x128xf32> to vector<8x128xf32>
    %270 = vector.shape_cast %267 : vector<8x128xf32> to vector<8x1x128xf32>
    tpu.vector_store %arg7[%c0_60, %c7, %c0_61], %270 {strides = array<i32>} : memref<8x8x128xf32, #tpu.memory_space<vmem>>, vector<8x1x128xf32>,
    %c0_62 = arith.constant 0 : index
    %c0_63 = arith.constant 0 : index
    %271 = vector.load %arg8[%c0_62, %c0_63] : memref<8x128xf32, #tpu.memory_space<vmem>>, vector<8x128xf32>
    tpu.vector_store %arg8[%c0_62, %c0_63], %267 {strides = array<i32>} : memref<8x128xf32, #tpu.memory_space<vmem>>, vector<8x128xf32>,
    return
  }
  func.func @transform_0(%arg0: i32) -> (i32, i32, i32) {
    %c0_i32 = arith.constant 0 : i32
    %c0_i32_0 = arith.constant 0 : i32
    %c0_i32_1 = arith.constant 0 : i32
    return %arg0, %c0_i32, %c0_i32_0 : i32, i32, i32
  }
  func.func @transform_1(%arg0: i32) -> (i32, i32) {
    %c0_i32 = arith.constant 0 : i32
    %c0_i32_0 = arith.constant 0 : i32
    %c0_i32_1 = arith.constant 0 : i32
    return %c0_i32, %c0_i32_0 : i32, i32
  }
  func.func @transform_2(%arg0: i32) -> (i32, i32) {
    %c0_i32 = arith.constant 0 : i32
    %c0_i32_0 = arith.constant 0 : i32
    %c0_i32_1 = arith.constant 0 : i32
    return %c0_i32, %c0_i32_0 : i32, i32
  }
  func.func @transform_3(%arg0: i32) -> (i32, i32) {
    %c0_i32 = arith.constant 0 : i32
    %c0_i32_0 = arith.constant 0 : i32
    %c0_i32_1 = arith.constant 0 : i32
    return %c0_i32, %c0_i32_0 : i32, i32
  }
  func.func @transform_4(%arg0: i32) -> (i32, i32) {
    %c0_i32 = arith.constant 0 : i32
    %c0_i32_0 = arith.constant 0 : i32
    %c0_i32_1 = arith.constant 0 : i32
    return %c0_i32, %c0_i32_0 : i32, i32
  }
  func.func @transform_5(%arg0: i32) -> (i32, i32) {
    %c0_i32 = arith.constant 0 : i32
    %c0_i32_0 = arith.constant 0 : i32
    %c0_i32_1 = arith.constant 0 : i32
    return %c0_i32, %c0_i32_0 : i32, i32
  }
  func.func @transform_6(%arg0: i32) -> (i32, i32, i32) {
    %c0_i32 = arith.constant 0 : i32
    %c0_i32_0 = arith.constant 0 : i32
    %c0_i32_1 = arith.constant 0 : i32
    return %c0_i32, %arg0, %c0_i32_0 : i32, i32, i32
  }
}

module attributes {stable_mosaic.version = 11 : i64} {
  func.func @vocab_proj_kernel(%arg0: i32, %arg1: i32, %arg2: memref<64x128xf32, #tpu.memory_space<vmem>>, %arg3: memref<128x128xf32, #tpu.memory_space<vmem>>, %arg4: memref<1x128xf32, #tpu.memory_space<vmem>>, %arg5: memref<64x128xf32, #tpu.memory_space<vmem>>) attributes {dimension_semantics = [#tpu.dimension_semantics<parallel>, #tpu.dimension_semantics<parallel>], iteration_bounds = array<i64: 1, 1>, scalar_prefetch = 0 : i64, scratch_operands = 0 : i64, tpu.core_type = #tpu.core_type<tc>, window_params = [{transform_indices = @transform_0, window_bounds = array<i64: 64, 128>}, {transform_indices = @transform_1, window_bounds = array<i64: 128, 128>}, {transform_indices = @transform_2, window_bounds = array<i64: 1, 128>}, {transform_indices = @transform_3, window_bounds = array<i64: 64, 128>}]} {
    %c0 = arith.constant 0 : index
    %c0_0 = arith.constant 0 : index
    %0 = vector.load %arg2[%c0, %c0_0] : memref<64x128xf32, #tpu.memory_space<vmem>>, vector<64x128xf32>
    %c0_1 = arith.constant 0 : index
    %c0_2 = arith.constant 0 : index
    %1 = vector.load %arg3[%c0_1, %c0_2] : memref<128x128xf32, #tpu.memory_space<vmem>>, vector<128x128xf32>
    %cst = arith.constant dense<0.000000e+00> : vector<64x128xf32>
    %2 = tpu.matmul %0, %1, %cst {dimension_numbers = #tpu.dot_dimension_numbers<[1], [0], [0], [1], [0, 0, 1, 1], [], []>} : vector<64x128xf32>, vector<128x128xf32>, vector<64x128xf32> -> vector<64x128xf32>
    %c0_3 = arith.constant 0 : index
    %c0_4 = arith.constant 0 : index
    %3 = vector.load %arg4[%c0_3, %c0_4] : memref<1x128xf32, #tpu.memory_space<vmem>>, vector<1x128xf32>
    %4 = vector.broadcast %3 : vector<1x128xf32> to vector<64x128xf32>
    %5 = arith.addf %2, %4 : vector<64x128xf32>
    %c0_5 = arith.constant 0 : index
    %c0_6 = arith.constant 0 : index
    %6 = vector.load %arg5[%c0_5, %c0_6] : memref<64x128xf32, #tpu.memory_space<vmem>>, vector<64x128xf32>
    tpu.vector_store %arg5[%c0_5, %c0_6], %5 {strides = array<i32>} : memref<64x128xf32, #tpu.memory_space<vmem>>, vector<64x128xf32>,
    return
  }
  func.func @transform_0(%arg0: i32, %arg1: i32) -> (i32, i32) {
    %c0_i32 = arith.constant 0 : i32
    %c0_i32_0 = arith.constant 0 : i32
    return %arg0, %c0_i32 : i32, i32
  }
  func.func @transform_1(%arg0: i32, %arg1: i32) -> (i32, i32) {
    %c0_i32 = arith.constant 0 : i32
    %c0_i32_0 = arith.constant 0 : i32
    return %c0_i32, %arg1 : i32, i32
  }
  func.func @transform_2(%arg0: i32, %arg1: i32) -> (i32, i32) {
    %c0_i32 = arith.constant 0 : i32
    %c0_i32_0 = arith.constant 0 : i32
    return %c0_i32, %arg1 : i32, i32
  }
  func.func @transform_3(%arg0: i32, %arg1: i32) -> (i32, i32) {
    %c0_i32 = arith.constant 0 : i32
    return %arg0, %arg1 : i32, i32
  }
}

</mosaic_0001>

<llo_original>
// kernel: tpu_custom_call.1
$region0: #{tpu_custom_call.1}
  #allocation0 [shape = 'u32[]', space=smem, size = 0x4, offset = 0x4, fixed_abs, tag = 'smem constant byte address 0x4 - core index']
  #allocation1 [shape = 'u32[144,128]{1,0:T(1,128)}', space=vmem, size = 0x12000, scoped, tag = 'internal scratch']
  %s0 = inlined_call_operand.hbm [shape: f32[8,128], index: 0, kind: input, shape index: {}]
  %s1 = inlined_call_operand.hbm [shape: f32[8,128], index: 1, kind: output, shape index: {}]
  %s2 = sld [smem:[#allocation0]]
  $region41: #{tpu_custom_call.1} parent=0
    _
  %s4 = ssub.s32 1, %s2
  %s5 = scalar_select 0, %s4, %s2
  $region1: #{tpu_custom_call.1} parent=0
    #allocation2 [shape = 'u8[4096]{0}', space=vmem, size = 0x1000, scoped, tag = 'input window, operand 0, single buffered']
    #allocation3 [shape = 's32[2]{0}', space=sflag, size = 0x8, scoped, tag = 'scoped memory for tpu_custom_call.1']
    #allocation4 [shape = 's32[2]{0}', space=sflag, size = 0x8, scoped, tag = 'scoped memory for tpu_custom_call.1']
    #allocation5 [shape = 'u8[4096]{0}', space=vmem, size = 0x1000, scoped, tag = 'output window, operand 0, single buffered']
    %6 = vsyncpa [#allocation3], 0
    %7 = vsyncpa [#allocation4], 0
    loop: start=0, step=1, limit=4
    $region2: #{tpu_custom_call.1} parent=1 // loop_pre_header
      _
    $region3: #{tpu_custom_call.1} parent=1 // loop_header
      %s9 = sphi 0, %s13
      %p10 = scmp.ge.s32.totalorder %s9, 4
      %s17 = sphi 0, %s17
      %s19 = sphi 0, %s17
      %s20 = sphi 0, %s19
      %s34 = sphi 0, %s20
      %s38 = sphi 0, %s38
      %s40 = sphi 0, %s38
      %s41 = sphi 0, %s40
      %s55 = sphi 0, %s41
    $region4: #{tpu_custom_call.1} parent=1 // loop_header_branch
      %12 = sbr.rel (%p10) target = $region8
    $region5: #{tpu_custom_call.1} parent=1 // loop_body
      %s14 = ssub.s32 %s9, 1
      %s15 = ssub.s32 %s9, 2
      %s16 = sadd.s32 %s9, 1
      %s18 = sadd.s32 %s17, 1
      %p21 = scmp.eq.s32.totalorder %s9, 1
      %p22 = scmp.ne.s32.totalorder %s17, %s19
      %p23 = scmp.eq.s32.totalorder %s9, 0
      %p24 = por %p22, %p23
      %p25 = scmp.ne.s32.totalorder %s17, %s19
      %p26 = scmp.eq.s32.totalorder %s14, 1
      %p27 = por %p25, %p26
      %p28 = scmp.ne.s32.totalorder %s19, %s20
      %p29 = scmp.eq.s32.totalorder %s14, 0
      %p30 = por %p28, %p29
      %p31 = scmp.ne.s32.totalorder %s19, %s20
      %p32 = scmp.eq.s32.totalorder %s15, 1
      %p33 = por %p31, %p32
      %p35 = scmp.ne.s32.totalorder %s20, %s34
      %p36 = scmp.eq.s32.totalorder %s15, 0
      %p37 = por %p35, %p36
      %s39 = sadd.s32 %s38, 1
      %p42 = scmp.eq.s32.totalorder %s9, 1
      %p43 = scmp.ne.s32.totalorder %s38, %s40
      %p44 = scmp.eq.s32.totalorder %s9, 0
      %p45 = por %p43, %p44
      %p46 = scmp.ne.s32.totalorder %s38, %s40
      %p47 = scmp.eq.s32.totalorder %s14, 1
      %p48 = por %p46, %p47
      %p49 = scmp.ne.s32.totalorder %s40, %s41
      %p50 = scmp.eq.s32.totalorder %s14, 0
      %p51 = por %p49, %p50
      %p52 = scmp.ne.s32.totalorder %s40, %s41
      %p53 = scmp.eq.s32.totalorder %s15, 1
      %p54 = por %p52, %p53
      %p56 = scmp.ne.s32.totalorder %s41, %s55
      %p57 = scmp.eq.s32.totalorder %s15, 0
      %p58 = por %p56, %p57
      %p59 = scmp.le.s32.totalorder 1, %s9
      %p60 = scmp.lt.s32.totalorder %s9, 3
      %p61 = pnand %p59, %p60
      %p62 = pneg %p61
      // Predicated region
      $region9: #{tpu_custom_call.1} parent=5 // pred_check
        _
      $region10: #{tpu_custom_call.1} parent=5 // pred_check_branch
        %64 = sbr.rel (%p61) target = $region12
      $region11: #{tpu_custom_call.1} parent=5 // pred_region
        %s65 = ssub.s32 %s9, 1
        // Predicated region
        $region13: #{tpu_custom_call.1} parent=11 // pred_check
          %p66 = pneg %p30
        $region14: #{tpu_custom_call.1} parent=11 // pred_check_branch
          %68 = sbr.rel (%p66) target = $region16
        $region15: #{tpu_custom_call.1} parent=11 // pred_region
          %s70 = ssub.s32 128, 128
          %71 = vsyncadd [#allocation3], %s70
          %s73 = sshll.u32 [#allocation2], 4
          %s74 = int_to_ptr.vmem [resolvable:$true] %s73
          %76 = dma.hbm_to_vmem [thread:$0]  %s0, 128, %s74, [#allocation3]
        $region16: #{tpu_custom_call.1} parent=11 // pred_fallthru
          _
      $region12: #{tpu_custom_call.1} parent=5 // pred_fallthru
        _
      %p77 = scmp.lt.s32.totalorder %s9, 2
      // Predicated region
      $region17: #{tpu_custom_call.1} parent=5 // pred_check
        %p78 = pneg %p77
      $region18: #{tpu_custom_call.1} parent=5 // pred_check_branch
        %80 = sbr.rel (%p78) target = $region20
      $region19: #{tpu_custom_call.1} parent=5 // pred_region
        _
      $region20: #{tpu_custom_call.1} parent=5 // pred_fallthru
        _
      %p81 = scmp.le.s32.totalorder 1, %s9
      %p82 = scmp.lt.s32.totalorder %s9, 3
      %p83 = pnand %p81, %p82
      %p84 = pneg %p83
      // Predicated region
      $region21: #{tpu_custom_call.1} parent=5 // pred_check
        _
      $region22: #{tpu_custom_call.1} parent=5 // pred_check_branch
        %86 = sbr.rel (%p83) target = $region24
      $region23: #{tpu_custom_call.1} parent=5 // pred_region
        %s87 = ssub.s32 %s9, 1
        // Predicated region
        $region25: #{tpu_custom_call.1} parent=23 // pred_check
          %p88 = pneg %p30
        $region26: #{tpu_custom_call.1} parent=23 // pred_check_branch
          %90 = sbr.rel (%p88) target = $region28
        $region27: #{tpu_custom_call.1} parent=23 // pred_region
          %91 = dma.done [#allocation3], 128
        $region28: #{tpu_custom_call.1} parent=23 // pred_fallthru
          _
        %p92 = pneg %p30
        %p93 = pneg %p27
        %p94 = pneg %p51
        %p95 = pneg %p48
        %v96 = vld [vmem:[#allocation2] sm:$0xff]
        %97 = vst [vmem:[#allocation5] sm:$0xff] %v96
        // Predicated region
        $region29: #{tpu_custom_call.1} parent=23 // pred_check
          %p98 = pneg %p48
        $region30: #{tpu_custom_call.1} parent=23 // pred_check_branch
          %100 = sbr.rel (%p98) target = $region32
        $region31: #{tpu_custom_call.1} parent=23 // pred_region
          %s102 = ssub.s32 128, 128
          %103 = vsyncadd [#allocation4], %s102
          %s105 = sshll.u32 [#allocation5], 4
          %s106 = int_to_ptr.vmem [resolvable:$true] %s105
          %108 = dma.vmem_to_hbm [thread:$0]  %s106, 128, %s1, [#allocation4]
        $region32: #{tpu_custom_call.1} parent=23 // pred_fallthru
          _
        // Predicated region
        $region33: #{tpu_custom_call.1} parent=23 // pred_check
          %p109 = pneg %p48
        $region34: #{tpu_custom_call.1} parent=23 // pred_check_branch
          %111 = sbr.rel (%p109) target = $region36
        $region35: #{tpu_custom_call.1} parent=23 // pred_region
          %112 = dma.done [#allocation4], 128
        $region36: #{tpu_custom_call.1} parent=23 // pred_fallthru
          _
      $region24: #{tpu_custom_call.1} parent=5 // pred_fallthru
        _
      %p113 = scmp.le.s32.totalorder 2, %s9
      // Predicated region
      $region37: #{tpu_custom_call.1} parent=5 // pred_check
        %p114 = pneg %p113
      $region38: #{tpu_custom_call.1} parent=5 // pred_check_branch
        %116 = sbr.rel (%p114) target = $region40
      $region39: #{tpu_custom_call.1} parent=5 // pred_region
        %s117 = ssub.s32 %s9, 2
      $region40: #{tpu_custom_call.1} parent=5 // pred_fallthru
        _
    $region6: #{tpu_custom_call.1} parent=1 // loop_footer
      %s13 = sadd.s32 1, %s9
    $region7: #{tpu_custom_call.1} parent=1 // loop_footer_branch
      %8 = sbr.rel target = $region3
    $region8: #{tpu_custom_call.1} parent=1 // loop_exit
      _
    %118 = vsyncpa [#allocation3], 1
    %s119 = scalar_lea.sflag [#allocation3], 1
    %120 = vsyncpa %s119, 1
    %121 = vsyncpa [#allocation4], 1
    %s122 = scalar_lea.sflag [#allocation4], 1
    %123 = vsyncpa %s122, 1

// kernel: training_decoder_forward.3
$region0: #{training_decoder_forward.3}
  #allocation0 [shape = 'u32[]', space=smem, size = 0x4, offset = 0x4, fixed_abs, tag = 'smem constant byte address 0x4 - core index']
  #allocation1 [shape = 'u32[144,128]{1,0:T(1,128)}', space=vmem, size = 0x12000, scoped, tag = 'internal scratch']
  %s0 = inlined_call_operand.vmem [shape: f32[64,128], index: 0, kind: input, shape index: {}]
  %s1 = inlined_call_operand.vmem [shape: f32[128,128], index: 1, kind: input, shape index: {}]
  %s2 = inlined_call_operand.vmem [shape: f32[1,128], index: 2, kind: input, shape index: {}]
  %s3 = inlined_call_operand.vmem [shape: f32[64,128], index: 3, kind: output, shape index: {}]
  %s4 = sld [smem:[#allocation0]]
  $region22: #{training_decoder_forward.3} parent=0
    _
  %s6 = ssub.s32 1, %s4
  %s7 = scalar_select 0, %s6, %s4
  // Predicated region
  $region2: #{training_decoder_forward.3} parent=0 // pred_check
    _
  $region3: #{training_decoder_forward.3} parent=0 // pred_check_branch
    %9 = sbr.rel (0) target = $region5
  $region4: #{training_decoder_forward.3} parent=0 // pred_region
    _
  $region5: #{training_decoder_forward.3} parent=0 // pred_fallthru
    _
  // Predicated region
  $region6: #{training_decoder_forward.3} parent=0 // pred_check
    _
  $region7: #{training_decoder_forward.3} parent=0 // pred_check_branch
    %11 = sbr.rel (0) target = $region9
  $region8: #{training_decoder_forward.3} parent=0 // pred_region
    _
  $region9: #{training_decoder_forward.3} parent=0 // pred_fallthru
    _
  // Predicated region
  $region10: #{training_decoder_forward.3} parent=0 // pred_check
    _
  $region11: #{training_decoder_forward.3} parent=0 // pred_check_branch
    %13 = sbr.rel (0) target = $region13
  $region12: #{training_decoder_forward.3} parent=0 // pred_region
    _
  $region13: #{training_decoder_forward.3} parent=0 // pred_fallthru
    _
  %v14 = vld [vmem:[%s0] sm:$0xff]
  %v15 = vld [vmem:[%s0 + $0x8] sm:$0xff]
  %v16 = vld [vmem:[%s0 + $0x10] sm:$0xff]
  %v17 = vld [vmem:[%s0 + $0x18] sm:$0xff]
  %v18 = vld [vmem:[%s0 + $0x20] sm:$0xff]
  %v19 = vld [vmem:[%s0 + $0x28] sm:$0xff]
  %v20 = vld [vmem:[%s0 + $0x30] sm:$0xff]
  %v21 = vld [vmem:[%s0 + $0x38] sm:$0xff]
  %v22 = vld [vmem:[%s1] sm:$0xff]
  %v23 = vld [vmem:[%s1 + $0x8] sm:$0xff]
  %v24 = vld [vmem:[%s1 + $0x10] sm:$0xff]
  %v25 = vld [vmem:[%s1 + $0x18] sm:$0xff]
  %v26 = vld [vmem:[%s1 + $0x20] sm:$0xff]
  %v27 = vld [vmem:[%s1 + $0x28] sm:$0xff]
  %v28 = vld [vmem:[%s1 + $0x30] sm:$0xff]
  %v29 = vld [vmem:[%s1 + $0x38] sm:$0xff]
  %v30 = vld [vmem:[%s1 + $0x40] sm:$0xff]
  %v31 = vld [vmem:[%s1 + $0x48] sm:$0xff]
  %v32 = vld [vmem:[%s1 + $0x50] sm:$0xff]
  %v33 = vld [vmem:[%s1 + $0x58] sm:$0xff]
  %v34 = vld [vmem:[%s1 + $0x60] sm:$0xff]
  %v35 = vld [vmem:[%s1 + $0x68] sm:$0xff]
  %v36 = vld [vmem:[%s1 + $0x70] sm:$0xff]
  %v37 = vld [vmem:[%s1 + $0x78] sm:$0xff]
  %v38 = vld [vmem:[%s2] sm:$0x1]
  %v40 = vlaneseq
  %v41 = vshrl.u32 %v40, 7
  %v42 = vsub.s32 0, %v41
  %v43 = vrot.slane %v38, %v42
  %45 = vmatprep.subr.mxu0 0.0
  %46 = vmatpush1.msra.mxu0 %v22
  %47 = vmatprep.subr.mxu0 0.0
  %48 = vmatpush1.msra.mxu0 %v23
  %49 = vmatprep.subr.mxu0 0.0
  %50 = vmatpush1.msra.mxu0 %v24
  %51 = vmatprep.subr.mxu0 0.0
  %52 = vmatpush1.msra.mxu0 %v25
  %53 = vmatprep.subr.mxu0 0.0
  %54 = vmatpush1.msra.mxu0 %v26
  %55 = vmatprep.subr.mxu0 0.0
  %56 = vmatpush1.msra.mxu0 %v27
  %57 = vmatprep.subr.mxu0 0.0
  %58 = vmatpush1.msra.mxu0 %v28
  %59 = vmatprep.subr.mxu0 0.0
  %60 = vmatpush1.msra.mxu0 %v29
  %61 = vmatprep.subr.mxu0 0.0
  %62 = vmatpush1.msra.mxu0 %v30
  %63 = vmatprep.subr.mxu0 0.0
  %64 = vmatpush1.msra.mxu0 %v31
  %65 = vmatprep.subr.mxu0 0.0
  %66 = vmatpush1.msra.mxu0 %v32
  %67 = vmatprep.subr.mxu0 0.0
  %68 = vmatpush1.msra.mxu0 %v33
  %69 = vmatprep.subr.mxu0 0.0
  %70 = vmatpush1.msra.mxu0 %v34
  %71 = vmatprep.subr.mxu0 0.0
  %72 = vmatpush1.msra.mxu0 %v35
  %73 = vmatprep.subr.mxu0 0.0
  %74 = vmatpush1.msra.mxu0 %v36
  %75 = vmatprep.subr.mxu0 0.0
  %76 = vmatpush1.msra.mxu0 %v37
  %77 = vmatprep.subr.mxu0 0.0
  %78 = vmatpush1.msra.mxu0 0.0
  %79 = vmatprep.subr.mxu0 0.0
  %80 = vmatpush1.msra.mxu0 0.0
  %81 = vmatprep.subr.mxu0 0.0
  %82 = vmatpush1.msra.mxu0 0.0
  %83 = vmatprep.subr.mxu0 0.0
  %84 = vmatpush1.msra.mxu0 0.0
  %85 = vmatprep.subr.mxu0 0.0
  %86 = vmatpush1.msra.mxu0 0.0
  %87 = vmatprep.subr.mxu0 0.0
  %88 = vmatpush1.msra.mxu0 0.0
  %89 = vmatprep.subr.mxu0 0.0
  %90 = vmatpush1.msra.mxu0 0.0
  %91 = vmatprep.subr.mxu0 0.0
  %92 = vmatpush1.msra.mxu0 0.0
  %93 = vmatprep.subr.mxu0 0.0
  %94 = vmatpush1.msra.mxu0 0.0
  %95 = vmatprep.subr.mxu0 0.0
  %96 = vmatpush1.msra.mxu0 0.0
  %97 = vmatprep.subr.mxu0 0.0
  %98 = vmatpush1.msra.mxu0 0.0
  %99 = vmatprep.subr.mxu0 0.0
  %100 = vmatpush1.msra.mxu0 0.0
  %101 = vmatprep.subr.mxu0 0.0
  %102 = vmatpush1.msra.mxu0 0.0
  %103 = vmatprep.subr.mxu0 0.0
  %104 = vmatpush1.msra.mxu0 0.0
  %105 = vmatprep.subr.mxu0 0.0
  %106 = vmatpush1.msra.mxu0 0.0
  %107 = vmatprep.subr.mxu0 0.0
  %108 = vmatpush1.msra.mxu0 0.0
  %109 = vmatprep.mubr.f32.mxu0 0.0
  %110 = vmatmul.mubr.f32.gmra.mrb[0].mxu0 %v14
  %v111 = vpop.f32.mrb[0].mxu0
  %v112 = vadd.f32 %v43, %v111
  %v113 = vpop.f32.mrb[0].mxu0
  %114 = vmatprep.mubr.f32.mxu0 0.0
  %115 = vmatmul.mubr.f32.gmra.mrb[0].mxu0 %v15
  %v116 = vpop.f32.mrb[0].mxu0
  %v117 = vadd.f32 %v43, %v116
  %v118 = vpop.f32.mrb[0].mxu0
  %119 = vmatprep.mubr.f32.mxu0 0.0
  %120 = vmatmul.mubr.f32.gmra.mrb[0].mxu0 %v16
  %v121 = vpop.f32.mrb[0].mxu0
  %v122 = vadd.f32 %v43, %v121
  %v123 = vpop.f32.mrb[0].mxu0
  %124 = vmatprep.mubr.f32.mxu0 0.0
  %125 = vmatmul.mubr.f32.gmra.mrb[0].mxu0 %v17
  %v126 = vpop.f32.mrb[0].mxu0
  %v127 = vadd.f32 %v43, %v126
  %v128 = vpop.f32.mrb[0].mxu0
  %129 = vmatprep.mubr.f32.mxu0 0.0
  %130 = vmatmul.mubr.f32.gmra.mrb[0].mxu0 %v18
  %v131 = vpop.f32.mrb[0].mxu0
  %v132 = vadd.f32 %v43, %v131
  %v133 = vpop.f32.mrb[0].mxu0
  %134 = vmatprep.mubr.f32.mxu0 0.0
  %135 = vmatmul.mubr.f32.gmra.mrb[0].mxu0 %v19
  %v136 = vpop.f32.mrb[0].mxu0
  %v137 = vadd.f32 %v43, %v136
  %v138 = vpop.f32.mrb[0].mxu0
  %139 = vmatprep.mubr.f32.mxu0 0.0
  %140 = vmatmul.mubr.f32.gmra.mrb[0].mxu0 %v20
  %v141 = vpop.f32.mrb[0].mxu0
  %v142 = vadd.f32 %v43, %v141
  %v143 = vpop.f32.mrb[0].mxu0
  %144 = vmatprep.mubr.f32.mxu0 0.0
  %145 = vmatmul.mubr.f32.gmra.mrb[0].mxu0 %v21
  %v146 = vpop.f32.mrb[0].mxu0
  %v147 = vadd.f32 %v43, %v146
  %v148 = vpop.f32.mrb[0].mxu0
  %149 = vdwg.mxu0
  %150 = vst [vmem:[%s3] sm:$0xff] %v112
  %151 = vst [vmem:[%s3 + $0x8] sm:$0xff] %v117
  %152 = vst [vmem:[%s3 + $0x10] sm:$0xff] %v122
  %153 = vst [vmem:[%s3 + $0x18] sm:$0xff] %v127
  %154 = vst [vmem:[%s3 + $0x20] sm:$0xff] %v132
  %155 = vst [vmem:[%s3 + $0x28] sm:$0xff] %v137
  %156 = vst [vmem:[%s3 + $0x30] sm:$0xff] %v142
  %157 = vst [vmem:[%s3 + $0x38] sm:$0xff] %v147
  // Predicated region
  $region14: #{training_decoder_forward.3} parent=0 // pred_check
    _
  $region15: #{training_decoder_forward.3} parent=0 // pred_check_branch
    %159 = sbr.rel (0) target = $region17
  $region16: #{training_decoder_forward.3} parent=0 // pred_region
    _
  $region17: #{training_decoder_forward.3} parent=0 // pred_fallthru
    _
  // Predicated region
  $region18: #{training_decoder_forward.3} parent=0 // pred_check
    _
  $region19: #{training_decoder_forward.3} parent=0 // pred_check_branch
    %161 = sbr.rel (0) target = $region21
  $region20: #{training_decoder_forward.3} parent=0 // pred_region
    _
  $region21: #{training_decoder_forward.3} parent=0 // pred_fallthru
    _

// kernel: training_decoder_forward.2
$region0: #{training_decoder_forward.2}
  #allocation0 [shape = 'u32[]', space=smem, size = 0x4, offset = 0x4, fixed_abs, tag = 'smem constant byte address 0x4 - core index']
  #allocation1 [shape = 'u32[144,128]{1,0:T(1,128)}', space=vmem, size = 0x12000, scoped, tag = 'internal scratch']
  #allocation2 [shape = 'f32[8,128]{1,0:T(8,128)}', space=vmem, size = 0x1000, scoped, tag = 'scratch operand']
  %s0 = inlined_call_operand.vmem [shape: f32[8,8,128], index: 0, kind: input, shape index: {}]
  %s1 = inlined_call_operand.vmem [shape: f32[8,128], index: 1, kind: input, shape index: {}]
  %s2 = inlined_call_operand.vmem [shape: f32[128,384], index: 2, kind: input, shape index: {}]
  %s3 = inlined_call_operand.vmem [shape: f32[128,384], index: 3, kind: input, shape index: {}]
  %s4 = inlined_call_operand.vmem [shape: f32[1,384], index: 4, kind: input, shape index: {}]
  %s5 = inlined_call_operand.vmem [shape: f32[1,128], index: 5, kind: input, shape index: {}]
  %s6 = inlined_call_operand.vmem [shape: f32[8,8,128], index: 6, kind: output, shape index: {}]
  %s7 = sld [smem:[#allocation0]]
  $region38: #{training_decoder_forward.2} parent=0
    _
  %s9 = ssub.s32 1, %s7
  %s10 = scalar_select 0, %s9, %s7
  // Predicated region
  $region2: #{training_decoder_forward.2} parent=0 // pred_check
    _
  $region3: #{training_decoder_forward.2} parent=0 // pred_check_branch
    %12 = sbr.rel (0) target = $region5
  $region4: #{training_decoder_forward.2} parent=0 // pred_region
    _
  $region5: #{training_decoder_forward.2} parent=0 // pred_fallthru
    _
  // Predicated region
  $region6: #{training_decoder_forward.2} parent=0 // pred_check
    _
  $region7: #{training_decoder_forward.2} parent=0 // pred_check_branch
    %14 = sbr.rel (0) target = $region9
  $region8: #{training_decoder_forward.2} parent=0 // pred_region
    _
  $region9: #{training_decoder_forward.2} parent=0 // pred_fallthru
    _
  // Predicated region
  $region10: #{training_decoder_forward.2} parent=0 // pred_check
    _
  $region11: #{training_decoder_forward.2} parent=0 // pred_check_branch
    %16 = sbr.rel (0) target = $region13
  $region12: #{training_decoder_forward.2} parent=0 // pred_region
    _
  $region13: #{training_decoder_forward.2} parent=0 // pred_fallthru
    _
  // Predicated region
  $region14: #{training_decoder_forward.2} parent=0 // pred_check
    _
  $region15: #{training_decoder_forward.2} parent=0 // pred_check_branch
    %18 = sbr.rel (0) target = $region17
  $region16: #{training_decoder_forward.2} parent=0 // pred_region
    _
  $region17: #{training_decoder_forward.2} parent=0 // pred_fallthru
    _
  // Predicated region
  $region18: #{training_decoder_forward.2} parent=0 // pred_check
    _
  $region19: #{training_decoder_forward.2} parent=0 // pred_check_branch
    %20 = sbr.rel (0) target = $region21
  $region20: #{training_decoder_forward.2} parent=0 // pred_region
    _
  $region21: #{training_decoder_forward.2} parent=0 // pred_fallthru
    _
  // Predicated region
  $region22: #{training_decoder_forward.2} parent=0 // pred_check
    _
  $region23: #{training_decoder_forward.2} parent=0 // pred_check_branch
    %22 = sbr.rel (0) target = $region25
  $region24: #{training_decoder_forward.2} parent=0 // pred_region
    _
  $region25: #{training_decoder_forward.2} parent=0 // pred_fallthru
    _
  %p23 = scmp.eq.s32.totalorder 0, 0
  // Predicated region
  $region26: #{training_decoder_forward.2} parent=0 // pred_check
    %p24 = pneg %p23
  $region27: #{training_decoder_forward.2} parent=0 // pred_check_branch
    %26 = sbr.rel (%p24) target = $region29
  $region28: #{training_decoder_forward.2} parent=0 // pred_region
    %v27 = vld [vmem:[%s1] sm:$0xff]
    %28 = vst [vmem:[#allocation2] sm:$0xff] %v27
  $region29: #{training_decoder_forward.2} parent=0 // pred_fallthru
    _
  %v29 = vld [vmem:[%s0] sm:$0xff]
  %v30 = vld [vmem:[%s0 + $0x8] sm:$0xff]
  %v31 = vld [vmem:[%s0 + $0x10] sm:$0xff]
  %v32 = vld [vmem:[%s0 + $0x18] sm:$0xff]
  %v33 = vld [vmem:[%s0 + $0x20] sm:$0xff]
  %v34 = vld [vmem:[%s0 + $0x28] sm:$0xff]
  %v35 = vld [vmem:[%s0 + $0x30] sm:$0xff]
  %v36 = vld [vmem:[%s0 + $0x38] sm:$0xff]
  %v37 = vld [vmem:[%s2] sm:$0xff]
  %v38 = vld [vmem:[%s2 + $0x8] sm:$0xff]
  %v39 = vld [vmem:[%s2 + $0x10] sm:$0xff]
  %v40 = vld [vmem:[%s2 + $0x18] sm:$0xff]
  %v41 = vld [vmem:[%s2 + $0x20] sm:$0xff]
  %v42 = vld [vmem:[%s2 + $0x28] sm:$0xff]
  %v43 = vld [vmem:[%s2 + $0x30] sm:$0xff]
  %v44 = vld [vmem:[%s2 + $0x38] sm:$0xff]
  %v45 = vld [vmem:[%s2 + $0x40] sm:$0xff]
  %v46 = vld [vmem:[%s2 + $0x48] sm:$0xff]
  %v47 = vld [vmem:[%s2 + $0x50] sm:$0xff]
  %v48 = vld [vmem:[%s2 + $0x58] sm:$0xff]
  %v49 = vld [vmem:[%s2 + $0x60] sm:$0xff]
  %v50 = vld [vmem:[%s2 + $0x68] sm:$0xff]
  %v51 = vld [vmem:[%s2 + $0x70] sm:$0xff]
  %v52 = vld [vmem:[%s2 + $0x78] sm:$0xff]
  %v53 = vld [vmem:[%s2 + $0x80] sm:$0xff]
  %v54 = vld [vmem:[%s2 + $0x88] sm:$0xff]
  %v55 = vld [vmem:[%s2 + $0x90] sm:$0xff]
  %v56 = vld [vmem:[%s2 + $0x98] sm:$0xff]
  %v57 = vld [vmem:[%s2 + $0xa0] sm:$0xff]
  %v58 = vld [vmem:[%s2 + $0xa8] sm:$0xff]
  %v59 = vld [vmem:[%s2 + $0xb0] sm:$0xff]
  %v60 = vld [vmem:[%s2 + $0xb8] sm:$0xff]
  %v61 = vld [vmem:[%s2 + $0xc0] sm:$0xff]
  %v62 = vld [vmem:[%s2 + $0xc8] sm:$0xff]
  %v63 = vld [vmem:[%s2 + $0xd0] sm:$0xff]
  %v64 = vld [vmem:[%s2 + $0xd8] sm:$0xff]
  %v65 = vld [vmem:[%s2 + $0xe0] sm:$0xff]
  %v66 = vld [vmem:[%s2 + $0xe8] sm:$0xff]
  %v67 = vld [vmem:[%s2 + $0xf0] sm:$0xff]
  %v68 = vld [vmem:[%s2 + $0xf8] sm:$0xff]
  %v69 = vld [vmem:[%s2 + $0x100] sm:$0xff]
  %v70 = vld [vmem:[%s2 + $0x108] sm:$0xff]
  %v71 = vld [vmem:[%s2 + $0x110] sm:$0xff]
  %v72 = vld [vmem:[%s2 + $0x118] sm:$0xff]
  %v73 = vld [vmem:[%s2 + $0x120] sm:$0xff]
  %v74 = vld [vmem:[%s2 + $0x128] sm:$0xff]
  %v75 = vld [vmem:[%s2 + $0x130] sm:$0xff]
  %v76 = vld [vmem:[%s2 + $0x138] sm:$0xff]
  %v77 = vld [vmem:[%s2 + $0x140] sm:$0xff]
  %v78 = vld [vmem:[%s2 + $0x148] sm:$0xff]
  %v79 = vld [vmem:[%s2 + $0x150] sm:$0xff]
  %v80 = vld [vmem:[%s2 + $0x158] sm:$0xff]
  %v81 = vld [vmem:[%s2 + $0x160] sm:$0xff]
  %v82 = vld [vmem:[%s2 + $0x168] sm:$0xff]
  %v83 = vld [vmem:[%s2 + $0x170] sm:$0xff]
  %v84 = vld [vmem:[%s2 + $0x178] sm:$0xff]
  %v85 = vld [vmem:[%s4] sm:$0x7]
  %v87 = vlaneseq
  %v88 = vshrl.u32 %v87, 7
  %v89 = vsub.s32 0, %v88
  %v90 = vrot.slane %v85, %v89
  %v91 = vlaneseq
  %v92 = vshrl.u32 %v91, 7
  %v93 = vsub.s32 1, %v92
  %v94 = vrot.slane %v85, %v93
  %v95 = vlaneseq
  %v96 = vshrl.u32 %v95, 7
  %v97 = vsub.s32 2, %v96
  %v98 = vrot.slane %v85, %v97
  %102 = vmatprep.subr.mxu0 %v38
  %103 = vmatpush1.msra.mxu0 %v37
  %104 = vmatprep.subr.mxu0 %v41
  %105 = vmatpush1.msra.mxu0 %v40
  %106 = vmatprep.subr.mxu0 %v44
  %107 = vmatpush1.msra.mxu0 %v43
  %108 = vmatprep.subr.mxu0 %v47
  %109 = vmatpush1.msra.mxu0 %v46
  %110 = vmatprep.subr.mxu0 %v50
  %111 = vmatpush1.msra.mxu0 %v49
  %112 = vmatprep.subr.mxu0 %v53
  %113 = vmatpush1.msra.mxu0 %v52
  %114 = vmatprep.subr.mxu0 %v56
  %115 = vmatpush1.msra.mxu0 %v55
  %116 = vmatprep.subr.mxu0 %v59
  %117 = vmatpush1.msra.mxu0 %v58
  %118 = vmatprep.subr.mxu0 %v62
  %119 = vmatpush1.msra.mxu0 %v61
  %120 = vmatprep.subr.mxu0 %v65
  %121 = vmatpush1.msra.mxu0 %v64
  %122 = vmatprep.subr.mxu0 %v68
  %123 = vmatpush1.msra.mxu0 %v67
  %124 = vmatprep.subr.mxu0 %v71
  %125 = vmatpush1.msra.mxu0 %v70
  %126 = vmatprep.subr.mxu0 %v74
  %127 = vmatpush1.msra.mxu0 %v73
  %128 = vmatprep.subr.mxu0 %v77
  %129 = vmatpush1.msra.mxu0 %v76
  %130 = vmatprep.subr.mxu0 %v80
  %131 = vmatpush1.msra.mxu0 %v79
  %132 = vmatprep.subr.mxu0 %v83
  %133 = vmatpush1.msra.mxu0 %v82
  %134 = vmatprep.subr.mxu0 0.0
  %135 = vmatpush1.msra.mxu0 0.0
  %136 = vmatprep.subr.mxu0 0.0
  %137 = vmatpush1.msra.mxu0 0.0
  %138 = vmatprep.subr.mxu0 0.0
  %139 = vmatpush1.msra.mxu0 0.0
  %140 = vmatprep.subr.mxu0 0.0
  %141 = vmatpush1.msra.mxu0 0.0
  %142 = vmatprep.subr.mxu0 0.0
  %143 = vmatpush1.msra.mxu0 0.0
  %144 = vmatprep.subr.mxu0 0.0
  %145 = vmatpush1.msra.mxu0 0.0
  %146 = vmatprep.subr.mxu0 0.0
  %147 = vmatpush1.msra.mxu0 0.0
  %148 = vmatprep.subr.mxu0 0.0
  %149 = vmatpush1.msra.mxu0 0.0
  %150 = vmatprep.subr.mxu0 0.0
  %151 = vmatpush1.msra.mxu0 0.0
  %152 = vmatprep.subr.mxu0 0.0
  %153 = vmatpush1.msra.mxu0 0.0
  %154 = vmatprep.subr.mxu0 0.0
  %155 = vmatpush1.msra.mxu0 0.0
  %156 = vmatprep.subr.mxu0 0.0
  %157 = vmatpush1.msra.mxu0 0.0
  %158 = vmatprep.subr.mxu0 0.0
  %159 = vmatpush1.msra.mxu0 0.0
  %160 = vmatprep.subr.mxu0 0.0
  %161 = vmatpush1.msra.mxu0 0.0
  %162 = vmatprep.subr.mxu0 0.0
  %163 = vmatpush1.msra.mxu0 0.0
  %164 = vmatprep.subr.mxu0 0.0
  %165 = vmatpush1.msra.mxu0 0.0
  %166 = vmatprep.mubr.f32.mxu0 0.0
  %167 = vmatmul.mubr.f32.gmra.mrb[0].mxu0 %v29
  %v168 = vpop.f32.mrb[0].mxu0
  %v169 = vadd.f32 %v90, %v168
  %v170 = vpop.f32.mrb[0].mxu0
  %v171 = vadd.f32 %v94, %v170
  %172 = vmatprep.mubr.f32.mxu0 0.0
  %173 = vmatmul.mubr.f32.gmra.mrb[0].mxu0 %v30
  %v174 = vpop.f32.mrb[0].mxu0
  %v175 = vadd.f32 %v90, %v174
  %v176 = vpop.f32.mrb[0].mxu0
  %v177 = vadd.f32 %v94, %v176
  %178 = vmatprep.mubr.f32.mxu0 0.0
  %179 = vmatmul.mubr.f32.gmra.mrb[0].mxu0 %v31
  %v180 = vpop.f32.mrb[0].mxu0
  %v181 = vadd.f32 %v90, %v180
  %v182 = vpop.f32.mrb[0].mxu0
  %v183 = vadd.f32 %v94, %v182
  %184 = vmatprep.mubr.f32.mxu0 0.0
  %185 = vmatmul.mubr.f32.gmra.mrb[0].mxu0 %v32
  %v186 = vpop.f32.mrb[0].mxu0
  %v187 = vadd.f32 %v90, %v186
  %v188 = vpop.f32.mrb[0].mxu0
  %v189 = vadd.f32 %v94, %v188
  %190 = vmatprep.mubr.f32.mxu0 0.0
  %191 = vmatmul.mubr.f32.gmra.mrb[0].mxu0 %v33
  %v192 = vpop.f32.mrb[0].mxu0
  %v193 = vadd.f32 %v90, %v192
  %v194 = vpop.f32.mrb[0].mxu0
  %v195 = vadd.f32 %v94, %v194
  %196 = vmatprep.mubr.f32.mxu0 0.0
  %197 = vmatmul.mubr.f32.gmra.mrb[0].mxu0 %v34
  %v198 = vpop.f32.mrb[0].mxu0
  %v199 = vadd.f32 %v90, %v198
  %v200 = vpop.f32.mrb[0].mxu0
  %v201 = vadd.f32 %v94, %v200
  %202 = vmatprep.mubr.f32.mxu0 0.0
  %203 = vmatmul.mubr.f32.gmra.mrb[0].mxu0 %v35
  %v204 = vpop.f32.mrb[0].mxu0
  %v205 = vadd.f32 %v90, %v204
  %v206 = vpop.f32.mrb[0].mxu0
  %v207 = vadd.f32 %v94, %v206
  %208 = vmatprep.mubr.f32.mxu0 0.0
  %209 = vmatmul.mubr.f32.gmra.mrb[0].mxu0 %v36
  %v210 = vpop.f32.mrb[0].mxu0
  %v211 = vadd.f32 %v90, %v210
  %v212 = vpop.f32.mrb[0].mxu0
  %v213 = vadd.f32 %v94, %v212
  %214 = vdwg.mxu0
  %215 = vmatprep.subr.mxu0 0.0
  %216 = vmatpush1.msra.mxu0 %v39
  %217 = vmatprep.subr.mxu0 0.0
  %218 = vmatpush1.msra.mxu0 %v42
  %219 = vmatprep.subr.mxu0 0.0
  %220 = vmatpush1.msra.mxu0 %v45
  %221 = vmatprep.subr.mxu0 0.0
  %222 = vmatpush1.msra.mxu0 %v48
  %223 = vmatprep.subr.mxu0 0.0
  %224 = vmatpush1.msra.mxu0 %v51
  %225 = vmatprep.subr.mxu0 0.0
  %226 = vmatpush1.msra.mxu0 %v54
  %227 = vmatprep.subr.mxu0 0.0
  %228 = vmatpush1.msra.mxu0 %v57
  %229 = vmatprep.subr.mxu0 0.0
  %230 = vmatpush1.msra.mxu0 %v60
  %231 = vmatprep.subr.mxu0 0.0
  %232 = vmatpush1.msra.mxu0 %v63
  %233 = vmatprep.subr.mxu0 0.0
  %234 = vmatpush1.msra.mxu0 %v66
  %235 = vmatprep.subr.mxu0 0.0
  %236 = vmatpush1.msra.mxu0 %v69
  %237 = vmatprep.subr.mxu0 0.0
  %238 = vmatpush1.msra.mxu0 %v72
  %239 = vmatprep.subr.mxu0 0.0
  %240 = vmatpush1.msra.mxu0 %v75
  %241 = vmatprep.subr.mxu0 0.0
  %242 = vmatpush1.msra.mxu0 %v78
  %243 = vmatprep.subr.mxu0 0.0
  %244 = vmatpush1.msra.mxu0 %v81
  %245 = vmatprep.subr.mxu0 0.0
  %246 = vmatpush1.msra.mxu0 %v84
  %247 = vmatprep.subr.mxu0 0.0
  %248 = vmatpush1.msra.mxu0 0.0
  %249 = vmatprep.subr.mxu0 0.0
  %250 = vmatpush1.msra.mxu0 0.0
  %251 = vmatprep.subr.mxu0 0.0
  %252 = vmatpush1.msra.mxu0 0.0
  %253 = vmatprep.subr.mxu0 0.0
  %254 = vmatpush1.msra.mxu0 0.0
  %255 = vmatprep.subr.mxu0 0.0
  %256 = vmatpush1.msra.mxu0 0.0
  %257 = vmatprep.subr.mxu0 0.0
  %258 = vmatpush1.msra.mxu0 0.0
  %259 = vmatprep.subr.mxu0 0.0
  %260 = vmatpush1.msra.mxu0 0.0
  %261 = vmatprep.subr.mxu0 0.0
  %262 = vmatpush1.msra.mxu0 0.0
  %263 = vmatprep.subr.mxu0 0.0
  %264 = vmatpush1.msra.mxu0 0.0
  %265 = vmatprep.subr.mxu0 0.0
  %266 = vmatpush1.msra.mxu0 0.0
  %267 = vmatprep.subr.mxu0 0.0
  %268 = vmatpush1.msra.mxu0 0.0
  %269 = vmatprep.subr.mxu0 0.0
  %270 = vmatpush1.msra.mxu0 0.0
  %271 = vmatprep.subr.mxu0 0.0
  %272 = vmatpush1.msra.mxu0 0.0
  %273 = vmatprep.subr.mxu0 0.0
  %274 = vmatpush1.msra.mxu0 0.0
  %275 = vmatprep.subr.mxu0 0.0
  %276 = vmatpush1.msra.mxu0 0.0
  %277 = vmatprep.subr.mxu0 0.0
  %278 = vmatpush1.msra.mxu0 0.0
  %279 = vmatprep.mubr.f32.mxu0 0.0
  %280 = vmatmul.mubr.f32.gmra.mrb[0].mxu0 %v29
  %v281 = vpop.f32.mrb[0].mxu0
  %v282 = vadd.f32 %v98, %v281
  %v283 = vpop.f32.mrb[0].mxu0
  %284 = vmatprep.mubr.f32.mxu0 0.0
  %285 = vmatmul.mubr.f32.gmra.mrb[0].mxu0 %v30
  %v286 = vpop.f32.mrb[0].mxu0
  %v287 = vadd.f32 %v98, %v286
  %v288 = vpop.f32.mrb[0].mxu0
  %289 = vmatprep.mubr.f32.mxu0 0.0
  %290 = vmatmul.mubr.f32.gmra.mrb[0].mxu0 %v31
  %v291 = vpop.f32.mrb[0].mxu0
  %v292 = vadd.f32 %v98, %v291
  %v293 = vpop.f32.mrb[0].mxu0
  %294 = vmatprep.mubr.f32.mxu0 0.0
  %295 = vmatmul.mubr.f32.gmra.mrb[0].mxu0 %v32
  %v296 = vpop.f32.mrb[0].mxu0
  %v297 = vadd.f32 %v98, %v296
  %v298 = vpop.f32.mrb[0].mxu0
  %299 = vmatprep.mubr.f32.mxu0 0.0
  %300 = vmatmul.mubr.f32.gmra.mrb[0].mxu0 %v33
  %v301 = vpop.f32.mrb[0].mxu0
  %v302 = vadd.f32 %v98, %v301
  %v303 = vpop.f32.mrb[0].mxu0
  %304 = vmatprep.mubr.f32.mxu0 0.0
  %305 = vmatmul.mubr.f32.gmra.mrb[0].mxu0 %v34
  %v306 = vpop.f32.mrb[0].mxu0
  %v307 = vadd.f32 %v98, %v306
  %v308 = vpop.f32.mrb[0].mxu0
  %309 = vmatprep.mubr.f32.mxu0 0.0
  %310 = vmatmul.mubr.f32.gmra.mrb[0].mxu0 %v35
  %v311 = vpop.f32.mrb[0].mxu0
  %v312 = vadd.f32 %v98, %v311
  %v313 = vpop.f32.mrb[0].mxu0
  %314 = vmatprep.mubr.f32.mxu0 0.0
  %315 = vmatmul.mubr.f32.gmra.mrb[0].mxu0 %v36
  %v316 = vpop.f32.mrb[0].mxu0
  %v317 = vadd.f32 %v98, %v316
  %v318 = vpop.f32.mrb[0].mxu0
  %319 = vdwg.mxu0
  %v320 = vld [vmem:[%s3] sm:$0xff]
  %v321 = vld [vmem:[%s3 + $0x8] sm:$0xff]
  %v322 = vld [vmem:[%s3 + $0x10] sm:$0xff]
  %v323 = vld [vmem:[%s3 + $0x18] sm:$0xff]
  %v324 = vld [vmem:[%s3 + $0x20] sm:$0xff]
  %v325 = vld [vmem:[%s3 + $0x28] sm:$0xff]
  %v326 = vld [vmem:[%s3 + $0x30] sm:$0xff]
  %v327 = vld [vmem:[%s3 + $0x38] sm:$0xff]
  %v328 = vld [vmem:[%s3 + $0x40] sm:$0xff]
  %v329 = vld [vmem:[%s3 + $0x48] sm:$0xff]
  %v330 = vld [vmem:[%s3 + $0x50] sm:$0xff]
  %v331 = vld [vmem:[%s3 + $0x58] sm:$0xff]
  %v332 = vld [vmem:[%s3 + $0x60] sm:$0xff]
  %v333 = vld [vmem:[%s3 + $0x68] sm:$0xff]
  %v334 = vld [vmem:[%s3 + $0x70] sm:$0xff]
  %v335 = vld [vmem:[%s3 + $0x78] sm:$0xff]
  %v336 = vld [vmem:[%s3 + $0x80] sm:$0xff]
  %v337 = vld [vmem:[%s3 + $0x88] sm:$0xff]
  %v338 = vld [vmem:[%s3 + $0x90] sm:$0xff]
  %v339 = vld [vmem:[%s3 + $0x98] sm:$0xff]
  %v340 = vld [vmem:[%s3 + $0xa0] sm:$0xff]
  %v341 = vld [vmem:[%s3 + $0xa8] sm:$0xff]
  %v342 = vld [vmem:[%s3 + $0xb0] sm:$0xff]
  %v343 = vld [vmem:[%s3 + $0xb8] sm:$0xff]
  %v344 = vld [vmem:[%s3 + $0xc0] sm:$0xff]
  %v345 = vld [vmem:[%s3 + $0xc8] sm:$0xff]
  %v346 = vld [vmem:[%s3 + $0xd0] sm:$0xff]
  %v347 = vld [vmem:[%s3 + $0xd8] sm:$0xff]
  %v348 = vld [vmem:[%s3 + $0xe0] sm:$0xff]
  %v349 = vld [vmem:[%s3 + $0xe8] sm:$0xff]
  %v350 = vld [vmem:[%s3 + $0xf0] sm:$0xff]
  %v351 = vld [vmem:[%s3 + $0xf8] sm:$0xff]
  %v352 = vld [vmem:[%s3 + $0x100] sm:$0xff]
  %v353 = vld [vmem:[%s3 + $0x108] sm:$0xff]
  %v354 = vld [vmem:[%s3 + $0x110] sm:$0xff]
  %v355 = vld [vmem:[%s3 + $0x118] sm:$0xff]
  %v356 = vld [vmem:[%s3 + $0x120] sm:$0xff]
  %v357 = vld [vmem:[%s3 + $0x128] sm:$0xff]
  %v358 = vld [vmem:[%s3 + $0x130] sm:$0xff]
  %v359 = vld [vmem:[%s3 + $0x138] sm:$0xff]
  %v360 = vld [vmem:[%s3 + $0x140] sm:$0xff]
  %v361 = vld [vmem:[%s3 + $0x148] sm:$0xff]
  %v362 = vld [vmem:[%s3 + $0x150] sm:$0xff]
  %v363 = vld [vmem:[%s3 + $0x158] sm:$0xff]
  %v364 = vld [vmem:[%s3 + $0x160] sm:$0xff]
  %v365 = vld [vmem:[%s3 + $0x168] sm:$0xff]
  %v366 = vld [vmem:[%s3 + $0x170] sm:$0xff]
  %v367 = vld [vmem:[%s3 + $0x178] sm:$0xff]
  %v368 = vld [vmem:[%s5] sm:$0x1]
  %v370 = vlaneseq
  %v371 = vshrl.u32 %v370, 7
  %v372 = vsub.s32 0, %v371
  %v373 = vrot.slane %v368, %v372
  %v375 = vld [vmem:[#allocation2] sm:$0xff]
  %376 = vmatprep.subr.mxu0 %v321
  %377 = vmatpush1.msra.mxu0 %v320
  %378 = vmatprep.subr.mxu0 %v324
  %379 = vmatpush1.msra.mxu0 %v323
  %380 = vmatprep.subr.mxu0 %v327
  %381 = vmatpush1.msra.mxu0 %v326
  %382 = vmatprep.subr.mxu0 %v330
  %383 = vmatpush1.msra.mxu0 %v329
  %384 = vmatprep.subr.mxu0 %v333
  %385 = vmatpush1.msra.mxu0 %v332
  %386 = vmatprep.subr.mxu0 %v336
  %387 = vmatpush1.msra.mxu0 %v335
  %388 = vmatprep.subr.mxu0 %v339
  %389 = vmatpush1.msra.mxu0 %v338
  %390 = vmatprep.subr.mxu0 %v342
  %391 = vmatpush1.msra.mxu0 %v341
  %392 = vmatprep.subr.mxu0 %v345
  %393 = vmatpush1.msra.mxu0 %v344
  %394 = vmatprep.subr.mxu0 %v348
  %395 = vmatpush1.msra.mxu0 %v347
  %396 = vmatprep.subr.mxu0 %v351
  %397 = vmatpush1.msra.mxu0 %v350
  %398 = vmatprep.subr.mxu0 %v354
  %399 = vmatpush1.msra.mxu0 %v353
  %400 = vmatprep.subr.mxu0 %v357
  %401 = vmatpush1.msra.mxu0 %v356
  %402 = vmatprep.subr.mxu0 %v360
  %403 = vmatpush1.msra.mxu0 %v359
  %404 = vmatprep.subr.mxu0 %v363
  %405 = vmatpush1.msra.mxu0 %v362
  %406 = vmatprep.subr.mxu0 %v366
  %407 = vmatpush1.msra.mxu0 %v365
  %408 = vmatprep.subr.mxu0 0.0
  %409 = vmatpush1.msra.mxu0 0.0
  %410 = vmatprep.subr.mxu0 0.0
  %411 = vmatpush1.msra.mxu0 0.0
  %412 = vmatprep.subr.mxu0 0.0
  %413 = vmatpush1.msra.mxu0 0.0
  %414 = vmatprep.subr.mxu0 0.0
  %415 = vmatpush1.msra.mxu0 0.0
  %416 = vmatprep.subr.mxu0 0.0
  %417 = vmatpush1.msra.mxu0 0.0
  %418 = vmatprep.subr.mxu0 0.0
  %419 = vmatpush1.msra.mxu0 0.0
  %420 = vmatprep.subr.mxu0 0.0
  %421 = vmatpush1.msra.mxu0 0.0
  %422 = vmatprep.subr.mxu0 0.0
  %423 = vmatpush1.msra.mxu0 0.0
  %424 = vmatprep.subr.mxu0 0.0
  %425 = vmatpush1.msra.mxu0 0.0
  %426 = vmatprep.subr.mxu0 0.0
  %427 = vmatpush1.msra.mxu0 0.0
  %428 = vmatprep.subr.mxu0 0.0
  %429 = vmatpush1.msra.mxu0 0.0
  %430 = vmatprep.subr.mxu0 0.0
  %431 = vmatpush1.msra.mxu0 0.0
  %432 = vmatprep.subr.mxu0 0.0
  %433 = vmatpush1.msra.mxu0 0.0
  %434 = vmatprep.subr.mxu0 0.0
  %435 = vmatpush1.msra.mxu0 0.0
  %436 = vmatprep.subr.mxu0 0.0
  %437 = vmatpush1.msra.mxu0 0.0
  %438 = vmatprep.subr.mxu0 0.0
  %439 = vmatpush1.msra.mxu0 0.0
  %440 = vmatprep.mubr.f32.mxu0 0.0
  %441 = vmatmul.mubr.f32.gmra.mrb[0].mxu0 %v375
  %v442 = vpop.f32.mrb[0].mxu0
  %v443 = vadd.f32 0.0, %v442
  %v444 = vpop.f32.mrb[0].mxu0
  %v445 = vadd.f32 0.0, %v444
  %446 = vdwg.mxu0
  %447 = vmatprep.subr.mxu0 0.0
  %448 = vmatpush1.msra.mxu0 %v322
  %449 = vmatprep.subr.mxu0 0.0
  %450 = vmatpush1.msra.mxu0 %v325
  %451 = vmatprep.subr.mxu0 0.0
  %452 = vmatpush1.msra.mxu0 %v328
  %453 = vmatprep.subr.mxu0 0.0
  %454 = vmatpush1.msra.mxu0 %v331
  %455 = vmatprep.subr.mxu0 0.0
  %456 = vmatpush1.msra.mxu0 %v334
  %457 = vmatprep.subr.mxu0 0.0
  %458 = vmatpush1.msra.mxu0 %v337
  %459 = vmatprep.subr.mxu0 0.0
  %460 = vmatpush1.msra.mxu0 %v340
  %461 = vmatprep.subr.mxu0 0.0
  %462 = vmatpush1.msra.mxu0 %v343
  %463 = vmatprep.subr.mxu0 0.0
  %464 = vmatpush1.msra.mxu0 %v346
  %465 = vmatprep.subr.mxu0 0.0
  %466 = vmatpush1.msra.mxu0 %v349
  %467 = vmatprep.subr.mxu0 0.0
  %468 = vmatpush1.msra.mxu0 %v352
  %469 = vmatprep.subr.mxu0 0.0
  %470 = vmatpush1.msra.mxu0 %v355
  %471 = vmatprep.subr.mxu0 0.0
  %472 = vmatpush1.msra.mxu0 %v358
  %473 = vmatprep.subr.mxu0 0.0
  %474 = vmatpush1.msra.mxu0 %v361
  %475 = vmatprep.subr.mxu0 0.0
  %476 = vmatpush1.msra.mxu0 %v364
  %477 = vmatprep.subr.mxu0 0.0
  %478 = vmatpush1.msra.mxu0 %v367
  %479 = vmatprep.subr.mxu0 0.0
  %480 = vmatpush1.msra.mxu0 0.0
  %481 = vmatprep.subr.mxu0 0.0
  %482 = vmatpush1.msra.mxu0 0.0
  %483 = vmatprep.subr.mxu0 0.0
  %484 = vmatpush1.msra.mxu0 0.0
  %485 = vmatprep.subr.mxu0 0.0
  %486 = vmatpush1.msra.mxu0 0.0
  %487 = vmatprep.subr.mxu0 0.0
  %488 = vmatpush1.msra.mxu0 0.0
  %489 = vmatprep.subr.mxu0 0.0
  %490 = vmatpush1.msra.mxu0 0.0
  %491 = vmatprep.subr.mxu0 0.0
  %492 = vmatpush1.msra.mxu0 0.0
  %493 = vmatprep.subr.mxu0 0.0
  %494 = vmatpush1.msra.mxu0 0.0
  %495 = vmatprep.subr.mxu0 0.0
  %496 = vmatpush1.msra.mxu0 0.0
  %497 = vmatprep.subr.mxu0 0.0
  %498 = vmatpush1.msra.mxu0 0.0
  %499 = vmatprep.subr.mxu0 0.0
  %500 = vmatpush1.msra.mxu0 0.0
  %501 = vmatprep.subr.mxu0 0.0
  %502 = vmatpush1.msra.mxu0 0.0
  %503 = vmatprep.subr.mxu0 0.0
  %504 = vmatpush1.msra.mxu0 0.0
  %505 = vmatprep.subr.mxu0 0.0
  %506 = vmatpush1.msra.mxu0 0.0
  %507 = vmatprep.subr.mxu0 0.0
  %508 = vmatpush1.msra.mxu0 0.0
  %509 = vmatprep.subr.mxu0 0.0
  %510 = vmatpush1.msra.mxu0 0.0
  %511 = vmatprep.mubr.f32.mxu0 0.0
  %512 = vmatmul.mubr.f32.gmra.mrb[0].mxu0 %v375
  %v513 = vpop.f32.mrb[0].mxu0
  %v514 = vadd.f32 0.0, %v513
  %v515 = vpop.f32.mrb[0].mxu0
  %516 = vdwg.mxu0
  %v517 = vadd.f32 %v169, %v443
  %v518 = vxor.u32 %v517, 2147483648
  %v519 = vmul.f32 %v518, 1.442695
  %v520 = vpow.pop %v519
  %v521 = vadd.f32 %v520, 1.0
  %v522 = vrcp.pop %v521
  %v523 = vmul.f32 1.0, %v522
  %v524 = vadd.f32 %v171, %v445
  %v525 = vxor.u32 %v524, 2147483648
  %v526 = vmul.f32 %v525, 1.442695
  %v527 = vpow.pop %v526
  %v528 = vadd.f32 %v527, 1.0
  %v529 = vrcp.pop %v528
  %v530 = vmul.f32 1.0, %v529
  %v531 = vadd.f32 %v514, %v373
  %v532 = vmul.f32 %v523, %v531
  %v533 = vadd.f32 %v282, %v532
  %v534 = vtanh.pop %v533
  %v535 = vsub.f32 1.0, %v530
  %v536 = vmul.f32 %v535, %v534
  %v537 = vmul.f32 %v530, %v375
  %v538 = vadd.f32 %v536, %v537
  %v540 = vcombine.high %v538, %v538
  %v542 = vunpack.c.l.s4 1966171168
  %v543 = vunpack.c.0.s8 %v542
  %v544 = vlaneseq
  %v545 = vshrl.u32 %v544, 7
  %v546 = vsub.s32 %v543, %v545
  %v547 = vrot.slane %v538, %v546
  %v549 = vunpack.c.l.s4 1966171168
  %v550 = vunpack.c.0.s8 %v549
  %v551 = vlaneseq
  %v552 = vshrl.u32 %v551, 7
  %v553 = vsub.s32 %v550, %v552
  %v554 = vrot.slane %v540, %v553
  %v555 = vcombine.high %v547, %v547
  %v556 = vcombine.high %v554, %v554
  %v558 = vunpack.c.l.s4 1966171168
  %v559 = vunpack.c.0.s8 %v558
  %v560 = vlaneseq
  %v561 = vshrl.u32 %v560, 7
  %v562 = vsub.s32 %v559, %v561
  %v563 = vrot.slane %v547, %v562
  %v565 = vunpack.c.l.s4 1966171168
  %v566 = vunpack.c.0.s8 %v565
  %v567 = vlaneseq
  %v568 = vshrl.u32 %v567, 7
  %v569 = vsub.s32 %v566, %v568
  %v570 = vrot.slane %v554, %v569
  %v572 = vunpack.c.l.s4 1966171168
  %v573 = vunpack.c.0.s8 %v572
  %v574 = vlaneseq
  %v575 = vshrl.u32 %v574, 7
  %v576 = vsub.s32 %v573, %v575
  %v577 = vrot.slane %v555, %v576
  %v579 = vunpack.c.l.s4 1966171168
  %v580 = vunpack.c.0.s8 %v579
  %v581 = vlaneseq
  %v582 = vshrl.u32 %v581, 7
  %v583 = vsub.s32 %v580, %v582
  %v584 = vrot.slane %v556, %v583
  %v585 = vcombine.high %v563, %v563
  %v586 = vcombine.high %v570, %v570
  %v587 = vcombine.high %v577, %v577
  %v588 = vcombine.high %v584, %v584
  %597 = vst [vmem:[%s6] sm:$0x1] %v563
  %598 = vst [vmem:[%s6 + $0x8] sm:$0x1] %v577
  %599 = vst [vmem:[%s6 + $0x10] sm:$0x1] %v585
  %600 = vst [vmem:[%s6 + $0x18] sm:$0x1] %v587
  %601 = vst [vmem:[%s6 + $0x20] sm:$0x1] %v570
  %602 = vst [vmem:[%s6 + $0x28] sm:$0x1] %v584
  %603 = vst [vmem:[%s6 + $0x30] sm:$0x1] %v586
  %604 = vst [vmem:[%s6 + $0x38] sm:$0x1] %v588
  %605 = vmatprep.subr.mxu0 %v321
  %606 = vmatpush1.msra.mxu0 %v320
  %607 = vmatprep.subr.mxu0 %v324
  %608 = vmatpush1.msra.mxu0 %v323
  %609 = vmatprep.subr.mxu0 %v327
  %610 = vmatpush1.msra.mxu0 %v326
  %611 = vmatprep.subr.mxu0 %v330
  %612 = vmatpush1.msra.mxu0 %v329
  %613 = vmatprep.subr.mxu0 %v333
  %614 = vmatpush1.msra.mxu0 %v332
  %615 = vmatprep.subr.mxu0 %v336
  %616 = vmatpush1.msra.mxu0 %v335
  %617 = vmatprep.subr.mxu0 %v339
  %618 = vmatpush1.msra.mxu0 %v338
  %619 = vmatprep.subr.mxu0 %v342
  %620 = vmatpush1.msra.mxu0 %v341
  %621 = vmatprep.subr.mxu0 %v345
  %622 = vmatpush1.msra.mxu0 %v344
  %623 = vmatprep.subr.mxu0 %v348
  %624 = vmatpush1.msra.mxu0 %v347
  %625 = vmatprep.subr.mxu0 %v351
  %626 = vmatpush1.msra.mxu0 %v350
  %627 = vmatprep.subr.mxu0 %v354
  %628 = vmatpush1.msra.mxu0 %v353
  %629 = vmatprep.subr.mxu0 %v357
  %630 = vmatpush1.msra.mxu0 %v356
  %631 = vmatprep.subr.mxu0 %v360
  %632 = vmatpush1.msra.mxu0 %v359
  %633 = vmatprep.subr.mxu0 %v363
  %634 = vmatpush1.msra.mxu0 %v362
  %635 = vmatprep.subr.mxu0 %v366
  %636 = vmatpush1.msra.mxu0 %v365
  %637 = vmatprep.subr.mxu0 0.0
  %638 = vmatpush1.msra.mxu0 0.0
  %639 = vmatprep.subr.mxu0 0.0
  %640 = vmatpush1.msra.mxu0 0.0
  %641 = vmatprep.subr.mxu0 0.0
  %642 = vmatpush1.msra.mxu0 0.0
  %643 = vmatprep.subr.mxu0 0.0
  %644 = vmatpush1.msra.mxu0 0.0
  %645 = vmatprep.subr.mxu0 0.0
  %646 = vmatpush1.msra.mxu0 0.0
  %647 = vmatprep.subr.mxu0 0.0
  %648 = vmatpush1.msra.mxu0 0.0
  %649 = vmatprep.subr.mxu0 0.0
  %650 = vmatpush1.msra.mxu0 0.0
  %651 = vmatprep.subr.mxu0 0.0
  %652 = vmatpush1.msra.mxu0 0.0
  %653 = vmatprep.subr.mxu0 0.0
  %654 = vmatpush1.msra.mxu0 0.0
  %655 = vmatprep.subr.mxu0 0.0
  %656 = vmatpush1.msra.mxu0 0.0
  %657 = vmatprep.subr.mxu0 0.0
  %658 = vmatpush1.msra.mxu0 0.0
  %659 = vmatprep.subr.mxu0 0.0
  %660 = vmatpush1.msra.mxu0 0.0
  %661 = vmatprep.subr.mxu0 0.0
  %662 = vmatpush1.msra.mxu0 0.0
  %663 = vmatprep.subr.mxu0 0.0
  %664 = vmatpush1.msra.mxu0 0.0
  %665 = vmatprep.subr.mxu0 0.0
  %666 = vmatpush1.msra.mxu0 0.0
  %667 = vmatprep.subr.mxu0 0.0
  %668 = vmatpush1.msra.mxu0 0.0
  %669 = vmatprep.mubr.f32.mxu0 0.0
  %670 = vmatmul.mubr.f32.gmra.mrb[0].mxu0 %v538
  %v671 = vpop.f32.mrb[0].mxu0
  %v672 = vadd.f32 0.0, %v671
  %v673 = vpop.f32.mrb[0].mxu0
  %v674 = vadd.f32 0.0, %v673
  %675 = vdwg.mxu0
  %676 = vmatprep.subr.mxu0 0.0
  %677 = vmatpush1.msra.mxu0 %v322
  %678 = vmatprep.subr.mxu0 0.0
  %679 = vmatpush1.msra.mxu0 %v325
  %680 = vmatprep.subr.mxu0 0.0
  %681 = vmatpush1.msra.mxu0 %v328
  %682 = vmatprep.subr.mxu0 0.0
  %683 = vmatpush1.msra.mxu0 %v331
  %684 = vmatprep.subr.mxu0 0.0
  %685 = vmatpush1.msra.mxu0 %v334
  %686 = vmatprep.subr.mxu0 0.0
  %687 = vmatpush1.msra.mxu0 %v337
  %688 = vmatprep.subr.mxu0 0.0
  %689 = vmatpush1.msra.mxu0 %v340
  %690 = vmatprep.subr.mxu0 0.0
  %691 = vmatpush1.msra.mxu0 %v343
  %692 = vmatprep.subr.mxu0 0.0
  %693 = vmatpush1.msra.mxu0 %v346
  %694 = vmatprep.subr.mxu0 0.0
  %695 = vmatpush1.msra.mxu0 %v349
  %696 = vmatprep.subr.mxu0 0.0
  %697 = vmatpush1.msra.mxu0 %v352
  %698 = vmatprep.subr.mxu0 0.0
  %699 = vmatpush1.msra.mxu0 %v355
  %700 = vmatprep.subr.mxu0 0.0
  %701 = vmatpush1.msra.mxu0 %v358
  %702 = vmatprep.subr.mxu0 0.0
  %703 = vmatpush1.msra.mxu0 %v361
  %704 = vmatprep.subr.mxu0 0.0
  %705 = vmatpush1.msra.mxu0 %v364
  %706 = vmatprep.subr.mxu0 0.0
  %707 = vmatpush1.msra.mxu0 %v367
  %708 = vmatprep.subr.mxu0 0.0
  %709 = vmatpush1.msra.mxu0 0.0
  %710 = vmatprep.subr.mxu0 0.0
  %711 = vmatpush1.msra.mxu0 0.0
  %712 = vmatprep.subr.mxu0 0.0
  %713 = vmatpush1.msra.mxu0 0.0
  %714 = vmatprep.subr.mxu0 0.0
  %715 = vmatpush1.msra.mxu0 0.0
  %716 = vmatprep.subr.mxu0 0.0
  %717 = vmatpush1.msra.mxu0 0.0
  %718 = vmatprep.subr.mxu0 0.0
  %719 = vmatpush1.msra.mxu0 0.0
  %720 = vmatprep.subr.mxu0 0.0
  %721 = vmatpush1.msra.mxu0 0.0
  %722 = vmatprep.subr.mxu0 0.0
  %723 = vmatpush1.msra.mxu0 0.0
  %724 = vmatprep.subr.mxu0 0.0
  %725 = vmatpush1.msra.mxu0 0.0
  %726 = vmatprep.subr.mxu0 0.0
  %727 = vmatpush1.msra.mxu0 0.0
  %728 = vmatprep.subr.mxu0 0.0
  %729 = vmatpush1.msra.mxu0 0.0
  %730 = vmatprep.subr.mxu0 0.0
  %731 = vmatpush1.msra.mxu0 0.0
  %732 = vmatprep.subr.mxu0 0.0
  %733 = vmatpush1.msra.mxu0 0.0
  %734 = vmatprep.subr.mxu0 0.0
  %735 = vmatpush1.msra.mxu0 0.0
  %736 = vmatprep.subr.mxu0 0.0
  %737 = vmatpush1.msra.mxu0 0.0
  %738 = vmatprep.subr.mxu0 0.0
  %739 = vmatpush1.msra.mxu0 0.0
  %740 = vmatprep.mubr.f32.mxu0 0.0
  %741 = vmatmul.mubr.f32.gmra.mrb[0].mxu0 %v538
  %v742 = vpop.f32.mrb[0].mxu0
  %v743 = vadd.f32 0.0, %v742
  %v744 = vpop.f32.mrb[0].mxu0
  %745 = vdwg.mxu0
  %v746 = vadd.f32 %v175, %v672
  %v747 = vxor.u32 %v746, 2147483648
  %v748 = vmul.f32 %v747, 1.442695
  %v749 = vpow.pop %v748
  %v750 = vadd.f32 %v749, 1.0
  %v751 = vrcp.pop %v750
  %v752 = vmul.f32 1.0, %v751
  %v753 = vadd.f32 %v177, %v674
  %v754 = vxor.u32 %v753, 2147483648
  %v755 = vmul.f32 %v754, 1.442695
  %v756 = vpow.pop %v755
  %v757 = vadd.f32 %v756, 1.0
  %v758 = vrcp.pop %v757
  %v759 = vmul.f32 1.0, %v758
  %v760 = vadd.f32 %v743, %v373
  %v761 = vmul.f32 %v752, %v760
  %v762 = vadd.f32 %v287, %v761
  %v763 = vtanh.pop %v762
  %v764 = vsub.f32 1.0, %v759
  %v765 = vmul.f32 %v764, %v763
  %v766 = vmul.f32 %v759, %v538
  %v767 = vadd.f32 %v765, %v766
  %v769 = vcombine.high %v767, %v767
  %v771 = vunpack.c.l.s4 1966171168
  %v772 = vunpack.c.0.s8 %v771
  %v773 = vlaneseq
  %v774 = vshrl.u32 %v773, 7
  %v775 = vsub.s32 %v772, %v774
  %v776 = vrot.slane %v767, %v775
  %v778 = vunpack.c.l.s4 1966171168
  %v779 = vunpack.c.0.s8 %v778
  %v780 = vlaneseq
  %v781 = vshrl.u32 %v780, 7
  %v782 = vsub.s32 %v779, %v781
  %v783 = vrot.slane %v769, %v782
  %v784 = vcombine.high %v776, %v776
  %v785 = vcombine.high %v783, %v783
  %v787 = vunpack.c.l.s4 1966171168
  %v788 = vunpack.c.0.s8 %v787
  %v789 = vlaneseq
  %v790 = vshrl.u32 %v789, 7
  %v791 = vsub.s32 %v788, %v790
  %v792 = vrot.slane %v776, %v791
  %v794 = vunpack.c.l.s4 1966171168
  %v795 = vunpack.c.0.s8 %v794
  %v796 = vlaneseq
  %v797 = vshrl.u32 %v796, 7
  %v798 = vsub.s32 %v795, %v797
  %v799 = vrot.slane %v783, %v798
  %v801 = vunpack.c.l.s4 1966171168
  %v802 = vunpack.c.0.s8 %v801
  %v803 = vlaneseq
  %v804 = vshrl.u32 %v803, 7
  %v805 = vsub.s32 %v802, %v804
  %v806 = vrot.slane %v784, %v805
  %v808 = vunpack.c.l.s4 1966171168
  %v809 = vunpack.c.0.s8 %v808
  %v810 = vlaneseq
  %v811 = vshrl.u32 %v810, 7
  %v812 = vsub.s32 %v809, %v811
  %v813 = vrot.slane %v785, %v812
  %v814 = vcombine.high %v792, %v792
  %v815 = vcombine.high %v799, %v799
  %v816 = vcombine.high %v806, %v806
  %v817 = vcombine.high %v813, %v813
  %826 = vst [vmem:[%s6 + $0x1] sm:$0x1] %v792
  %827 = vst [vmem:[%s6 + $0x9] sm:$0x1] %v806
  %828 = vst [vmem:[%s6 + $0x11] sm:$0x1] %v814
  %829 = vst [vmem:[%s6 + $0x19] sm:$0x1] %v816
  %830 = vst [vmem:[%s6 + $0x21] sm:$0x1] %v799
  %831 = vst [vmem:[%s6 + $0x29] sm:$0x1] %v813
  %832 = vst [vmem:[%s6 + $0x31] sm:$0x1] %v815
  %833 = vst [vmem:[%s6 + $0x39] sm:$0x1] %v817
  %834 = vmatprep.subr.mxu0 %v321
  %835 = vmatpush1.msra.mxu0 %v320
  %836 = vmatprep.subr.mxu0 %v324
  %837 = vmatpush1.msra.mxu0 %v323
  %838 = vmatprep.subr.mxu0 %v327
  %839 = vmatpush1.msra.mxu0 %v326
  %840 = vmatprep.subr.mxu0 %v330
  %841 = vmatpush1.msra.mxu0 %v329
  %842 = vmatprep.subr.mxu0 %v333
  %843 = vmatpush1.msra.mxu0 %v332
  %844 = vmatprep.subr.mxu0 %v336
  %845 = vmatpush1.msra.mxu0 %v335
  %846 = vmatprep.subr.mxu0 %v339
  %847 = vmatpush1.msra.mxu0 %v338
  %848 = vmatprep.subr.mxu0 %v342
  %849 = vmatpush1.msra.mxu0 %v341
  %850 = vmatprep.subr.mxu0 %v345
  %851 = vmatpush1.msra.mxu0 %v344
  %852 = vmatprep.subr.mxu0 %v348
  %853 = vmatpush1.msra.mxu0 %v347
  %854 = vmatprep.subr.mxu0 %v351
  %855 = vmatpush1.msra.mxu0 %v350
  %856 = vmatprep.subr.mxu0 %v354
  %857 = vmatpush1.msra.mxu0 %v353
  %858 = vmatprep.subr.mxu0 %v357
  %859 = vmatpush1.msra.mxu0 %v356
  %860 = vmatprep.subr.mxu0 %v360
  %861 = vmatpush1.msra.mxu0 %v359
  %862 = vmatprep.subr.mxu0 %v363
  %863 = vmatpush1.msra.mxu0 %v362
  %864 = vmatprep.subr.mxu0 %v366
  %865 = vmatpush1.msra.mxu0 %v365
  %866 = vmatprep.subr.mxu0 0.0
  %867 = vmatpush1.msra.mxu0 0.0
  %868 = vmatprep.subr.mxu0 0.0
  %869 = vmatpush1.msra.mxu0 0.0
  %870 = vmatprep.subr.mxu0 0.0
  %871 = vmatpush1.msra.mxu0 0.0
  %872 = vmatprep.subr.mxu0 0.0
  %873 = vmatpush1.msra.mxu0 0.0
  %874 = vmatprep.subr.mxu0 0.0
  %875 = vmatpush1.msra.mxu0 0.0
  %876 = vmatprep.subr.mxu0 0.0
  %877 = vmatpush1.msra.mxu0 0.0
  %878 = vmatprep.subr.mxu0 0.0
  %879 = vmatpush1.msra.mxu0 0.0
  %880 = vmatprep.subr.mxu0 0.0
  %881 = vmatpush1.msra.mxu0 0.0
  %882 = vmatprep.subr.mxu0 0.0
  %883 = vmatpush1.msra.mxu0 0.0
  %884 = vmatprep.subr.mxu0 0.0
  %885 = vmatpush1.msra.mxu0 0.0
  %886 = vmatprep.subr.mxu0 0.0
  %887 = vmatpush1.msra.mxu0 0.0
  %888 = vmatprep.subr.mxu0 0.0
  %889 = vmatpush1.msra.mxu0 0.0
  %890 = vmatprep.subr.mxu0 0.0
  %891 = vmatpush1.msra.mxu0 0.0
  %892 = vmatprep.subr.mxu0 0.0
  %893 = vmatpush1.msra.mxu0 0.0
  %894 = vmatprep.subr.mxu0 0.0
  %895 = vmatpush1.msra.mxu0 0.0
  %896 = vmatprep.subr.mxu0 0.0
  %897 = vmatpush1.msra.mxu0 0.0
  %898 = vmatprep.mubr.f32.mxu0 0.0
  %899 = vmatmul.mubr.f32.gmra.mrb[0].mxu0 %v767
  %v900 = vpop.f32.mrb[0].mxu0
  %v901 = vadd.f32 0.0, %v900
  %v902 = vpop.f32.mrb[0].mxu0
  %v903 = vadd.f32 0.0, %v902
  %904 = vdwg.mxu0
  %905 = vmatprep.subr.mxu0 0.0
  %906 = vmatpush1.msra.mxu0 %v322
  %907 = vmatprep.subr.mxu0 0.0
  %908 = vmatpush1.msra.mxu0 %v325
  %909 = vmatprep.subr.mxu0 0.0
  %910 = vmatpush1.msra.mxu0 %v328
  %911 = vmatprep.subr.mxu0 0.0
  %912 = vmatpush1.msra.mxu0 %v331
  %913 = vmatprep.subr.mxu0 0.0
  %914 = vmatpush1.msra.mxu0 %v334
  %915 = vmatprep.subr.mxu0 0.0
  %916 = vmatpush1.msra.mxu0 %v337
  %917 = vmatprep.subr.mxu0 0.0
  %918 = vmatpush1.msra.mxu0 %v340
  %919 = vmatprep.subr.mxu0 0.0
  %920 = vmatpush1.msra.mxu0 %v343
  %921 = vmatprep.subr.mxu0 0.0
  %922 = vmatpush1.msra.mxu0 %v346
  %923 = vmatprep.subr.mxu0 0.0
  %924 = vmatpush1.msra.mxu0 %v349
  %925 = vmatprep.subr.mxu0 0.0
  %926 = vmatpush1.msra.mxu0 %v352
  %927 = vmatprep.subr.mxu0 0.0
  %928 = vmatpush1.msra.mxu0 %v355
  %929 = vmatprep.subr.mxu0 0.0
  %930 = vmatpush1.msra.mxu0 %v358
  %931 = vmatprep.subr.mxu0 0.0
  %932 = vmatpush1.msra.mxu0 %v361
  %933 = vmatprep.subr.mxu0 0.0
  %934 = vmatpush1.msra.mxu0 %v364
  %935 = vmatprep.subr.mxu0 0.0
  %936 = vmatpush1.msra.mxu0 %v367
  %937 = vmatprep.subr.mxu0 0.0
  %938 = vmatpush1.msra.mxu0 0.0
  %939 = vmatprep.subr.mxu0 0.0
  %940 = vmatpush1.msra.mxu0 0.0
  %941 = vmatprep.subr.mxu0 0.0
  %942 = vmatpush1.msra.mxu0 0.0
  %943 = vmatprep.subr.mxu0 0.0
  %944 = vmatpush1.msra.mxu0 0.0
  %945 = vmatprep.subr.mxu0 0.0
  %946 = vmatpush1.msra.mxu0 0.0
  %947 = vmatprep.subr.mxu0 0.0
  %948 = vmatpush1.msra.mxu0 0.0
  %949 = vmatprep.subr.mxu0 0.0
  %950 = vmatpush1.msra.mxu0 0.0
  %951 = vmatprep.subr.mxu0 0.0
  %952 = vmatpush1.msra.mxu0 0.0
  %953 = vmatprep.subr.mxu0 0.0
  %954 = vmatpush1.msra.mxu0 0.0
  %955 = vmatprep.subr.mxu0 0.0
  %956 = vmatpush1.msra.mxu0 0.0
  %957 = vmatprep.subr.mxu0 0.0
  %958 = vmatpush1.msra.mxu0 0.0
  %959 = vmatprep.subr.mxu0 0.0
  %960 = vmatpush1.msra.mxu0 0.0
  %961 = vmatprep.subr.mxu0 0.0
  %962 = vmatpush1.msra.mxu0 0.0
  %963 = vmatprep.subr.mxu0 0.0
  %964 = vmatpush1.msra.mxu0 0.0
  %965 = vmatprep.subr.mxu0 0.0
  %966 = vmatpush1.msra.mxu0 0.0
  %967 = vmatprep.subr.mxu0 0.0
  %968 = vmatpush1.msra.mxu0 0.0
  %969 = vmatprep.mubr.f32.mxu0 0.0
  %970 = vmatmul.mubr.f32.gmra.mrb[0].mxu0 %v767
  %v971 = vpop.f32.mrb[0].mxu0
  %v972 = vadd.f32 0.0, %v971
  %v973 = vpop.f32.mrb[0].mxu0
  %974 = vdwg.mxu0
  %v975 = vadd.f32 %v181, %v901
  %v976 = vxor.u32 %v975, 2147483648
  %v977 = vmul.f32 %v976, 1.442695
  %v978 = vpow.pop %v977
  %v979 = vadd.f32 %v978, 1.0
  %v980 = vrcp.pop %v979
  %v981 = vmul.f32 1.0, %v980
  %v982 = vadd.f32 %v183, %v903
  %v983 = vxor.u32 %v982, 2147483648
  %v984 = vmul.f32 %v983, 1.442695
  %v985 = vpow.pop %v984
  %v986 = vadd.f32 %v985, 1.0
  %v987 = vrcp.pop %v986
  %v988 = vmul.f32 1.0, %v987
  %v989 = vadd.f32 %v972, %v373
  %v990 = vmul.f32 %v981, %v989
  %v991 = vadd.f32 %v292, %v990
  %v992 = vtanh.pop %v991
  %v993 = vsub.f32 1.0, %v988
  %v994 = vmul.f32 %v993, %v992
  %v995 = vmul.f32 %v988, %v767
  %v996 = vadd.f32 %v994, %v995
  %v998 = vcombine.high %v996, %v996
  %v1000 = vunpack.c.l.s4 1966171168
  %v1001 = vunpack.c.0.s8 %v1000
  %v1002 = vlaneseq
  %v1003 = vshrl.u32 %v1002, 7
  %v1004 = vsub.s32 %v1001, %v1003
  %v1005 = vrot.slane %v996, %v1004
  %v1007 = vunpack.c.l.s4 1966171168
  %v1008 = vunpack.c.0.s8 %v1007
  %v1009 = vlaneseq
  %v1010 = vshrl.u32 %v1009, 7
  %v1011 = vsub.s32 %v1008, %v1010
  %v1012 = vrot.slane %v998, %v1011
  %v1013 = vcombine.high %v1005, %v1005
  %v1014 = vcombine.high %v1012, %v1012
  %v1016 = vunpack.c.l.s4 1966171168
  %v1017 = vunpack.c.0.s8 %v1016
  %v1018 = vlaneseq
  %v1019 = vshrl.u32 %v1018, 7
  %v1020 = vsub.s32 %v1017, %v1019
  %v1021 = vrot.slane %v1005, %v1020
  %v1023 = vunpack.c.l.s4 1966171168
  %v1024 = vunpack.c.0.s8 %v1023
  %v1025 = vlaneseq
  %v1026 = vshrl.u32 %v1025, 7
  %v1027 = vsub.s32 %v1024, %v1026
  %v1028 = vrot.slane %v1012, %v1027
  %v1030 = vunpack.c.l.s4 1966171168
  %v1031 = vunpack.c.0.s8 %v1030
  %v1032 = vlaneseq
  %v1033 = vshrl.u32 %v1032, 7
  %v1034 = vsub.s32 %v1031, %v1033
  %v1035 = vrot.slane %v1013, %v1034
  %v1037 = vunpack.c.l.s4 1966171168
  %v1038 = vunpack.c.0.s8 %v1037
  %v1039 = vlaneseq
  %v1040 = vshrl.u32 %v1039, 7
  %v1041 = vsub.s32 %v1038, %v1040
  %v1042 = vrot.slane %v1014, %v1041
  %v1043 = vcombine.high %v1021, %v1021
  %v1044 = vcombine.high %v1028, %v1028
  %v1045 = vcombine.high %v1035, %v1035
  %v1046 = vcombine.high %v1042, %v1042
  %1055 = vst [vmem:[%s6 + $0x2] sm:$0x1] %v1021
  %1056 = vst [vmem:[%s6 + $0xa] sm:$0x1] %v1035
  %1057 = vst [vmem:[%s6 + $0x12] sm:$0x1] %v1043
  %1058 = vst [vmem:[%s6 + $0x1a] sm:$0x1] %v1045
  %1059 = vst [vmem:[%s6 + $0x22] sm:$0x1] %v1028
  %1060 = vst [vmem:[%s6 + $0x2a] sm:$0x1] %v1042
  %1061 = vst [vmem:[%s6 + $0x32] sm:$0x1] %v1044
  %1062 = vst [vmem:[%s6 + $0x3a] sm:$0x1] %v1046
  %1063 = vmatprep.subr.mxu0 %v321
  %1064 = vmatpush1.msra.mxu0 %v320
  %1065 = vmatprep.subr.mxu0 %v324
  %1066 = vmatpush1.msra.mxu0 %v323
  %1067 = vmatprep.subr.mxu0 %v327
  %1068 = vmatpush1.msra.mxu0 %v326
  %1069 = vmatprep.subr.mxu0 %v330
  %1070 = vmatpush1.msra.mxu0 %v329
  %1071 = vmatprep.subr.mxu0 %v333
  %1072 = vmatpush1.msra.mxu0 %v332
  %1073 = vmatprep.subr.mxu0 %v336
  %1074 = vmatpush1.msra.mxu0 %v335
  %1075 = vmatprep.subr.mxu0 %v339
  %1076 = vmatpush1.msra.mxu0 %v338
  %1077 = vmatprep.subr.mxu0 %v342
  %1078 = vmatpush1.msra.mxu0 %v341
  %1079 = vmatprep.subr.mxu0 %v345
  %1080 = vmatpush1.msra.mxu0 %v344
  %1081 = vmatprep.subr.mxu0 %v348
  %1082 = vmatpush1.msra.mxu0 %v347
  %1083 = vmatprep.subr.mxu0 %v351
  %1084 = vmatpush1.msra.mxu0 %v350
  %1085 = vmatprep.subr.mxu0 %v354
  %1086 = vmatpush1.msra.mxu0 %v353
  %1087 = vmatprep.subr.mxu0 %v357
  %1088 = vmatpush1.msra.mxu0 %v356
  %1089 = vmatprep.subr.mxu0 %v360
  %1090 = vmatpush1.msra.mxu0 %v359
  %1091 = vmatprep.subr.mxu0 %v363
  %1092 = vmatpush1.msra.mxu0 %v362
  %1093 = vmatprep.subr.mxu0 %v366
  %1094 = vmatpush1.msra.mxu0 %v365
  %1095 = vmatprep.subr.mxu0 0.0
  %1096 = vmatpush1.msra.mxu0 0.0
  %1097 = vmatprep.subr.mxu0 0.0
  %1098 = vmatpush1.msra.mxu0 0.0
  %1099 = vmatprep.subr.mxu0 0.0
  %1100 = vmatpush1.msra.mxu0 0.0
  %1101 = vmatprep.subr.mxu0 0.0
  %1102 = vmatpush1.msra.mxu0 0.0
  %1103 = vmatprep.subr.mxu0 0.0
  %1104 = vmatpush1.msra.mxu0 0.0
  %1105 = vmatprep.subr.mxu0 0.0
  %1106 = vmatpush1.msra.mxu0 0.0
  %1107 = vmatprep.subr.mxu0 0.0
  %1108 = vmatpush1.msra.mxu0 0.0
  %1109 = vmatprep.subr.mxu0 0.0
  %1110 = vmatpush1.msra.mxu0 0.0
  %1111 = vmatprep.subr.mxu0 0.0
  %1112 = vmatpush1.msra.mxu0 0.0
  %1113 = vmatprep.subr.mxu0 0.0
  %1114 = vmatpush1.msra.mxu0 0.0
  %1115 = vmatprep.subr.mxu0 0.0
  %1116 = vmatpush1.msra.mxu0 0.0
  %1117 = vmatprep.subr.mxu0 0.0
  %1118 = vmatpush1.msra.mxu0 0.0
  %1119 = vmatprep.subr.mxu0 0.0
  %1120 = vmatpush1.msra.mxu0 0.0
  %1121 = vmatprep.subr.mxu0 0.0
  %1122 = vmatpush1.msra.mxu0 0.0
  %1123 = vmatprep.subr.mxu0 0.0
  %1124 = vmatpush1.msra.mxu0 0.0
  %1125 = vmatprep.subr.mxu0 0.0
  %1126 = vmatpush1.msra.mxu0 0.0
  %1127 = vmatprep.mubr.f32.mxu0 0.0
  %1128 = vmatmul.mubr.f32.gmra.mrb[0].mxu0 %v996
  %v1129 = vpop.f32.mrb[0].mxu0
  %v1130 = vadd.f32 0.0, %v1129
  %v1131 = vpop.f32.mrb[0].mxu0
  %v1132 = vadd.f32 0.0, %v1131
  %1133 = vdwg.mxu0
  %1134 = vmatprep.subr.mxu0 0.0
  %1135 = vmatpush1.msra.mxu0 %v322
  %1136 = vmatprep.subr.mxu0 0.0
  %1137 = vmatpush1.msra.mxu0 %v325
  %1138 = vmatprep.subr.mxu0 0.0
  %1139 = vmatpush1.msra.mxu0 %v328
  %1140 = vmatprep.subr.mxu0 0.0
  %1141 = vmatpush1.msra.mxu0 %v331
  %1142 = vmatprep.subr.mxu0 0.0
  %1143 = vmatpush1.msra.mxu0 %v334
  %1144 = vmatprep.subr.mxu0 0.0
  %1145 = vmatpush1.msra.mxu0 %v337
  %1146 = vmatprep.subr.mxu0 0.0
  %1147 = vmatpush1.msra.mxu0 %v340
  %1148 = vmatprep.subr.mxu0 0.0
  %1149 = vmatpush1.msra.mxu0 %v343
  %1150 = vmatprep.subr.mxu0 0.0
  %1151 = vmatpush1.msra.mxu0 %v346
  %1152 = vmatprep.subr.mxu0 0.0
  %1153 = vmatpush1.msra.mxu0 %v349
  %1154 = vmatprep.subr.mxu0 0.0
  %1155 = vmatpush1.msra.mxu0 %v352
  %1156 = vmatprep.subr.mxu0 0.0
  %1157 = vmatpush1.msra.mxu0 %v355
  %1158 = vmatprep.subr.mxu0 0.0
  %1159 = vmatpush1.msra.mxu0 %v358
  %1160 = vmatprep.subr.mxu0 0.0
  %1161 = vmatpush1.msra.mxu0 %v361
  %1162 = vmatprep.subr.mxu0 0.0
  %1163 = vmatpush1.msra.mxu0 %v364
  %1164 = vmatprep.subr.mxu0 0.0
  %1165 = vmatpush1.msra.mxu0 %v367
  %1166 = vmatprep.subr.mxu0 0.0
  %1167 = vmatpush1.msra.mxu0 0.0
  %1168 = vmatprep.subr.mxu0 0.0
  %1169 = vmatpush1.msra.mxu0 0.0
  %1170 = vmatprep.subr.mxu0 0.0
  %1171 = vmatpush1.msra.mxu0 0.0
  %1172 = vmatprep.subr.mxu0 0.0
  %1173 = vmatpush1.msra.mxu0 0.0
  %1174 = vmatprep.subr.mxu0 0.0
  %1175 = vmatpush1.msra.mxu0 0.0
  %1176 = vmatprep.subr.mxu0 0.0
  %1177 = vmatpush1.msra.mxu0 0.0
  %1178 = vmatprep.subr.mxu0 0.0
  %1179 = vmatpush1.msra.mxu0 0.0
  %1180 = vmatprep.subr.mxu0 0.0
  %1181 = vmatpush1.msra.mxu0 0.0
  %1182 = vmatprep.subr.mxu0 0.0
  %1183 = vmatpush1.msra.mxu0 0.0
  %1184 = vmatprep.subr.mxu0 0.0
  %1185 = vmatpush1.msra.mxu0 0.0
  %1186 = vmatprep.subr.mxu0 0.0
  %1187 = vmatpush1.msra.mxu0 0.0
  %1188 = vmatprep.subr.mxu0 0.0
  %1189 = vmatpush1.msra.mxu0 0.0
  %1190 = vmatprep.subr.mxu0 0.0
  %1191 = vmatpush1.msra.mxu0 0.0
  %1192 = vmatprep.subr.mxu0 0.0
  %1193 = vmatpush1.msra.mxu0 0.0
  %1194 = vmatprep.subr.mxu0 0.0
  %1195 = vmatpush1.msra.mxu0 0.0
  %1196 = vmatprep.subr.mxu0 0.0
  %1197 = vmatpush1.msra.mxu0 0.0
  %1198 = vmatprep.mubr.f32.mxu0 0.0
  %1199 = vmatmul.mubr.f32.gmra.mrb[0].mxu0 %v996
  %v1200 = vpop.f32.mrb[0].mxu0
  %v1201 = vadd.f32 0.0, %v1200
  %v1202 = vpop.f32.mrb[0].mxu0
  %1203 = vdwg.mxu0
  %v1204 = vadd.f32 %v187, %v1130
  %v1205 = vxor.u32 %v1204, 2147483648
  %v1206 = vmul.f32 %v1205, 1.442695
  %v1207 = vpow.pop %v1206
  %v1208 = vadd.f32 %v1207, 1.0
  %v1209 = vrcp.pop %v1208
  %v1210 = vmul.f32 1.0, %v1209
  %v1211 = vadd.f32 %v189, %v1132
  %v1212 = vxor.u32 %v1211, 2147483648
  %v1213 = vmul.f32 %v1212, 1.442695
  %v1214 = vpow.pop %v1213
  %v1215 = vadd.f32 %v1214, 1.0
  %v1216 = vrcp.pop %v1215
  %v1217 = vmul.f32 1.0, %v1216
  %v1218 = vadd.f32 %v1201, %v373
  %v1219 = vmul.f32 %v1210, %v1218
  %v1220 = vadd.f32 %v297, %v1219
  %v1221 = vtanh.pop %v1220
  %v1222 = vsub.f32 1.0, %v1217
  %v1223 = vmul.f32 %v1222, %v1221
  %v1224 = vmul.f32 %v1217, %v996
  %v1225 = vadd.f32 %v1223, %v1224
  %v1227 = vcombine.high %v1225, %v1225
  %v1229 = vunpack.c.l.s4 1966171168
  %v1230 = vunpack.c.0.s8 %v1229
  %v1231 = vlaneseq
  %v1232 = vshrl.u32 %v1231, 7
  %v1233 = vsub.s32 %v1230, %v1232
  %v1234 = vrot.slane %v1225, %v1233
  %v1236 = vunpack.c.l.s4 1966171168
  %v1237 = vunpack.c.0.s8 %v1236
  %v1238 = vlaneseq
  %v1239 = vshrl.u32 %v1238, 7
  %v1240 = vsub.s32 %v1237, %v1239
  %v1241 = vrot.slane %v1227, %v1240
  %v1242 = vcombine.high %v1234, %v1234
  %v1243 = vcombine.high %v1241, %v1241
  %v1245 = vunpack.c.l.s4 1966171168
  %v1246 = vunpack.c.0.s8 %v1245
  %v1247 = vlaneseq
  %v1248 = vshrl.u32 %v1247, 7
  %v1249 = vsub.s32 %v1246, %v1248
  %v1250 = vrot.slane %v1234, %v1249
  %v1252 = vunpack.c.l.s4 1966171168
  %v1253 = vunpack.c.0.s8 %v1252
  %v1254 = vlaneseq
  %v1255 = vshrl.u32 %v1254, 7
  %v1256 = vsub.s32 %v1253, %v1255
  %v1257 = vrot.slane %v1241, %v1256
  %v1259 = vunpack.c.l.s4 1966171168
  %v1260 = vunpack.c.0.s8 %v1259
  %v1261 = vlaneseq
  %v1262 = vshrl.u32 %v1261, 7
  %v1263 = vsub.s32 %v1260, %v1262
  %v1264 = vrot.slane %v1242, %v1263
  %v1266 = vunpack.c.l.s4 1966171168
  %v1267 = vunpack.c.0.s8 %v1266
  %v1268 = vlaneseq
  %v1269 = vshrl.u32 %v1268, 7
  %v1270 = vsub.s32 %v1267, %v1269
  %v1271 = vrot.slane %v1243, %v1270
  %v1272 = vcombine.high %v1250, %v1250
  %v1273 = vcombine.high %v1257, %v1257
  %v1274 = vcombine.high %v1264, %v1264
  %v1275 = vcombine.high %v1271, %v1271
  %1284 = vst [vmem:[%s6 + $0x3] sm:$0x1] %v1250
  %1285 = vst [vmem:[%s6 + $0xb] sm:$0x1] %v1264
  %1286 = vst [vmem:[%s6 + $0x13] sm:$0x1] %v1272
  %1287 = vst [vmem:[%s6 + $0x1b] sm:$0x1] %v1274
  %1288 = vst [vmem:[%s6 + $0x23] sm:$0x1] %v1257
  %1289 = vst [vmem:[%s6 + $0x2b] sm:$0x1] %v1271
  %1290 = vst [vmem:[%s6 + $0x33] sm:$0x1] %v1273
  %1291 = vst [vmem:[%s6 + $0x3b] sm:$0x1] %v1275
  %1292 = vmatprep.subr.mxu0 %v321
  %1293 = vmatpush1.msra.mxu0 %v320
  %1294 = vmatprep.subr.mxu0 %v324
  %1295 = vmatpush1.msra.mxu0 %v323
  %1296 = vmatprep.subr.mxu0 %v327
  %1297 = vmatpush1.msra.mxu0 %v326
  %1298 = vmatprep.subr.mxu0 %v330
  %1299 = vmatpush1.msra.mxu0 %v329
  %1300 = vmatprep.subr.mxu0 %v333
  %1301 = vmatpush1.msra.mxu0 %v332
  %1302 = vmatprep.subr.mxu0 %v336
  %1303 = vmatpush1.msra.mxu0 %v335
  %1304 = vmatprep.subr.mxu0 %v339
  %1305 = vmatpush1.msra.mxu0 %v338
  %1306 = vmatprep.subr.mxu0 %v342
  %1307 = vmatpush1.msra.mxu0 %v341
  %1308 = vmatprep.subr.mxu0 %v345
  %1309 = vmatpush1.msra.mxu0 %v344
  %1310 = vmatprep.subr.mxu0 %v348
  %1311 = vmatpush1.msra.mxu0 %v347
  %1312 = vmatprep.subr.mxu0 %v351
  %1313 = vmatpush1.msra.mxu0 %v350
  %1314 = vmatprep.subr.mxu0 %v354
  %1315 = vmatpush1.msra.mxu0 %v353
  %1316 = vmatprep.subr.mxu0 %v357
  %1317 = vmatpush1.msra.mxu0 %v356
  %1318 = vmatprep.subr.mxu0 %v360
  %1319 = vmatpush1.msra.mxu0 %v359
  %1320 = vmatprep.subr.mxu0 %v363
  %1321 = vmatpush1.msra.mxu0 %v362
  %1322 = vmatprep.subr.mxu0 %v366
  %1323 = vmatpush1.msra.mxu0 %v365
  %1324 = vmatprep.subr.mxu0 0.0
  %1325 = vmatpush1.msra.mxu0 0.0
  %1326 = vmatprep.subr.mxu0 0.0
  %1327 = vmatpush1.msra.mxu0 0.0
  %1328 = vmatprep.subr.mxu0 0.0
  %1329 = vmatpush1.msra.mxu0 0.0
  %1330 = vmatprep.subr.mxu0 0.0
  %1331 = vmatpush1.msra.mxu0 0.0
  %1332 = vmatprep.subr.mxu0 0.0
  %1333 = vmatpush1.msra.mxu0 0.0
  %1334 = vmatprep.subr.mxu0 0.0
  %1335 = vmatpush1.msra.mxu0 0.0
  %1336 = vmatprep.subr.mxu0 0.0
  %1337 = vmatpush1.msra.mxu0 0.0
  %1338 = vmatprep.subr.mxu0 0.0
  %1339 = vmatpush1.msra.mxu0 0.0
  %1340 = vmatprep.subr.mxu0 0.0
  %1341 = vmatpush1.msra.mxu0 0.0
  %1342 = vmatprep.subr.mxu0 0.0
  %1343 = vmatpush1.msra.mxu0 0.0
  %1344 = vmatprep.subr.mxu0 0.0
  %1345 = vmatpush1.msra.mxu0 0.0
  %1346 = vmatprep.subr.mxu0 0.0
  %1347 = vmatpush1.msra.mxu0 0.0
  %1348 = vmatprep.subr.mxu0 0.0
  %1349 = vmatpush1.msra.mxu0 0.0
  %1350 = vmatprep.subr.mxu0 0.0
  %1351 = vmatpush1.msra.mxu0 0.0
  %1352 = vmatprep.subr.mxu0 0.0
  %1353 = vmatpush1.msra.mxu0 0.0
  %1354 = vmatprep.subr.mxu0 0.0
  %1355 = vmatpush1.msra.mxu0 0.0
  %1356 = vmatprep.mubr.f32.mxu0 0.0
  %1357 = vmatmul.mubr.f32.gmra.mrb[0].mxu0 %v1225
  %v1358 = vpop.f32.mrb[0].mxu0
  %v1359 = vadd.f32 0.0, %v1358
  %v1360 = vpop.f32.mrb[0].mxu0
  %v1361 = vadd.f32 0.0, %v1360
  %1362 = vdwg.mxu0
  %1363 = vmatprep.subr.mxu0 0.0
  %1364 = vmatpush1.msra.mxu0 %v322
  %1365 = vmatprep.subr.mxu0 0.0
  %1366 = vmatpush1.msra.mxu0 %v325
  %1367 = vmatprep.subr.mxu0 0.0
  %1368 = vmatpush1.msra.mxu0 %v328
  %1369 = vmatprep.subr.mxu0 0.0
  %1370 = vmatpush1.msra.mxu0 %v331
  %1371 = vmatprep.subr.mxu0 0.0
  %1372 = vmatpush1.msra.mxu0 %v334
  %1373 = vmatprep.subr.mxu0 0.0
  %1374 = vmatpush1.msra.mxu0 %v337
  %1375 = vmatprep.subr.mxu0 0.0
  %1376 = vmatpush1.msra.mxu0 %v340
  %1377 = vmatprep.subr.mxu0 0.0
  %1378 = vmatpush1.msra.mxu0 %v343
  %1379 = vmatprep.subr.mxu0 0.0
  %1380 = vmatpush1.msra.mxu0 %v346
  %1381 = vmatprep.subr.mxu0 0.0
  %1382 = vmatpush1.msra.mxu0 %v349
  %1383 = vmatprep.subr.mxu0 0.0
  %1384 = vmatpush1.msra.mxu0 %v352
  %1385 = vmatprep.subr.mxu0 0.0
  %1386 = vmatpush1.msra.mxu0 %v355
  %1387 = vmatprep.subr.mxu0 0.0
  %1388 = vmatpush1.msra.mxu0 %v358
  %1389 = vmatprep.subr.mxu0 0.0
  %1390 = vmatpush1.msra.mxu0 %v361
  %1391 = vmatprep.subr.mxu0 0.0
  %1392 = vmatpush1.msra.mxu0 %v364
  %1393 = vmatprep.subr.mxu0 0.0
  %1394 = vmatpush1.msra.mxu0 %v367
  %1395 = vmatprep.subr.mxu0 0.0
  %1396 = vmatpush1.msra.mxu0 0.0
  %1397 = vmatprep.subr.mxu0 0.0
  %1398 = vmatpush1.msra.mxu0 0.0
  %1399 = vmatprep.subr.mxu0 0.0
  %1400 = vmatpush1.msra.mxu0 0.0
  %1401 = vmatprep.subr.mxu0 0.0
  %1402 = vmatpush1.msra.mxu0 0.0
  %1403 = vmatprep.subr.mxu0 0.0
  %1404 = vmatpush1.msra.mxu0 0.0
  %1405 = vmatprep.subr.mxu0 0.0
  %1406 = vmatpush1.msra.mxu0 0.0
  %1407 = vmatprep.subr.mxu0 0.0
  %1408 = vmatpush1.msra.mxu0 0.0
  %1409 = vmatprep.subr.mxu0 0.0
  %1410 = vmatpush1.msra.mxu0 0.0
  %1411 = vmatprep.subr.mxu0 0.0
  %1412 = vmatpush1.msra.mxu0 0.0
  %1413 = vmatprep.subr.mxu0 0.0
  %1414 = vmatpush1.msra.mxu0 0.0
  %1415 = vmatprep.subr.mxu0 0.0
  %1416 = vmatpush1.msra.mxu0 0.0
  %1417 = vmatprep.subr.mxu0 0.0
  %1418 = vmatpush1.msra.mxu0 0.0
  %1419 = vmatprep.subr.mxu0 0.0
  %1420 = vmatpush1.msra.mxu0 0.0
  %1421 = vmatprep.subr.mxu0 0.0
  %1422 = vmatpush1.msra.mxu0 0.0
  %1423 = vmatprep.subr.mxu0 0.0
  %1424 = vmatpush1.msra.mxu0 0.0
  %1425 = vmatprep.subr.mxu0 0.0
  %1426 = vmatpush1.msra.mxu0 0.0
  %1427 = vmatprep.mubr.f32.mxu0 0.0
  %1428 = vmatmul.mubr.f32.gmra.mrb[0].mxu0 %v1225
  %v1429 = vpop.f32.mrb[0].mxu0
  %v1430 = vadd.f32 0.0, %v1429
  %v1431 = vpop.f32.mrb[0].mxu0
  %1432 = vdwg.mxu0
  %v1433 = vadd.f32 %v193, %v1359
  %v1434 = vxor.u32 %v1433, 2147483648
  %v1435 = vmul.f32 %v1434, 1.442695
  %v1436 = vpow.pop %v1435
  %v1437 = vadd.f32 %v1436, 1.0
  %v1438 = vrcp.pop %v1437
  %v1439 = vmul.f32 1.0, %v1438
  %v1440 = vadd.f32 %v195, %v1361
  %v1441 = vxor.u32 %v1440, 2147483648
  %v1442 = vmul.f32 %v1441, 1.442695
  %v1443 = vpow.pop %v1442
  %v1444 = vadd.f32 %v1443, 1.0
  %v1445 = vrcp.pop %v1444
  %v1446 = vmul.f32 1.0, %v1445
  %v1447 = vadd.f32 %v1430, %v373
  %v1448 = vmul.f32 %v1439, %v1447
  %v1449 = vadd.f32 %v302, %v1448
  %v1450 = vtanh.pop %v1449
  %v1451 = vsub.f32 1.0, %v1446
  %v1452 = vmul.f32 %v1451, %v1450
  %v1453 = vmul.f32 %v1446, %v1225
  %v1454 = vadd.f32 %v1452, %v1453
  %v1456 = vcombine.high %v1454, %v1454
  %v1458 = vunpack.c.l.s4 1966171168
  %v1459 = vunpack.c.0.s8 %v1458
  %v1460 = vlaneseq
  %v1461 = vshrl.u32 %v1460, 7
  %v1462 = vsub.s32 %v1459, %v1461
  %v1463 = vrot.slane %v1454, %v1462
  %v1465 = vunpack.c.l.s4 1966171168
  %v1466 = vunpack.c.0.s8 %v1465
  %v1467 = vlaneseq
  %v1468 = vshrl.u32 %v1467, 7
  %v1469 = vsub.s32 %v1466, %v1468
  %v1470 = vrot.slane %v1456, %v1469
  %v1471 = vcombine.high %v1463, %v1463
  %v1472 = vcombine.high %v1470, %v1470
  %v1474 = vunpack.c.l.s4 1966171168
  %v1475 = vunpack.c.0.s8 %v1474
  %v1476 = vlaneseq
  %v1477 = vshrl.u32 %v1476, 7
  %v1478 = vsub.s32 %v1475, %v1477
  %v1479 = vrot.slane %v1463, %v1478
  %v1481 = vunpack.c.l.s4 1966171168
  %v1482 = vunpack.c.0.s8 %v1481
  %v1483 = vlaneseq
  %v1484 = vshrl.u32 %v1483, 7
  %v1485 = vsub.s32 %v1482, %v1484
  %v1486 = vrot.slane %v1470, %v1485
  %v1488 = vunpack.c.l.s4 1966171168
  %v1489 = vunpack.c.0.s8 %v1488
  %v1490 = vlaneseq
  %v1491 = vshrl.u32 %v1490, 7
  %v1492 = vsub.s32 %v1489, %v1491
  %v1493 = vrot.slane %v1471, %v1492
  %v1495 = vunpack.c.l.s4 1966171168
  %v1496 = vunpack.c.0.s8 %v1495
  %v1497 = vlaneseq
  %v1498 = vshrl.u32 %v1497, 7
  %v1499 = vsub.s32 %v1496, %v1498
  %v1500 = vrot.slane %v1472, %v1499
  %v1501 = vcombine.high %v1479, %v1479
  %v1502 = vcombine.high %v1486, %v1486
  %v1503 = vcombine.high %v1493, %v1493
  %v1504 = vcombine.high %v1500, %v1500
  %1513 = vst [vmem:[%s6 + $0x4] sm:$0x1] %v1479
  %1514 = vst [vmem:[%s6 + $0xc] sm:$0x1] %v1493
  %1515 = vst [vmem:[%s6 + $0x14] sm:$0x1] %v1501
  %1516 = vst [vmem:[%s6 + $0x1c] sm:$0x1] %v1503
  %1517 = vst [vmem:[%s6 + $0x24] sm:$0x1] %v1486
  %1518 = vst [vmem:[%s6 + $0x2c] sm:$0x1] %v1500
  %1519 = vst [vmem:[%s6 + $0x34] sm:$0x1] %v1502
  %1520 = vst [vmem:[%s6 + $0x3c] sm:$0x1] %v1504
  %1521 = vmatprep.subr.mxu0 %v321
  %1522 = vmatpush1.msra.mxu0 %v320
  %1523 = vmatprep.subr.mxu0 %v324
  %1524 = vmatpush1.msra.mxu0 %v323
  %1525 = vmatprep.subr.mxu0 %v327
  %1526 = vmatpush1.msra.mxu0 %v326
  %1527 = vmatprep.subr.mxu0 %v330
  %1528 = vmatpush1.msra.mxu0 %v329
  %1529 = vmatprep.subr.mxu0 %v333
  %1530 = vmatpush1.msra.mxu0 %v332
  %1531 = vmatprep.subr.mxu0 %v336
  %1532 = vmatpush1.msra.mxu0 %v335
  %1533 = vmatprep.subr.mxu0 %v339
  %1534 = vmatpush1.msra.mxu0 %v338
  %1535 = vmatprep.subr.mxu0 %v342
  %1536 = vmatpush1.msra.mxu0 %v341
  %1537 = vmatprep.subr.mxu0 %v345
  %1538 = vmatpush1.msra.mxu0 %v344
  %1539 = vmatprep.subr.mxu0 %v348
  %1540 = vmatpush1.msra.mxu0 %v347
  %1541 = vmatprep.subr.mxu0 %v351
  %1542 = vmatpush1.msra.mxu0 %v350
  %1543 = vmatprep.subr.mxu0 %v354
  %1544 = vmatpush1.msra.mxu0 %v353
  %1545 = vmatprep.subr.mxu0 %v357
  %1546 = vmatpush1.msra.mxu0 %v356
  %1547 = vmatprep.subr.mxu0 %v360
  %1548 = vmatpush1.msra.mxu0 %v359
  %1549 = vmatprep.subr.mxu0 %v363
  %1550 = vmatpush1.msra.mxu0 %v362
  %1551 = vmatprep.subr.mxu0 %v366
  %1552 = vmatpush1.msra.mxu0 %v365
  %1553 = vmatprep.subr.mxu0 0.0
  %1554 = vmatpush1.msra.mxu0 0.0
  %1555 = vmatprep.subr.mxu0 0.0
  %1556 = vmatpush1.msra.mxu0 0.0
  %1557 = vmatprep.subr.mxu0 0.0
  %1558 = vmatpush1.msra.mxu0 0.0
  %1559 = vmatprep.subr.mxu0 0.0
  %1560 = vmatpush1.msra.mxu0 0.0
  %1561 = vmatprep.subr.mxu0 0.0
  %1562 = vmatpush1.msra.mxu0 0.0
  %1563 = vmatprep.subr.mxu0 0.0
  %1564 = vmatpush1.msra.mxu0 0.0
  %1565 = vmatprep.subr.mxu0 0.0
  %1566 = vmatpush1.msra.mxu0 0.0
  %1567 = vmatprep.subr.mxu0 0.0
  %1568 = vmatpush1.msra.mxu0 0.0
  %1569 = vmatprep.subr.mxu0 0.0
  %1570 = vmatpush1.msra.mxu0 0.0
  %1571 = vmatprep.subr.mxu0 0.0
  %1572 = vmatpush1.msra.mxu0 0.0
  %1573 = vmatprep.subr.mxu0 0.0
  %1574 = vmatpush1.msra.mxu0 0.0
  %1575 = vmatprep.subr.mxu0 0.0
  %1576 = vmatpush1.msra.mxu0 0.0
  %1577 = vmatprep.subr.mxu0 0.0
  %1578 = vmatpush1.msra.mxu0 0.0
  %1579 = vmatprep.subr.mxu0 0.0
  %1580 = vmatpush1.msra.mxu0 0.0
  %1581 = vmatprep.subr.mxu0 0.0
  %1582 = vmatpush1.msra.mxu0 0.0
  %1583 = vmatprep.subr.mxu0 0.0
  %1584 = vmatpush1.msra.mxu0 0.0
  %1585 = vmatprep.mubr.f32.mxu0 0.0
  %1586 = vmatmul.mubr.f32.gmra.mrb[0].mxu0 %v1454
  %v1587 = vpop.f32.mrb[0].mxu0
  %v1588 = vadd.f32 0.0, %v1587
  %v1589 = vpop.f32.mrb[0].mxu0
  %v1590 = vadd.f32 0.0, %v1589
  %1591 = vdwg.mxu0
  %1592 = vmatprep.subr.mxu0 0.0
  %1593 = vmatpush1.msra.mxu0 %v322
  %1594 = vmatprep.subr.mxu0 0.0
  %1595 = vmatpush1.msra.mxu0 %v325
  %1596 = vmatprep.subr.mxu0 0.0
  %1597 = vmatpush1.msra.mxu0 %v328
  %1598 = vmatprep.subr.mxu0 0.0
  %1599 = vmatpush1.msra.mxu0 %v331
  %1600 = vmatprep.subr.mxu0 0.0
  %1601 = vmatpush1.msra.mxu0 %v334
  %1602 = vmatprep.subr.mxu0 0.0
  %1603 = vmatpush1.msra.mxu0 %v337
  %1604 = vmatprep.subr.mxu0 0.0
  %1605 = vmatpush1.msra.mxu0 %v340
  %1606 = vmatprep.subr.mxu0 0.0
  %1607 = vmatpush1.msra.mxu0 %v343
  %1608 = vmatprep.subr.mxu0 0.0
  %1609 = vmatpush1.msra.mxu0 %v346
  %1610 = vmatprep.subr.mxu0 0.0
  %1611 = vmatpush1.msra.mxu0 %v349
  %1612 = vmatprep.subr.mxu0 0.0
  %1613 = vmatpush1.msra.mxu0 %v352
  %1614 = vmatprep.subr.mxu0 0.0
  %1615 = vmatpush1.msra.mxu0 %v355
  %1616 = vmatprep.subr.mxu0 0.0
  %1617 = vmatpush1.msra.mxu0 %v358
  %1618 = vmatprep.subr.mxu0 0.0
  %1619 = vmatpush1.msra.mxu0 %v361
  %1620 = vmatprep.subr.mxu0 0.0
  %1621 = vmatpush1.msra.mxu0 %v364
  %1622 = vmatprep.subr.mxu0 0.0
  %1623 = vmatpush1.msra.mxu0 %v367
  %1624 = vmatprep.subr.mxu0 0.0
  %1625 = vmatpush1.msra.mxu0 0.0
  %1626 = vmatprep.subr.mxu0 0.0
  %1627 = vmatpush1.msra.mxu0 0.0
  %1628 = vmatprep.subr.mxu0 0.0
  %1629 = vmatpush1.msra.mxu0 0.0
  %1630 = vmatprep.subr.mxu0 0.0
  %1631 = vmatpush1.msra.mxu0 0.0
  %1632 = vmatprep.subr.mxu0 0.0
  %1633 = vmatpush1.msra.mxu0 0.0
  %1634 = vmatprep.subr.mxu0 0.0
  %1635 = vmatpush1.msra.mxu0 0.0
  %1636 = vmatprep.subr.mxu0 0.0
  %1637 = vmatpush1.msra.mxu0 0.0
  %1638 = vmatprep.subr.mxu0 0.0
  %1639 = vmatpush1.msra.mxu0 0.0
  %1640 = vmatprep.subr.mxu0 0.0
  %1641 = vmatpush1.msra.mxu0 0.0
  %1642 = vmatprep.subr.mxu0 0.0
  %1643 = vmatpush1.msra.mxu0 0.0
  %1644 = vmatprep.subr.mxu0 0.0
  %1645 = vmatpush1.msra.mxu0 0.0
  %1646 = vmatprep.subr.mxu0 0.0
  %1647 = vmatpush1.msra.mxu0 0.0
  %1648 = vmatprep.subr.mxu0 0.0
  %1649 = vmatpush1.msra.mxu0 0.0
  %1650 = vmatprep.subr.mxu0 0.0
  %1651 = vmatpush1.msra.mxu0 0.0
  %1652 = vmatprep.subr.mxu0 0.0
  %1653 = vmatpush1.msra.mxu0 0.0
  %1654 = vmatprep.subr.mxu0 0.0
  %1655 = vmatpush1.msra.mxu0 0.0
  %1656 = vmatprep.mubr.f32.mxu0 0.0
  %1657 = vmatmul.mubr.f32.gmra.mrb[0].mxu0 %v1454
  %v1658 = vpop.f32.mrb[0].mxu0
  %v1659 = vadd.f32 0.0, %v1658
  %v1660 = vpop.f32.mrb[0].mxu0
  %1661 = vdwg.mxu0
  %v1662 = vadd.f32 %v199, %v1588
  %v1663 = vxor.u32 %v1662, 2147483648
  %v1664 = vmul.f32 %v1663, 1.442695
  %v1665 = vpow.pop %v1664
  %v1666 = vadd.f32 %v1665, 1.0
  %v1667 = vrcp.pop %v1666
  %v1668 = vmul.f32 1.0, %v1667
  %v1669 = vadd.f32 %v201, %v1590
  %v1670 = vxor.u32 %v1669, 2147483648
  %v1671 = vmul.f32 %v1670, 1.442695
  %v1672 = vpow.pop %v1671
  %v1673 = vadd.f32 %v1672, 1.0
  %v1674 = vrcp.pop %v1673
  %v1675 = vmul.f32 1.0, %v1674
  %v1676 = vadd.f32 %v1659, %v373
  %v1677 = vmul.f32 %v1668, %v1676
  %v1678 = vadd.f32 %v307, %v1677
  %v1679 = vtanh.pop %v1678
  %v1680 = vsub.f32 1.0, %v1675
  %v1681 = vmul.f32 %v1680, %v1679
  %v1682 = vmul.f32 %v1675, %v1454
  %v1683 = vadd.f32 %v1681, %v1682
  %v1685 = vcombine.high %v1683, %v1683
  %v1687 = vunpack.c.l.s4 1966171168
  %v1688 = vunpack.c.0.s8 %v1687
  %v1689 = vlaneseq
  %v1690 = vshrl.u32 %v1689, 7
  %v1691 = vsub.s32 %v1688, %v1690
  %v1692 = vrot.slane %v1683, %v1691
  %v1694 = vunpack.c.l.s4 1966171168
  %v1695 = vunpack.c.0.s8 %v1694
  %v1696 = vlaneseq
  %v1697 = vshrl.u32 %v1696, 7
  %v1698 = vsub.s32 %v1695, %v1697
  %v1699 = vrot.slane %v1685, %v1698
  %v1700 = vcombine.high %v1692, %v1692
  %v1701 = vcombine.high %v1699, %v1699
  %v1703 = vunpack.c.l.s4 1966171168
  %v1704 = vunpack.c.0.s8 %v1703
  %v1705 = vlaneseq
  %v1706 = vshrl.u32 %v1705, 7
  %v1707 = vsub.s32 %v1704, %v1706
  %v1708 = vrot.slane %v1692, %v1707
  %v1710 = vunpack.c.l.s4 1966171168
  %v1711 = vunpack.c.0.s8 %v1710
  %v1712 = vlaneseq
  %v1713 = vshrl.u32 %v1712, 7
  %v1714 = vsub.s32 %v1711, %v1713
  %v1715 = vrot.slane %v1699, %v1714
  %v1717 = vunpack.c.l.s4 1966171168
  %v1718 = vunpack.c.0.s8 %v1717
  %v1719 = vlaneseq
  %v1720 = vshrl.u32 %v1719, 7
  %v1721 = vsub.s32 %v1718, %v1720
  %v1722 = vrot.slane %v1700, %v1721
  %v1724 = vunpack.c.l.s4 1966171168
  %v1725 = vunpack.c.0.s8 %v1724
  %v1726 = vlaneseq
  %v1727 = vshrl.u32 %v1726, 7
  %v1728 = vsub.s32 %v1725, %v1727
  %v1729 = vrot.slane %v1701, %v1728
  %v1730 = vcombine.high %v1708, %v1708
  %v1731 = vcombine.high %v1715, %v1715
  %v1732 = vcombine.high %v1722, %v1722
  %v1733 = vcombine.high %v1729, %v1729
  %1742 = vst [vmem:[%s6 + $0x5] sm:$0x1] %v1708
  %1743 = vst [vmem:[%s6 + $0xd] sm:$0x1] %v1722
  %1744 = vst [vmem:[%s6 + $0x15] sm:$0x1] %v1730
  %1745 = vst [vmem:[%s6 + $0x1d] sm:$0x1] %v1732
  %1746 = vst [vmem:[%s6 + $0x25] sm:$0x1] %v1715
  %1747 = vst [vmem:[%s6 + $0x2d] sm:$0x1] %v1729
  %1748 = vst [vmem:[%s6 + $0x35] sm:$0x1] %v1731
  %1749 = vst [vmem:[%s6 + $0x3d] sm:$0x1] %v1733
  %1750 = vmatprep.subr.mxu0 %v321
  %1751 = vmatpush1.msra.mxu0 %v320
  %1752 = vmatprep.subr.mxu0 %v324
  %1753 = vmatpush1.msra.mxu0 %v323
  %1754 = vmatprep.subr.mxu0 %v327
  %1755 = vmatpush1.msra.mxu0 %v326
  %1756 = vmatprep.subr.mxu0 %v330
  %1757 = vmatpush1.msra.mxu0 %v329
  %1758 = vmatprep.subr.mxu0 %v333
  %1759 = vmatpush1.msra.mxu0 %v332
  %1760 = vmatprep.subr.mxu0 %v336
  %1761 = vmatpush1.msra.mxu0 %v335
  %1762 = vmatprep.subr.mxu0 %v339
  %1763 = vmatpush1.msra.mxu0 %v338
  %1764 = vmatprep.subr.mxu0 %v342
  %1765 = vmatpush1.msra.mxu0 %v341
  %1766 = vmatprep.subr.mxu0 %v345
  %1767 = vmatpush1.msra.mxu0 %v344
  %1768 = vmatprep.subr.mxu0 %v348
  %1769 = vmatpush1.msra.mxu0 %v347
  %1770 = vmatprep.subr.mxu0 %v351
  %1771 = vmatpush1.msra.mxu0 %v350
  %1772 = vmatprep.subr.mxu0 %v354
  %1773 = vmatpush1.msra.mxu0 %v353
  %1774 = vmatprep.subr.mxu0 %v357
  %1775 = vmatpush1.msra.mxu0 %v356
  %1776 = vmatprep.subr.mxu0 %v360
  %1777 = vmatpush1.msra.mxu0 %v359
  %1778 = vmatprep.subr.mxu0 %v363
  %1779 = vmatpush1.msra.mxu0 %v362
  %1780 = vmatprep.subr.mxu0 %v366
  %1781 = vmatpush1.msra.mxu0 %v365
  %1782 = vmatprep.subr.mxu0 0.0
  %1783 = vmatpush1.msra.mxu0 0.0
  %1784 = vmatprep.subr.mxu0 0.0
  %1785 = vmatpush1.msra.mxu0 0.0
  %1786 = vmatprep.subr.mxu0 0.0
  %1787 = vmatpush1.msra.mxu0 0.0
  %1788 = vmatprep.subr.mxu0 0.0
  %1789 = vmatpush1.msra.mxu0 0.0
  %1790 = vmatprep.subr.mxu0 0.0
  %1791 = vmatpush1.msra.mxu0 0.0
  %1792 = vmatprep.subr.mxu0 0.0
  %1793 = vmatpush1.msra.mxu0 0.0
  %1794 = vmatprep.subr.mxu0 0.0
  %1795 = vmatpush1.msra.mxu0 0.0
  %1796 = vmatprep.subr.mxu0 0.0
  %1797 = vmatpush1.msra.mxu0 0.0
  %1798 = vmatprep.subr.mxu0 0.0
  %1799 = vmatpush1.msra.mxu0 0.0
  %1800 = vmatprep.subr.mxu0 0.0
  %1801 = vmatpush1.msra.mxu0 0.0
  %1802 = vmatprep.subr.mxu0 0.0
  %1803 = vmatpush1.msra.mxu0 0.0
  %1804 = vmatprep.subr.mxu0 0.0
  %1805 = vmatpush1.msra.mxu0 0.0
  %1806 = vmatprep.subr.mxu0 0.0
  %1807 = vmatpush1.msra.mxu0 0.0
  %1808 = vmatprep.subr.mxu0 0.0
  %1809 = vmatpush1.msra.mxu0 0.0
  %1810 = vmatprep.subr.mxu0 0.0
  %1811 = vmatpush1.msra.mxu0 0.0
  %1812 = vmatprep.subr.mxu0 0.0
  %1813 = vmatpush1.msra.mxu0 0.0
  %1814 = vmatprep.mubr.f32.mxu0 0.0
  %1815 = vmatmul.mubr.f32.gmra.mrb[0].mxu0 %v1683
  %v1816 = vpop.f32.mrb[0].mxu0
  %v1817 = vadd.f32 0.0, %v1816
  %v1818 = vpop.f32.mrb[0].mxu0
  %v1819 = vadd.f32 0.0, %v1818
  %1820 = vdwg.mxu0
  %1821 = vmatprep.subr.mxu0 0.0
  %1822 = vmatpush1.msra.mxu0 %v322
  %1823 = vmatprep.subr.mxu0 0.0
  %1824 = vmatpush1.msra.mxu0 %v325
  %1825 = vmatprep.subr.mxu0 0.0
  %1826 = vmatpush1.msra.mxu0 %v328
  %1827 = vmatprep.subr.mxu0 0.0
  %1828 = vmatpush1.msra.mxu0 %v331
  %1829 = vmatprep.subr.mxu0 0.0
  %1830 = vmatpush1.msra.mxu0 %v334
  %1831 = vmatprep.subr.mxu0 0.0
  %1832 = vmatpush1.msra.mxu0 %v337
  %1833 = vmatprep.subr.mxu0 0.0
  %1834 = vmatpush1.msra.mxu0 %v340
  %1835 = vmatprep.subr.mxu0 0.0
  %1836 = vmatpush1.msra.mxu0 %v343
  %1837 = vmatprep.subr.mxu0 0.0
  %1838 = vmatpush1.msra.mxu0 %v346
  %1839 = vmatprep.subr.mxu0 0.0
  %1840 = vmatpush1.msra.mxu0 %v349
  %1841 = vmatprep.subr.mxu0 0.0
  %1842 = vmatpush1.msra.mxu0 %v352
  %1843 = vmatprep.subr.mxu0 0.0
  %1844 = vmatpush1.msra.mxu0 %v355
  %1845 = vmatprep.subr.mxu0 0.0
  %1846 = vmatpush1.msra.mxu0 %v358
  %1847 = vmatprep.subr.mxu0 0.0
  %1848 = vmatpush1.msra.mxu0 %v361
  %1849 = vmatprep.subr.mxu0 0.0
  %1850 = vmatpush1.msra.mxu0 %v364
  %1851 = vmatprep.subr.mxu0 0.0
  %1852 = vmatpush1.msra.mxu0 %v367
  %1853 = vmatprep.subr.mxu0 0.0
  %1854 = vmatpush1.msra.mxu0 0.0
  %1855 = vmatprep.subr.mxu0 0.0
  %1856 = vmatpush1.msra.mxu0 0.0
  %1857 = vmatprep.subr.mxu0 0.0
  %1858 = vmatpush1.msra.mxu0 0.0
  %1859 = vmatprep.subr.mxu0 0.0
  %1860 = vmatpush1.msra.mxu0 0.0
  %1861 = vmatprep.subr.mxu0 0.0
  %1862 = vmatpush1.msra.mxu0 0.0
  %1863 = vmatprep.subr.mxu0 0.0
  %1864 = vmatpush1.msra.mxu0 0.0
  %1865 = vmatprep.subr.mxu0 0.0
  %1866 = vmatpush1.msra.mxu0 0.0
  %1867 = vmatprep.subr.mxu0 0.0
  %1868 = vmatpush1.msra.mxu0 0.0
  %1869 = vmatprep.subr.mxu0 0.0
  %1870 = vmatpush1.msra.mxu0 0.0
  %1871 = vmatprep.subr.mxu0 0.0
  %1872 = vmatpush1.msra.mxu0 0.0
  %1873 = vmatprep.subr.mxu0 0.0
  %1874 = vmatpush1.msra.mxu0 0.0
  %1875 = vmatprep.subr.mxu0 0.0
  %1876 = vmatpush1.msra.mxu0 0.0
  %1877 = vmatprep.subr.mxu0 0.0
  %1878 = vmatpush1.msra.mxu0 0.0
  %1879 = vmatprep.subr.mxu0 0.0
  %1880 = vmatpush1.msra.mxu0 0.0
  %1881 = vmatprep.subr.mxu0 0.0
  %1882 = vmatpush1.msra.mxu0 0.0
  %1883 = vmatprep.subr.mxu0 0.0
  %1884 = vmatpush1.msra.mxu0 0.0
  %1885 = vmatprep.mubr.f32.mxu0 0.0
  %1886 = vmatmul.mubr.f32.gmra.mrb[0].mxu0 %v1683
  %v1887 = vpop.f32.mrb[0].mxu0
  %v1888 = vadd.f32 0.0, %v1887
  %v1889 = vpop.f32.mrb[0].mxu0
  %1890 = vdwg.mxu0
  %v1891 = vadd.f32 %v205, %v1817
  %v1892 = vxor.u32 %v1891, 2147483648
  %v1893 = vmul.f32 %v1892, 1.442695
  %v1894 = vpow.pop %v1893
  %v1895 = vadd.f32 %v1894, 1.0
  %v1896 = vrcp.pop %v1895
  %v1897 = vmul.f32 1.0, %v1896
  %v1898 = vadd.f32 %v207, %v1819
  %v1899 = vxor.u32 %v1898, 2147483648
  %v1900 = vmul.f32 %v1899, 1.442695
  %v1901 = vpow.pop %v1900
  %v1902 = vadd.f32 %v1901, 1.0
  %v1903 = vrcp.pop %v1902
  %v1904 = vmul.f32 1.0, %v1903
  %v1905 = vadd.f32 %v1888, %v373
  %v1906 = vmul.f32 %v1897, %v1905
  %v1907 = vadd.f32 %v312, %v1906
  %v1908 = vtanh.pop %v1907
  %v1909 = vsub.f32 1.0, %v1904
  %v1910 = vmul.f32 %v1909, %v1908
  %v1911 = vmul.f32 %v1904, %v1683
  %v1912 = vadd.f32 %v1910, %v1911
  %v1914 = vcombine.high %v1912, %v1912
  %v1916 = vunpack.c.l.s4 1966171168
  %v1917 = vunpack.c.0.s8 %v1916
  %v1918 = vlaneseq
  %v1919 = vshrl.u32 %v1918, 7
  %v1920 = vsub.s32 %v1917, %v1919
  %v1921 = vrot.slane %v1912, %v1920
  %v1923 = vunpack.c.l.s4 1966171168
  %v1924 = vunpack.c.0.s8 %v1923
  %v1925 = vlaneseq
  %v1926 = vshrl.u32 %v1925, 7
  %v1927 = vsub.s32 %v1924, %v1926
  %v1928 = vrot.slane %v1914, %v1927
  %v1929 = vcombine.high %v1921, %v1921
  %v1930 = vcombine.high %v1928, %v1928
  %v1932 = vunpack.c.l.s4 1966171168
  %v1933 = vunpack.c.0.s8 %v1932
  %v1934 = vlaneseq
  %v1935 = vshrl.u32 %v1934, 7
  %v1936 = vsub.s32 %v1933, %v1935
  %v1937 = vrot.slane %v1921, %v1936
  %v1939 = vunpack.c.l.s4 1966171168
  %v1940 = vunpack.c.0.s8 %v1939
  %v1941 = vlaneseq
  %v1942 = vshrl.u32 %v1941, 7
  %v1943 = vsub.s32 %v1940, %v1942
  %v1944 = vrot.slane %v1928, %v1943
  %v1946 = vunpack.c.l.s4 1966171168
  %v1947 = vunpack.c.0.s8 %v1946
  %v1948 = vlaneseq
  %v1949 = vshrl.u32 %v1948, 7
  %v1950 = vsub.s32 %v1947, %v1949
  %v1951 = vrot.slane %v1929, %v1950
  %v1953 = vunpack.c.l.s4 1966171168
  %v1954 = vunpack.c.0.s8 %v1953
  %v1955 = vlaneseq
  %v1956 = vshrl.u32 %v1955, 7
  %v1957 = vsub.s32 %v1954, %v1956
  %v1958 = vrot.slane %v1930, %v1957
  %v1959 = vcombine.high %v1937, %v1937
  %v1960 = vcombine.high %v1944, %v1944
  %v1961 = vcombine.high %v1951, %v1951
  %v1962 = vcombine.high %v1958, %v1958
  %1971 = vst [vmem:[%s6 + $0x6] sm:$0x1] %v1937
  %1972 = vst [vmem:[%s6 + $0xe] sm:$0x1] %v1951
  %1973 = vst [vmem:[%s6 + $0x16] sm:$0x1] %v1959
  %1974 = vst [vmem:[%s6 + $0x1e] sm:$0x1] %v1961
  %1975 = vst [vmem:[%s6 + $0x26] sm:$0x1] %v1944
  %1976 = vst [vmem:[%s6 + $0x2e] sm:$0x1] %v1958
  %1977 = vst [vmem:[%s6 + $0x36] sm:$0x1] %v1960
  %1978 = vst [vmem:[%s6 + $0x3e] sm:$0x1] %v1962
  %1979 = vmatprep.subr.mxu0 %v321
  %1980 = vmatpush1.msra.mxu0 %v320
  %1981 = vmatprep.subr.mxu0 %v324
  %1982 = vmatpush1.msra.mxu0 %v323
  %1983 = vmatprep.subr.mxu0 %v327
  %1984 = vmatpush1.msra.mxu0 %v326
  %1985 = vmatprep.subr.mxu0 %v330
  %1986 = vmatpush1.msra.mxu0 %v329
  %1987 = vmatprep.subr.mxu0 %v333
  %1988 = vmatpush1.msra.mxu0 %v332
  %1989 = vmatprep.subr.mxu0 %v336
  %1990 = vmatpush1.msra.mxu0 %v335
  %1991 = vmatprep.subr.mxu0 %v339
  %1992 = vmatpush1.msra.mxu0 %v338
  %1993 = vmatprep.subr.mxu0 %v342
  %1994 = vmatpush1.msra.mxu0 %v341
  %1995 = vmatprep.subr.mxu0 %v345
  %1996 = vmatpush1.msra.mxu0 %v344
  %1997 = vmatprep.subr.mxu0 %v348
  %1998 = vmatpush1.msra.mxu0 %v347
  %1999 = vmatprep.subr.mxu0 %v351
  %2000 = vmatpush1.msra.mxu0 %v350
  %2001 = vmatprep.subr.mxu0 %v354
  %2002 = vmatpush1.msra.mxu0 %v353
  %2003 = vmatprep.subr.mxu0 %v357
  %2004 = vmatpush1.msra.mxu0 %v356
  %2005 = vmatprep.subr.mxu0 %v360
  %2006 = vmatpush1.msra.mxu0 %v359
  %2007 = vmatprep.subr.mxu0 %v363
  %2008 = vmatpush1.msra.mxu0 %v362
  %2009 = vmatprep.subr.mxu0 %v366
  %2010 = vmatpush1.msra.mxu0 %v365
  %2011 = vmatprep.subr.mxu0 0.0
  %2012 = vmatpush1.msra.mxu0 0.0
  %2013 = vmatprep.subr.mxu0 0.0
  %2014 = vmatpush1.msra.mxu0 0.0
  %2015 = vmatprep.subr.mxu0 0.0
  %2016 = vmatpush1.msra.mxu0 0.0
  %2017 = vmatprep.subr.mxu0 0.0
  %2018 = vmatpush1.msra.mxu0 0.0
  %2019 = vmatprep.subr.mxu0 0.0
  %2020 = vmatpush1.msra.mxu0 0.0
  %2021 = vmatprep.subr.mxu0 0.0
  %2022 = vmatpush1.msra.mxu0 0.0
  %2023 = vmatprep.subr.mxu0 0.0
  %2024 = vmatpush1.msra.mxu0 0.0
  %2025 = vmatprep.subr.mxu0 0.0
  %2026 = vmatpush1.msra.mxu0 0.0
  %2027 = vmatprep.subr.mxu0 0.0
  %2028 = vmatpush1.msra.mxu0 0.0
  %2029 = vmatprep.subr.mxu0 0.0
  %2030 = vmatpush1.msra.mxu0 0.0
  %2031 = vmatprep.subr.mxu0 0.0
  %2032 = vmatpush1.msra.mxu0 0.0
  %2033 = vmatprep.subr.mxu0 0.0
  %2034 = vmatpush1.msra.mxu0 0.0
  %2035 = vmatprep.subr.mxu0 0.0
  %2036 = vmatpush1.msra.mxu0 0.0
  %2037 = vmatprep.subr.mxu0 0.0
  %2038 = vmatpush1.msra.mxu0 0.0
  %2039 = vmatprep.subr.mxu0 0.0
  %2040 = vmatpush1.msra.mxu0 0.0
  %2041 = vmatprep.subr.mxu0 0.0
  %2042 = vmatpush1.msra.mxu0 0.0
  %2043 = vmatprep.mubr.f32.mxu0 0.0
  %2044 = vmatmul.mubr.f32.gmra.mrb[0].mxu0 %v1912
  %v2045 = vpop.f32.mrb[0].mxu0
  %v2046 = vadd.f32 0.0, %v2045
  %v2047 = vpop.f32.mrb[0].mxu0
  %v2048 = vadd.f32 0.0, %v2047
  %2049 = vdwg.mxu0
  %2050 = vmatprep.subr.mxu0 0.0
  %2051 = vmatpush1.msra.mxu0 %v322
  %2052 = vmatprep.subr.mxu0 0.0
  %2053 = vmatpush1.msra.mxu0 %v325
  %2054 = vmatprep.subr.mxu0 0.0
  %2055 = vmatpush1.msra.mxu0 %v328
  %2056 = vmatprep.subr.mxu0 0.0
  %2057 = vmatpush1.msra.mxu0 %v331
  %2058 = vmatprep.subr.mxu0 0.0
  %2059 = vmatpush1.msra.mxu0 %v334
  %2060 = vmatprep.subr.mxu0 0.0
  %2061 = vmatpush1.msra.mxu0 %v337
  %2062 = vmatprep.subr.mxu0 0.0
  %2063 = vmatpush1.msra.mxu0 %v340
  %2064 = vmatprep.subr.mxu0 0.0
  %2065 = vmatpush1.msra.mxu0 %v343
  %2066 = vmatprep.subr.mxu0 0.0
  %2067 = vmatpush1.msra.mxu0 %v346
  %2068 = vmatprep.subr.mxu0 0.0
  %2069 = vmatpush1.msra.mxu0 %v349
  %2070 = vmatprep.subr.mxu0 0.0
  %2071 = vmatpush1.msra.mxu0 %v352
  %2072 = vmatprep.subr.mxu0 0.0
  %2073 = vmatpush1.msra.mxu0 %v355
  %2074 = vmatprep.subr.mxu0 0.0
  %2075 = vmatpush1.msra.mxu0 %v358
  %2076 = vmatprep.subr.mxu0 0.0
  %2077 = vmatpush1.msra.mxu0 %v361
  %2078 = vmatprep.subr.mxu0 0.0
  %2079 = vmatpush1.msra.mxu0 %v364
  %2080 = vmatprep.subr.mxu0 0.0
  %2081 = vmatpush1.msra.mxu0 %v367
  %2082 = vmatprep.subr.mxu0 0.0
  %2083 = vmatpush1.msra.mxu0 0.0
  %2084 = vmatprep.subr.mxu0 0.0
  %2085 = vmatpush1.msra.mxu0 0.0
  %2086 = vmatprep.subr.mxu0 0.0
  %2087 = vmatpush1.msra.mxu0 0.0
  %2088 = vmatprep.subr.mxu0 0.0
  %2089 = vmatpush1.msra.mxu0 0.0
  %2090 = vmatprep.subr.mxu0 0.0
  %2091 = vmatpush1.msra.mxu0 0.0
  %2092 = vmatprep.subr.mxu0 0.0
  %2093 = vmatpush1.msra.mxu0 0.0
  %2094 = vmatprep.subr.mxu0 0.0
  %2095 = vmatpush1.msra.mxu0 0.0
  %2096 = vmatprep.subr.mxu0 0.0
  %2097 = vmatpush1.msra.mxu0 0.0
  %2098 = vmatprep.subr.mxu0 0.0
  %2099 = vmatpush1.msra.mxu0 0.0
  %2100 = vmatprep.subr.mxu0 0.0
  %2101 = vmatpush1.msra.mxu0 0.0
  %2102 = vmatprep.subr.mxu0 0.0
  %2103 = vmatpush1.msra.mxu0 0.0
  %2104 = vmatprep.subr.mxu0 0.0
  %2105 = vmatpush1.msra.mxu0 0.0
  %2106 = vmatprep.subr.mxu0 0.0
  %2107 = vmatpush1.msra.mxu0 0.0
  %2108 = vmatprep.subr.mxu0 0.0
  %2109 = vmatpush1.msra.mxu0 0.0
  %2110 = vmatprep.subr.mxu0 0.0
  %2111 = vmatpush1.msra.mxu0 0.0
  %2112 = vmatprep.subr.mxu0 0.0
  %2113 = vmatpush1.msra.mxu0 0.0
  %2114 = vmatprep.mubr.f32.mxu0 0.0
  %2115 = vmatmul.mubr.f32.gmra.mrb[0].mxu0 %v1912
  %v2116 = vpop.f32.mrb[0].mxu0
  %v2117 = vadd.f32 0.0, %v2116
  %v2118 = vpop.f32.mrb[0].mxu0
  %2119 = vdwg.mxu0
  %v2120 = vadd.f32 %v211, %v2046
  %v2121 = vxor.u32 %v2120, 2147483648
  %v2122 = vmul.f32 %v2121, 1.442695
  %v2123 = vpow.pop %v2122
  %v2124 = vadd.f32 %v2123, 1.0
  %v2125 = vrcp.pop %v2124
  %v2126 = vmul.f32 1.0, %v2125
  %v2127 = vadd.f32 %v213, %v2048
  %v2128 = vxor.u32 %v2127, 2147483648
  %v2129 = vmul.f32 %v2128, 1.442695
  %v2130 = vpow.pop %v2129
  %v2131 = vadd.f32 %v2130, 1.0
  %v2132 = vrcp.pop %v2131
  %v2133 = vmul.f32 1.0, %v2132
  %v2134 = vadd.f32 %v2117, %v373
  %v2135 = vmul.f32 %v2126, %v2134
  %v2136 = vadd.f32 %v317, %v2135
  %v2137 = vtanh.pop %v2136
  %v2138 = vsub.f32 1.0, %v2133
  %v2139 = vmul.f32 %v2138, %v2137
  %v2140 = vmul.f32 %v2133, %v1912
  %v2141 = vadd.f32 %v2139, %v2140
  %v2143 = vcombine.high %v2141, %v2141
  %v2145 = vunpack.c.l.s4 1966171168
  %v2146 = vunpack.c.0.s8 %v2145
  %v2147 = vlaneseq
  %v2148 = vshrl.u32 %v2147, 7
  %v2149 = vsub.s32 %v2146, %v2148
  %v2150 = vrot.slane %v2141, %v2149
  %v2152 = vunpack.c.l.s4 1966171168
  %v2153 = vunpack.c.0.s8 %v2152
  %v2154 = vlaneseq
  %v2155 = vshrl.u32 %v2154, 7
  %v2156 = vsub.s32 %v2153, %v2155
  %v2157 = vrot.slane %v2143, %v2156
  %v2158 = vcombine.high %v2150, %v2150
  %v2159 = vcombine.high %v2157, %v2157
  %v2161 = vunpack.c.l.s4 1966171168
  %v2162 = vunpack.c.0.s8 %v2161
  %v2163 = vlaneseq
  %v2164 = vshrl.u32 %v2163, 7
  %v2165 = vsub.s32 %v2162, %v2164
  %v2166 = vrot.slane %v2150, %v2165
  %v2168 = vunpack.c.l.s4 1966171168
  %v2169 = vunpack.c.0.s8 %v2168
  %v2170 = vlaneseq
  %v2171 = vshrl.u32 %v2170, 7
  %v2172 = vsub.s32 %v2169, %v2171
  %v2173 = vrot.slane %v2157, %v2172
  %v2175 = vunpack.c.l.s4 1966171168
  %v2176 = vunpack.c.0.s8 %v2175
  %v2177 = vlaneseq
  %v2178 = vshrl.u32 %v2177, 7
  %v2179 = vsub.s32 %v2176, %v2178
  %v2180 = vrot.slane %v2158, %v2179
  %v2182 = vunpack.c.l.s4 1966171168
  %v2183 = vunpack.c.0.s8 %v2182
  %v2184 = vlaneseq
  %v2185 = vshrl.u32 %v2184, 7
  %v2186 = vsub.s32 %v2183, %v2185
  %v2187 = vrot.slane %v2159, %v2186
  %v2188 = vcombine.high %v2166, %v2166
  %v2189 = vcombine.high %v2173, %v2173
  %v2190 = vcombine.high %v2180, %v2180
  %v2191 = vcombine.high %v2187, %v2187
  %2200 = vst [vmem:[%s6 + $0x7] sm:$0x1] %v2166
  %2201 = vst [vmem:[%s6 + $0xf] sm:$0x1] %v2180
  %2202 = vst [vmem:[%s6 + $0x17] sm:$0x1] %v2188
  %2203 = vst [vmem:[%s6 + $0x1f] sm:$0x1] %v2190
  %2204 = vst [vmem:[%s6 + $0x27] sm:$0x1] %v2173
  %2205 = vst [vmem:[%s6 + $0x2f] sm:$0x1] %v2187
  %2206 = vst [vmem:[%s6 + $0x37] sm:$0x1] %v2189
  %2207 = vst [vmem:[%s6 + $0x3f] sm:$0x1] %v2191
  %2208 = vst [vmem:[#allocation2] sm:$0xff] %v2141
  // Predicated region
  $region30: #{training_decoder_forward.2} parent=0 // pred_check
    _
  $region31: #{training_decoder_forward.2} parent=0 // pred_check_branch
    %2210 = sbr.rel (0) target = $region33
  $region32: #{training_decoder_forward.2} parent=0 // pred_region
    _
  $region33: #{training_decoder_forward.2} parent=0 // pred_fallthru
    _
  // Predicated region
  $region34: #{training_decoder_forward.2} parent=0 // pred_check
    _
  $region35: #{training_decoder_forward.2} parent=0 // pred_check_branch
    %2212 = sbr.rel (0) target = $region37
  $region36: #{training_decoder_forward.2} parent=0 // pred_region
    _
  $region37: #{training_decoder_forward.2} parent=0 // pred_fallthru
    _

</llo_original>
